<compile_context>
chip_gen: v5e
topology: v5e:2x2
jax: 0.10.0
libtpu: 0.0.40
codegen_flags: <defaults>
</compile_context>

<pallas_src>
import functools
import math

import jax
import jax.numpy as jnp
from jax import lax
from jax.experimental import pallas as pl
from jax.experimental.pallas import tpu as pltpu


# ---------------------------------------------------------------------------
# Pallas kernel 1: fused  out^T = relu?( W @ patches^T + b )   (lane-dense M)
# ---------------------------------------------------------------------------
def _wxb_kernel(w_ref, x_ref, b_ref, o_ref, *, apply_relu):
    acc = jnp.dot(w_ref[...], x_ref[...], preferred_element_type=jnp.float32)
    acc = acc + b_ref[...]                       # (Cout, 1) broadcasts over lanes
    if apply_relu:
        acc = jnp.maximum(acc, 0.0)
    o_ref[...] = acc.astype(o_ref.dtype)


def matmul_T(w, x, b, *, apply_relu, tile_m=2048):
    """w: (Cout, K), x: (K, M), b: (Cout, 1)  ->  (Cout, M) f32.

    M (= N*OH*OW) is the minor/lane axis of the output -> dense stores.
    The grid tiles M; a ragged last block is handled by Pallas (no pad/slice).
    """
    cout, k = w.shape
    m = x.shape[1]
    tm = min(tile_m, m)
    grid_m = pl.cdiv(m, tm)
    return pl.pallas_call(
        functools.partial(_wxb_kernel, apply_relu=apply_relu),
        out_shape=jax.ShapeDtypeStruct((cout, m), jnp.float32),
        grid=(grid_m,),
        in_specs=[
            pl.BlockSpec((cout, k), lambda i: (0, 0)),   # weight resident
            pl.BlockSpec((k, tm), lambda i: (0, i)),     # patches tile (lane-dense)
            pl.BlockSpec((cout, 1), lambda i: (0, 0)),   # bias column
        ],
        out_specs=pl.BlockSpec((cout, tm), lambda i: (0, i)),
        compiler_params=pltpu.CompilerParams(
            dimension_semantics=("parallel",)),
    )(w, x, b)


# ---------------------------------------------------------------------------
# Pallas kernel 2: fused tail = conv3 + ReLU + flatten + concat(y)
#                               + affine1 + ReLU + affine2
#
# conv3 is ONE matmul over all 9 output positions (rows are hw-major,
# batch-minor); the affine1 contributions of the 9 positions are then
# accumulated with 9 tiny (N,32)@(32,64) dots, so no in-kernel
# flatten/transpose is needed (the PyTorch flatten permutation lives in the
# pre-permuted wa1s weight).
# ---------------------------------------------------------------------------
def _tail_kernel(*refs, additional):
    if additional:
        (p3_ref, y_ref, w3_ref, b3_ref, wa1s_ref, wa1y_ref,
         b1_ref, wa2_ref, b2_ref, o_ref) = refs
    else:
        (p3_ref, w3_ref, b3_ref, wa1s_ref,
         b1_ref, wa2_ref, b2_ref, o_ref) = refs

    n_pos = wa1s_ref.shape[0]                    # 9 spatial positions (static)
    n = p3_ref.shape[0] // n_pos                 # batch size (static)

    # conv3 for all positions in a single MXU matmul: (9N, 800) @ (800, 32)
    h3 = jnp.dot(p3_ref[...], w3_ref[...], preferred_element_type=jnp.float32)
    h3 = jnp.maximum(h3 + b3_ref[...], 0.0)                        # (9N, 32)

    if additional:
        acc = jnp.dot(y_ref[...], wa1y_ref[...],
                      preferred_element_type=jnp.float32)          # (N, 64)
    else:
        acc = jnp.zeros((n, wa1s_ref.shape[2]), jnp.float32)

    for hw in range(n_pos):                      # unrolled static loop
        acc = acc + jnp.dot(h3[hw * n:(hw + 1) * n],
                            wa1s_ref[hw],
                            preferred_element_type=jnp.float32)    # (N, 64)

    h1 = jnp.maximum(acc + b1_ref[...], 0.0)                       # (N, 64)
    out = jnp.dot(h1, wa2_ref[...],
                  preferred_element_type=jnp.float32) + b2_ref[...]
    o_ref[...] = out.astype(o_ref.dtype)


def _full_spec(a):
    nd = a.ndim
    return pl.BlockSpec(a.shape, lambda i, _nd=nd: (0,) * _nd)


def tail_fused(p3, y, prep, additional):
    """p3: (9*N, 800) conv3 patches (hw-major, batch-minor); y: (N, 48)|None."""
    n = p3.shape[0] // 9
    n_act = prep["wa2T"].shape[1]
    if additional:
        inputs = [p3, y, prep["w3T"], prep["b3r"], prep["wa1s"],
                  prep["wa1y"], prep["b1r"], prep["wa2T"], prep["b2r"]]
    else:
        inputs = [p3, prep["w3T"], prep["b3r"], prep["wa1s"],
                  prep["b1r"], prep["wa2T"], prep["b2r"]]
    return pl.pallas_call(
        functools.partial(_tail_kernel, additional=additional),
        out_shape=jax.ShapeDtypeStruct((n, n_act), jnp.float32),
        grid=(1,),
        in_specs=[_full_spec(a) for a in inputs],
        out_specs=pl.BlockSpec((n, n_act), lambda i: (0, 0)),
    )(*inputs)


# ---------------------------------------------------------------------------
# Glue: im2col patch extraction (single XLA op per conv, transposed layout).
# Output feature ordering of conv_general_dilated_patches is (cin, kh, kw),
# i.e. exactly torch's weight.reshape(Cout, -1) ordering.
# ---------------------------------------------------------------------------
_HI = jax.lax.Precision.HIGHEST


def _patches_KM(a, lhs_spec, kh, kw, stride):
    """a in `lhs_spec` layout -> (K, N*OH*OW) patch matrix (lane-dense M)."""
    p = lax.conv_general_dilated_patches(
        a, (kh, kw), (stride, stride), "VALID",
        dimension_numbers=(lhs_spec, "OIHW", "CNHW"), precision=_HI)
    k, n, oh, ow = p.shape
    return p.reshape(k, n * oh * ow), oh, ow


# ---------------------------------------------------------------------------
# One-time parameter re-layout (kernel-friendly shapes; PyTorch semantics)
# ---------------------------------------------------------------------------
def prepare_params(params, activate_additional):
    n_conv_feat = 32 * 3 * 3                     # 288
    wa1 = params["wa1"]                          # (64, 288 or 336)
    prep = {
        "w1f": params["w1"].reshape(params["w1"].shape[0], -1),   # (8, 36)
        "b1c": params["b1"].reshape(-1, 1),                       # (8, 1)
        "w2f": params["w2"].reshape(params["w2"].shape[0], -1),   # (32, 392)
        "b2c": params["b2"].reshape(-1, 1),                       # (32, 1)
        "w3T": params["w3"].reshape(params["w3"].shape[0], -1).T, # (800, 32)
        "b3r": params["b3"].reshape(1, -1),                       # (1, 32)
        # affine1 weight over conv features, permuted to (hw, c, out) so the
        # fused tail kernel needs no in-kernel flatten/transpose:
        #   wa1s[hw, c, o] == wa1[o, c*9 + hw]
        "wa1s": wa1[:, :n_conv_feat].reshape(wa1.shape[0], 32, 9)
                    .transpose(2, 1, 0),                          # (9, 32, 64)
        "b1r": params["ba1"].reshape(1, -1),                      # (1, 64)
        "wa2T": params["wa2"].T,                                  # (64, 4)
        "b2r": params["ba2"].reshape(1, -1),                      # (1, 4)
    }
    if activate_additional:
        prep["wa1y"] = wa1[:, n_conv_feat:].T                     # (48, 64)
    return prep


# ---------------------------------------------------------------------------
# Forward pass = DQN_big2.forward
# ---------------------------------------------------------------------------
def dqn_big2_forward(prep, x, y, activate_additional):
    n = x.shape[0]

    # conv1 (k3, s1) -- patches^T (36, N*70*70), lane-dense matmul in Pallas
    p1, oh1, ow1 = _patches_KM(x, "NCHW", 3, 3, 1)
    h1 = matmul_T(prep["w1f"], p1, prep["b1c"], apply_relu=True, tile_m=4096)
    h1 = h1.reshape(h1.shape[0], n, oh1, ow1)            # (8, N, 70, 70) CNHW

    # conv2 (k7, s4)
    p2, oh2, ow2 = _patches_KM(h1, "CNHW", 7, 7, 4)
    h2 = matmul_T(prep["w2f"], p2, prep["b2c"], apply_relu=True, tile_m=512)
    h2 = h2.reshape(h2.shape[0], n, oh2, ow2)            # (32, N, 16, 16) CNHW

    # conv3 patches grouped per output spatial position, hw-major batch-minor:
    # (OH, OW, N, 800) -> (9*N, 800)   (free row-major reshape, no transpose)
    p3 = lax.conv_general_dilated_patches(
        h2, (5, 5), (4, 4), "VALID",
        dimension_numbers=("CNHW", "OIHW", "HWNC"), precision=_HI)
    p3 = p3.reshape(p3.shape[0] * p3.shape[1] * n, p3.shape[3])

    # fused conv3 + flatten + concat(y) + affine1 + affine2 in one pallas_call
    y_in = y.reshape(n, -1) if activate_additional else None
    return tail_fused(p3, y_in, prep, activate_additional)


# ---------------------------------------------------------------------------
# Deterministic parameter init (PyTorch-like U(-1/sqrt(fan_in), 1/sqrt(fan_in)))
# ---------------------------------------------------------------------------
def init_params(key, activate_additional):
    ks = jax.random.split(key, 10)

    def u(k, shape, fan_in):
        bound = 1.0 / math.sqrt(fan_in)
        return jax.random.uniform(k, shape, jnp.float32, -bound, bound)

    in1 = 336 if activate_additional else 288
    return {
        "w1": u(ks[0], (8, 4, 3, 3), 4 * 3 * 3),
        "b1": u(ks[1], (8,), 4 * 3 * 3),
        "w2": u(ks[2], (32, 8, 7, 7), 8 * 7 * 7),
        "b2": u(ks[3], (32,), 8 * 7 * 7),
        "w3": u(ks[4], (32, 32, 5, 5), 32 * 5 * 5),
        "b3": u(ks[5], (32,), 32 * 5 * 5),
        "wa1": u(ks[6], (64, in1), in1),
        "ba1": u(ks[7], (64,), in1),
        "wa2": u(ks[8], (4, 64), 64),            # n_action is hardcoded to 4
        "ba2": u(ks[9], (4,), 64),
    }


# ---------------------------------------------------------------------------
# Pure-JAX reference (PyTorch layouts / semantics)
# ---------------------------------------------------------------------------
def ref_forward(params, x, y, activate_additional):
    dn = ("NCHW", "OIHW", "NCHW")

    def conv(h, w, b_, s):
        o = lax.conv_general_dilated(h, w, (s, s), "VALID",
                                     dimension_numbers=dn)
        return jnp.maximum(o + b_.reshape(1, -1, 1, 1), 0.0)

    b = x.shape[0]
    h = conv(x, params["w1"], params["b1"], 1)
    h = conv(h, params["w2"], params["b2"], 4)
    h = conv(h, params["w3"], params["b3"], 4)
    h = h.reshape(b, -1)
    if activate_additional:
        h = jnp.concatenate([h, y.reshape(b, -1)], axis=1)
    h = jnp.maximum(h @ params["wa1"].T + params["ba1"], 0.0)
    return h @ params["wa2"].T + params["ba2"]


if __name__ == "__main__":
    activate_additional = True
    key = jax.random.PRNGKey(0)
    kp, kx, ky = jax.random.split(key, 3)
    params = init_params(kp, activate_additional)
    prep = prepare_params(params, activate_additional)

    # Smallest spatial size consistent with affine1's 288 conv features:
    # 72 --conv1(k3,s1)--> 70 --conv2(k7,s4)--> 16 --conv3(k5,s4)--> 3 ; 32*3*3=288
    x = jax.random.normal(kx, (2, 4, 72, 72), jnp.float32)
    y = jax.random.normal(ky, (2, 48), jnp.float32)   # 336 - 288 = 48 extras / row

    fwd = jax.jit(functools.partial(dqn_big2_forward,
                                    activate_additional=activate_additional))
    out = jax.block_until_ready(fwd(prep, x, y))
    ref = ref_forward(params, x, y, activate_additional)

    assert out.shape == (2, 4), out.shape
    assert jnp.allclose(out, ref, rtol=2e-2, atol=2e-2), (out, ref)
    print("KERNEL_OK")
</pallas_src>

<mosaic_0001>
module attributes {stable_mosaic.version = 11 : i64} {
  func.func @_wxb_kernel(%arg0: i32, %arg1: memref<8x36xf32, #tpu.memory_space<vmem>>, %arg2: memref<36x4096xf32, #tpu.memory_space<vmem>>, %arg3: memref<8x1xf32, #tpu.memory_space<vmem>>, %arg4: memref<8x4096xf32, #tpu.memory_space<vmem>>) attributes {dimension_semantics = [#tpu.dimension_semantics<parallel>], iteration_bounds = array<i64: 3>, scalar_prefetch = 0 : i64, scratch_operands = 0 : i64, tpu.core_type = #tpu.core_type<tc>, window_params = [{pipeline_mode = #tpu.pipeline_mode<synchronous>, transform_indices = @transform_0, window_bounds = array<i64: 8, 36>}, {transform_indices = @transform_1, window_bounds = array<i64: 36, 4096>}, {pipeline_mode = #tpu.pipeline_mode<synchronous>, transform_indices = @transform_2, window_bounds = array<i64: 8, 1>}, {transform_indices = @transform_3, window_bounds = array<i64: 8, 4096>}]} {
    %c0 = arith.constant 0 : index
    %c0_0 = arith.constant 0 : index
    %0 = vector.load %arg1[%c0, %c0_0] : memref<8x36xf32, #tpu.memory_space<vmem>>, vector<8x36xf32>
    %c0_1 = arith.constant 0 : index
    %c0_2 = arith.constant 0 : index
    %1 = vector.load %arg2[%c0_1, %c0_2] : memref<36x4096xf32, #tpu.memory_space<vmem>>, vector<36x4096xf32>
    %cst = arith.constant dense<0.000000e+00> : vector<8x4096xf32>
    %2 = tpu.matmul %0, %1, %cst {dimension_numbers = #tpu.dot_dimension_numbers<[1], [0], [0], [1], [0, 0, 1, 1], [], []>} : vector<8x36xf32>, vector<36x4096xf32>, vector<8x4096xf32> -> vector<8x4096xf32>
    %c0_3 = arith.constant 0 : index
    %c0_4 = arith.constant 0 : index
    %3 = vector.load %arg3[%c0_3, %c0_4] : memref<8x1xf32, #tpu.memory_space<vmem>>, vector<8x1xf32>
    %4 = vector.broadcast %3 : vector<8x1xf32> to vector<8x4096xf32>
    %5 = arith.addf %2, %4 : vector<8x4096xf32>
    %cst_5 = arith.constant 0.000000e+00 : f32
    %6 = vector.broadcast %cst_5 : f32 to vector<8x4096xf32>
    %7 = arith.maximumf %5, %6 : vector<8x4096xf32>
    %c0_6 = arith.constant 0 : index
    %c0_7 = arith.constant 0 : index
    %8 = vector.load %arg4[%c0_6, %c0_7] : memref<8x4096xf32, #tpu.memory_space<vmem>>, vector<8x4096xf32>
    tpu.vector_store %arg4[%c0_6, %c0_7], %7 {strides = array<i32>} : memref<8x4096xf32, #tpu.memory_space<vmem>>, vector<8x4096xf32>,
    return
  }
  func.func @transform_0(%arg0: i32) -> (i32, i32) {
    %c0_i32 = arith.constant 0 : i32
    %c0_i32_0 = arith.constant 0 : i32
    %c0_i32_1 = arith.constant 0 : i32
    return %c0_i32, %c0_i32_0 : i32, i32
  }
  func.func @transform_1(%arg0: i32) -> (i32, i32) {
    %c0_i32 = arith.constant 0 : i32
    %c0_i32_0 = arith.constant 0 : i32
    return %c0_i32, %arg0 : i32, i32
  }
  func.func @transform_2(%arg0: i32) -> (i32, i32) {
    %c0_i32 = arith.constant 0 : i32
    %c0_i32_0 = arith.constant 0 : i32
    %c0_i32_1 = arith.constant 0 : i32
    return %c0_i32, %c0_i32_0 : i32, i32
  }
  func.func @transform_3(%arg0: i32) -> (i32, i32) {
    %c0_i32 = arith.constant 0 : i32
    %c0_i32_0 = arith.constant 0 : i32
    return %c0_i32, %arg0 : i32, i32
  }
}

module attributes {stable_mosaic.version = 11 : i64} {
  func.func @_wxb_kernel(%arg0: i32, %arg1: memref<32x392xf32, #tpu.memory_space<vmem>>, %arg2: memref<392x512xf32, #tpu.memory_space<vmem>>, %arg3: memref<32x1xf32, #tpu.memory_space<vmem>>, %arg4: memref<32x512xf32, #tpu.memory_space<vmem>>) attributes {dimension_semantics = [#tpu.dimension_semantics<parallel>], iteration_bounds = array<i64: 1>, scalar_prefetch = 0 : i64, scratch_operands = 0 : i64, tpu.core_type = #tpu.core_type<tc>, window_params = [{pipeline_mode = #tpu.pipeline_mode<synchronous>, transform_indices = @transform_0, window_bounds = array<i64: 32, 392>}, {transform_indices = @transform_1, window_bounds = array<i64: 392, 512>}, {pipeline_mode = #tpu.pipeline_mode<synchronous>, transform_indices = @transform_2, window_bounds = array<i64: 32, 1>}, {transform_indices = @transform_3, window_bounds = array<i64: 32, 512>}]} {
    %c0 = arith.constant 0 : index
    %c0_0 = arith.constant 0 : index
    %0 = vector.load %arg1[%c0, %c0_0] : memref<32x392xf32, #tpu.memory_space<vmem>>, vector<32x392xf32>
    %c0_1 = arith.constant 0 : index
    %c0_2 = arith.constant 0 : index
    %1 = vector.load %arg2[%c0_1, %c0_2] : memref<392x512xf32, #tpu.memory_space<vmem>>, vector<392x512xf32>
    %cst = arith.constant dense<0.000000e+00> : vector<32x512xf32>
    %2 = tpu.matmul %0, %1, %cst {dimension_numbers = #tpu.dot_dimension_numbers<[1], [0], [0], [1], [0, 0, 1, 1], [], []>} : vector<32x392xf32>, vector<392x512xf32>, vector<32x512xf32> -> vector<32x512xf32>
    %c0_3 = arith.constant 0 : index
    %c0_4 = arith.constant 0 : index
    %3 = vector.load %arg3[%c0_3, %c0_4] : memref<32x1xf32, #tpu.memory_space<vmem>>, vector<32x1xf32>
    %4 = vector.broadcast %3 : vector<32x1xf32> to vector<32x512xf32>
    %5 = arith.addf %2, %4 : vector<32x512xf32>
    %cst_5 = arith.constant 0.000000e+00 : f32
    %6 = vector.broadcast %cst_5 : f32 to vector<32x512xf32>
    %7 = arith.maximumf %5, %6 : vector<32x512xf32>
    %c0_6 = arith.constant 0 : index
    %c0_7 = arith.constant 0 : index
    %8 = vector.load %arg4[%c0_6, %c0_7] : memref<32x512xf32, #tpu.memory_space<vmem>>, vector<32x512xf32>
    tpu.vector_store %arg4[%c0_6, %c0_7], %7 {strides = array<i32>} : memref<32x512xf32, #tpu.memory_space<vmem>>, vector<32x512xf32>,
    return
  }
  func.func @transform_0(%arg0: i32) -> (i32, i32) {
    %c0_i32 = arith.constant 0 : i32
    %c0_i32_0 = arith.constant 0 : i32
    %c0_i32_1 = arith.constant 0 : i32
    return %c0_i32, %c0_i32_0 : i32, i32
  }
  func.func @transform_1(%arg0: i32) -> (i32, i32) {
    %c0_i32 = arith.constant 0 : i32
    %c0_i32_0 = arith.constant 0 : i32
    return %c0_i32, %arg0 : i32, i32
  }
  func.func @transform_2(%arg0: i32) -> (i32, i32) {
    %c0_i32 = arith.constant 0 : i32
    %c0_i32_0 = arith.constant 0 : i32
    %c0_i32_1 = arith.constant 0 : i32
    return %c0_i32, %c0_i32_0 : i32, i32
  }
  func.func @transform_3(%arg0: i32) -> (i32, i32) {
    %c0_i32 = arith.constant 0 : i32
    %c0_i32_0 = arith.constant 0 : i32
    return %c0_i32, %arg0 : i32, i32
  }
}

module attributes {stable_mosaic.version = 11 : i64} {
  func.func @_tail_kernel(%arg0: i32, %arg1: memref<18x800xf32, #tpu.memory_space<vmem>>, %arg2: memref<2x48xf32, #tpu.memory_space<vmem>>, %arg3: memref<800x32xf32, #tpu.memory_space<vmem>>, %arg4: memref<1x32xf32, #tpu.memory_space<vmem>>, %arg5: memref<9x32x64xf32, #tpu.memory_space<vmem>>, %arg6: memref<48x64xf32, #tpu.memory_space<vmem>>, %arg7: memref<1x64xf32, #tpu.memory_space<vmem>>, %arg8: memref<64x4xf32, #tpu.memory_space<vmem>>, %arg9: memref<1x4xf32, #tpu.memory_space<vmem>>, %arg10: memref<2x4xf32, #tpu.memory_space<vmem>>) attributes {dimension_semantics = [#tpu.dimension_semantics<arbitrary>], iteration_bounds = array<i64: 1>, scalar_prefetch = 0 : i64, scratch_operands = 0 : i64, tpu.core_type = #tpu.core_type<tc>, window_params = [{pipeline_mode = #tpu.pipeline_mode<synchronous>, transform_indices = @transform_0, window_bounds = array<i64: 18, 800>}, {pipeline_mode = #tpu.pipeline_mode<synchronous>, transform_indices = @transform_1, window_bounds = array<i64: 2, 48>}, {pipeline_mode = #tpu.pipeline_mode<synchronous>, transform_indices = @transform_2, window_bounds = array<i64: 800, 32>}, {pipeline_mode = #tpu.pipeline_mode<synchronous>, transform_indices = @transform_3, window_bounds = array<i64: 1, 32>}, {pipeline_mode = #tpu.pipeline_mode<synchronous>, transform_indices = @transform_4, window_bounds = array<i64: 9, 32, 64>}, {pipeline_mode = #tpu.pipeline_mode<synchronous>, transform_indices = @transform_5, window_bounds = array<i64: 48, 64>}, {pipeline_mode = #tpu.pipeline_mode<synchronous>, transform_indices = @transform_6, window_bounds = array<i64: 1, 64>}, {pipeline_mode = #tpu.pipeline_mode<synchronous>, transform_indices = @transform_7, window_bounds = array<i64: 64, 4>}, {pipeline_mode = #tpu.pipeline_mode<synchronous>, transform_indices = @transform_8, window_bounds = array<i64: 1, 4>}, {pipeline_mode = #tpu.pipeline_mode<synchronous>, transform_indices = @transform_9, window_bounds = array<i64: 2, 4>}]} {
    %c0 = arith.constant 0 : index
    %c0_0 = arith.constant 0 : index
    %0 = vector.load %arg1[%c0, %c0_0] : memref<18x800xf32, #tpu.memory_space<vmem>>, vector<18x800xf32>
    %c0_1 = arith.constant 0 : index
    %c0_2 = arith.constant 0 : index
    %1 = vector.load %arg3[%c0_1, %c0_2] : memref<800x32xf32, #tpu.memory_space<vmem>>, vector<800x32xf32>
    %cst = arith.constant dense<0.000000e+00> : vector<18x32xf32>
    %2 = tpu.matmul %0, %1, %cst {dimension_numbers = #tpu.dot_dimension_numbers<[1], [0], [0], [1], [0, 0, 1, 1], [], []>} : vector<18x800xf32>, vector<800x32xf32>, vector<18x32xf32> -> vector<18x32xf32>
    %c0_3 = arith.constant 0 : index
    %c0_4 = arith.constant 0 : index
    %3 = vector.load %arg4[%c0_3, %c0_4] : memref<1x32xf32, #tpu.memory_space<vmem>>, vector<1x32xf32>
    %4 = vector.broadcast %3 : vector<1x32xf32> to vector<18x32xf32>
    %5 = arith.addf %2, %4 : vector<18x32xf32>
    %cst_5 = arith.constant 0.000000e+00 : f32
    %6 = vector.broadcast %cst_5 : f32 to vector<18x32xf32>
    %7 = arith.maximumf %5, %6 : vector<18x32xf32>
    %c0_6 = arith.constant 0 : index
    %c0_7 = arith.constant 0 : index
    %8 = vector.load %arg2[%c0_6, %c0_7] : memref<2x48xf32, #tpu.memory_space<vmem>>, vector<2x48xf32>
    %c0_8 = arith.constant 0 : index
    %c0_9 = arith.constant 0 : index
    %9 = vector.load %arg6[%c0_8, %c0_9] : memref<48x64xf32, #tpu.memory_space<vmem>>, vector<48x64xf32>
    %cst_10 = arith.constant dense<0.000000e+00> : vector<2x64xf32>
    %10 = tpu.matmul %8, %9, %cst_10 {dimension_numbers = #tpu.dot_dimension_numbers<[1], [0], [0], [1], [0, 0, 1, 1], [], []>} : vector<2x48xf32>, vector<48x64xf32>, vector<2x64xf32> -> vector<2x64xf32>
    %11 = vector.extract_strided_slice %7 {offsets = [0, 0], sizes = [2, 32], strides = [1, 1]} : vector<18x32xf32> to vector<2x32xf32>
    %c0_11 = arith.constant 0 : index
    %c0_12 = arith.constant 0 : index
    %c0_13 = arith.constant 0 : index
    %12 = vector.load %arg5[%c0_11, %c0_12, %c0_13] : memref<9x32x64xf32, #tpu.memory_space<vmem>>, vector<1x32x64xf32>
    %13 = vector.shape_cast %12 : vector<1x32x64xf32> to vector<32x64xf32>
    %cst_14 = arith.constant dense<0.000000e+00> : vector<2x64xf32>
    %14 = tpu.matmul %11, %13, %cst_14 {dimension_numbers = #tpu.dot_dimension_numbers<[1], [0], [0], [1], [0, 0, 1, 1], [], []>} : vector<2x32xf32>, vector<32x64xf32>, vector<2x64xf32> -> vector<2x64xf32>
    %15 = arith.addf %10, %14 : vector<2x64xf32>
    %16 = vector.extract_strided_slice %7 {offsets = [2, 0], sizes = [2, 32], strides = [1, 1]} : vector<18x32xf32> to vector<2x32xf32>
    %c1 = arith.constant 1 : index
    %c0_15 = arith.constant 0 : index
    %c0_16 = arith.constant 0 : index
    %17 = vector.load %arg5[%c1, %c0_15, %c0_16] : memref<9x32x64xf32, #tpu.memory_space<vmem>>, vector<1x32x64xf32>
    %18 = vector.shape_cast %17 : vector<1x32x64xf32> to vector<32x64xf32>
    %cst_17 = arith.constant dense<0.000000e+00> : vector<2x64xf32>
    %19 = tpu.matmul %16, %18, %cst_17 {dimension_numbers = #tpu.dot_dimension_numbers<[1], [0], [0], [1], [0, 0, 1, 1], [], []>} : vector<2x32xf32>, vector<32x64xf32>, vector<2x64xf32> -> vector<2x64xf32>
    %20 = arith.addf %15, %19 : vector<2x64xf32>
    %21 = vector.extract_strided_slice %7 {offsets = [4, 0], sizes = [2, 32], strides = [1, 1]} : vector<18x32xf32> to vector<2x32xf32>
    %c2 = arith.constant 2 : index
    %c0_18 = arith.constant 0 : index
    %c0_19 = arith.constant 0 : index
    %22 = vector.load %arg5[%c2, %c0_18, %c0_19] : memref<9x32x64xf32, #tpu.memory_space<vmem>>, vector<1x32x64xf32>
    %23 = vector.shape_cast %22 : vector<1x32x64xf32> to vector<32x64xf32>
    %cst_20 = arith.constant dense<0.000000e+00> : vector<2x64xf32>
    %24 = tpu.matmul %21, %23, %cst_20 {dimension_numbers = #tpu.dot_dimension_numbers<[1], [0], [0], [1], [0, 0, 1, 1], [], []>} : vector<2x32xf32>, vector<32x64xf32>, vector<2x64xf32> -> vector<2x64xf32>
    %25 = arith.addf %20, %24 : vector<2x64xf32>
    %26 = vector.extract_strided_slice %7 {offsets = [6, 0], sizes = [2, 32], strides = [1, 1]} : vector<18x32xf32> to vector<2x32xf32>
    %c3 = arith.constant 3 : index
    %c0_21 = arith.constant 0 : index
    %c0_22 = arith.constant 0 : index
    %27 = vector.load %arg5[%c3, %c0_21, %c0_22] : memref<9x32x64xf32, #tpu.memory_space<vmem>>, vector<1x32x64xf32>
    %28 = vector.shape_cast %27 : vector<1x32x64xf32> to vector<32x64xf32>
    %cst_23 = arith.constant dense<0.000000e+00> : vector<2x64xf32>
    %29 = tpu.matmul %26, %28, %cst_23 {dimension_numbers = #tpu.dot_dimension_numbers<[1], [0], [0], [1], [0, 0, 1, 1], [], []>} : vector<2x32xf32>, vector<32x64xf32>, vector<2x64xf32> -> vector<2x64xf32>
    %30 = arith.addf %25, %29 : vector<2x64xf32>
    %31 = vector.extract_strided_slice %7 {offsets = [8, 0], sizes = [2, 32], strides = [1, 1]} : vector<18x32xf32> to vector<2x32xf32>
    %c4 = arith.constant 4 : index
    %c0_24 = arith.constant 0 : index
    %c0_25 = arith.constant 0 : index
    %32 = vector.load %arg5[%c4, %c0_24, %c0_25] : memref<9x32x64xf32, #tpu.memory_space<vmem>>, vector<1x32x64xf32>
    %33 = vector.shape_cast %32 : vector<1x32x64xf32> to vector<32x64xf32>
    %cst_26 = arith.constant dense<0.000000e+00> : vector<2x64xf32>
    %34 = tpu.matmul %31, %33, %cst_26 {dimension_numbers = #tpu.dot_dimension_numbers<[1], [0], [0], [1], [0, 0, 1, 1], [], []>} : vector<2x32xf32>, vector<32x64xf32>, vector<2x64xf32> -> vector<2x64xf32>
    %35 = arith.addf %30, %34 : vector<2x64xf32>
    %36 = vector.extract_strided_slice %7 {offsets = [10, 0], sizes = [2, 32], strides = [1, 1]} : vector<18x32xf32> to vector<2x32xf32>
    %c5 = arith.constant 5 : index
    %c0_27 = arith.constant 0 : index
    %c0_28 = arith.constant 0 : index
    %37 = vector.load %arg5[%c5, %c0_27, %c0_28] : memref<9x32x64xf32, #tpu.memory_space<vmem>>, vector<1x32x64xf32>
    %38 = vector.shape_cast %37 : vector<1x32x64xf32> to vector<32x64xf32>
    %cst_29 = arith.constant dense<0.000000e+00> : vector<2x64xf32>
    %39 = tpu.matmul %36, %38, %cst_29 {dimension_numbers = #tpu.dot_dimension_numbers<[1], [0], [0], [1], [0, 0, 1, 1], [], []>} : vector<2x32xf32>, vector<32x64xf32>, vector<2x64xf32> -> vector<2x64xf32>
    %40 = arith.addf %35, %39 : vector<2x64xf32>
    %41 = vector.extract_strided_slice %7 {offsets = [12, 0], sizes = [2, 32], strides = [1, 1]} : vector<18x32xf32> to vector<2x32xf32>
    %c6 = arith.constant 6 : index
    %c0_30 = arith.constant 0 : index
    %c0_31 = arith.constant 0 : index
    %42 = vector.load %arg5[%c6, %c0_30, %c0_31] : memref<9x32x64xf32, #tpu.memory_space<vmem>>, vector<1x32x64xf32>
    %43 = vector.shape_cast %42 : vector<1x32x64xf32> to vector<32x64xf32>
    %cst_32 = arith.constant dense<0.000000e+00> : vector<2x64xf32>
    %44 = tpu.matmul %41, %43, %cst_32 {dimension_numbers = #tpu.dot_dimension_numbers<[1], [0], [0], [1], [0, 0, 1, 1], [], []>} : vector<2x32xf32>, vector<32x64xf32>, vector<2x64xf32> -> vector<2x64xf32>
    %45 = arith.addf %40, %44 : vector<2x64xf32>
    %46 = vector.extract_strided_slice %7 {offsets = [14, 0], sizes = [2, 32], strides = [1, 1]} : vector<18x32xf32> to vector<2x32xf32>
    %c7 = arith.constant 7 : index
    %c0_33 = arith.constant 0 : index
    %c0_34 = arith.constant 0 : index
    %47 = vector.load %arg5[%c7, %c0_33, %c0_34] : memref<9x32x64xf32, #tpu.memory_space<vmem>>, vector<1x32x64xf32>
    %48 = vector.shape_cast %47 : vector<1x32x64xf32> to vector<32x64xf32>
    %cst_35 = arith.constant dense<0.000000e+00> : vector<2x64xf32>
    %49 = tpu.matmul %46, %48, %cst_35 {dimension_numbers = #tpu.dot_dimension_numbers<[1], [0], [0], [1], [0, 0, 1, 1], [], []>} : vector<2x32xf32>, vector<32x64xf32>, vector<2x64xf32> -> vector<2x64xf32>
    %50 = arith.addf %45, %49 : vector<2x64xf32>
    %51 = vector.extract_strided_slice %7 {offsets = [16, 0], sizes = [2, 32], strides = [1, 1]} : vector<18x32xf32> to vector<2x32xf32>
    %c8 = arith.constant 8 : index
    %c0_36 = arith.constant 0 : index
    %c0_37 = arith.constant 0 : index
    %52 = vector.load %arg5[%c8, %c0_36, %c0_37] : memref<9x32x64xf32, #tpu.memory_space<vmem>>, vector<1x32x64xf32>
    %53 = vector.shape_cast %52 : vector<1x32x64xf32> to vector<32x64xf32>
    %cst_38 = arith.constant dense<0.000000e+00> : vector<2x64xf32>
    %54 = tpu.matmul %51, %53, %cst_38 {dimension_numbers = #tpu.dot_dimension_numbers<[1], [0], [0], [1], [0, 0, 1, 1], [], []>} : vector<2x32xf32>, vector<32x64xf32>, vector<2x64xf32> -> vector<2x64xf32>
    %55 = arith.addf %50, %54 : vector<2x64xf32>
    %c0_39 = arith.constant 0 : index
    %c0_40 = arith.constant 0 : index
    %56 = vector.load %arg7[%c0_39, %c0_40] : memref<1x64xf32, #tpu.memory_space<vmem>>, vector<1x64xf32>
    %57 = vector.broadcast %56 : vector<1x64xf32> to vector<2x64xf32>
    %58 = arith.addf %55, %57 : vector<2x64xf32>
    %cst_41 = arith.constant 0.000000e+00 : f32
    %59 = vector.broadcast %cst_41 : f32 to vector<2x64xf32>
    %60 = arith.maximumf %58, %59 : vector<2x64xf32>
    %c0_42 = arith.constant 0 : index
    %c0_43 = arith.constant 0 : index
    %61 = vector.load %arg8[%c0_42, %c0_43] : memref<64x4xf32, #tpu.memory_space<vmem>>, vector<64x4xf32>
    %cst_44 = arith.constant dense<0.000000e+00> : vector<2x4xf32>
    %62 = tpu.matmul %60, %61, %cst_44 {dimension_numbers = #tpu.dot_dimension_numbers<[1], [0], [0], [1], [0, 0, 1, 1], [], []>} : vector<2x64xf32>, vector<64x4xf32>, vector<2x4xf32> -> vector<2x4xf32>
    %c0_45 = arith.constant 0 : index
    %c0_46 = arith.constant 0 : index
    %63 = vector.load %arg9[%c0_45, %c0_46] : memref<1x4xf32, #tpu.memory_space<vmem>>, vector<1x4xf32>
    %64 = vector.broadcast %63 : vector<1x4xf32> to vector<2x4xf32>
    %65 = arith.addf %62, %64 : vector<2x4xf32>
    %c0_47 = arith.constant 0 : index
    %c0_48 = arith.constant 0 : index
    %66 = vector.load %arg10[%c0_47, %c0_48] : memref<2x4xf32, #tpu.memory_space<vmem>>, vector<2x4xf32>
    tpu.vector_store %arg10[%c0_47, %c0_48], %65 {strides = array<i32>} : memref<2x4xf32, #tpu.memory_space<vmem>>, vector<2x4xf32>,
    return
  }
  func.func @transform_0(%arg0: i32) -> (i32, i32) {
    %c0_i32 = arith.constant 0 : i32
    %c0_i32_0 = arith.constant 0 : i32
    %c0_i32_1 = arith.constant 0 : i32
    return %c0_i32, %c0_i32_0 : i32, i32
  }
  func.func @transform_1(%arg0: i32) -> (i32, i32) {
    %c0_i32 = arith.constant 0 : i32
    %c0_i32_0 = arith.constant 0 : i32
    %c0_i32_1 = arith.constant 0 : i32
    return %c0_i32, %c0_i32_0 : i32, i32
  }
  func.func @transform_2(%arg0: i32) -> (i32, i32) {
    %c0_i32 = arith.constant 0 : i32
    %c0_i32_0 = arith.constant 0 : i32
    %c0_i32_1 = arith.constant 0 : i32
    return %c0_i32, %c0_i32_0 : i32, i32
  }
  func.func @transform_3(%arg0: i32) -> (i32, i32) {
    %c0_i32 = arith.constant 0 : i32
    %c0_i32_0 = arith.constant 0 : i32
    %c0_i32_1 = arith.constant 0 : i32
    return %c0_i32, %c0_i32_0 : i32, i32
  }
  func.func @transform_4(%arg0: i32) -> (i32, i32, i32) {
    %c0_i32 = arith.constant 0 : i32
    %c0_i32_0 = arith.constant 0 : i32
    %c0_i32_1 = arith.constant 0 : i32
    %c0_i32_2 = arith.constant 0 : i32
    return %c0_i32, %c0_i32_0, %c0_i32_1 : i32, i32, i32
  }
  func.func @transform_5(%arg0: i32) -> (i32, i32) {
    %c0_i32 = arith.constant 0 : i32
    %c0_i32_0 = arith.constant 0 : i32
    %c0_i32_1 = arith.constant 0 : i32
    return %c0_i32, %c0_i32_0 : i32, i32
  }
  func.func @transform_6(%arg0: i32) -> (i32, i32) {
    %c0_i32 = arith.constant 0 : i32
    %c0_i32_0 = arith.constant 0 : i32
    %c0_i32_1 = arith.constant 0 : i32
    return %c0_i32, %c0_i32_0 : i32, i32
  }
  func.func @transform_7(%arg0: i32) -> (i32, i32) {
    %c0_i32 = arith.constant 0 : i32
    %c0_i32_0 = arith.constant 0 : i32
    %c0_i32_1 = arith.constant 0 : i32
    return %c0_i32, %c0_i32_0 : i32, i32
  }
  func.func @transform_8(%arg0: i32) -> (i32, i32) {
    %c0_i32 = arith.constant 0 : i32
    %c0_i32_0 = arith.constant 0 : i32
    %c0_i32_1 = arith.constant 0 : i32
    return %c0_i32, %c0_i32_0 : i32, i32
  }
  func.func @transform_9(%arg0: i32) -> (i32, i32) {
    %c0_i32 = arith.constant 0 : i32
    %c0_i32_0 = arith.constant 0 : i32
    %c0_i32_1 = arith.constant 0 : i32
    return %c0_i32, %c0_i32_0 : i32, i32
  }
}

</mosaic_0001>

<llo_original>
// kernel: dqn_big2_forward.3
$region0: #{dqn_big2_forward.3}
  #allocation0 [shape = 'u32[]', space=smem, size = 0x4, offset = 0x4, fixed_abs, tag = 'smem constant byte address 0x4 - core index']
  #allocation1 [shape = 'u32[72,128]{1,0:T(1,128)}', space=vmem, size = 0x9000, scoped, tag = 'internal scratch']
  %s0 = inlined_call_operand.vmem [shape: f32[8,36], index: 0, kind: input, shape index: {}]
  %s1 = inlined_call_operand.vmem [shape: f32[36,9800], index: 1, kind: input, shape index: {}]
  %s2 = inlined_call_operand.vmem [shape: f32[8,1], index: 2, kind: input, shape index: {}]
  %s3 = inlined_call_operand.vmem [shape: f32[8,9800], index: 3, kind: output, shape index: {}]
  %s4 = sld [smem:[#allocation0]]
  $region173: #{dqn_big2_forward.3} parent=0
    _
  %s6 = ssub.s32 1, %s4
  %s7 = scalar_select 0, %s6, %s4
  $region1: #{dqn_big2_forward.3} parent=0
    #allocation2 [shape = 'u8[1310720]{0}', space=vmem, size = 0x140000, scoped, tag = 'input window, operand 1']
    #allocation3 [shape = 'u8[262144]{0}', space=vmem, size = 0x40000, scoped, tag = 'output window, operand 0']
    loop: start=0, step=1, limit=5
    $region2: #{dqn_big2_forward.3} parent=1 // loop_pre_header
      _
    $region3: #{dqn_big2_forward.3} parent=1 // loop_header
      %s9 = sphi 0, %s13
      %p10 = scmp.ge.s32.totalorder %s9, 5
      %s17 = sphi 0, %s17
      %s19 = sphi 0, %s17
      %s20 = sphi 0, %s19
      %s34 = sphi 0, %s20
      %s40 = sphi 0, %s42
      %s43 = sphi 0, %s40
      %s44 = sphi 0, %s43
      %s60 = sphi 0, %s44
      %s64 = sphi 0, %s64
      %s66 = sphi 0, %s64
      %s67 = sphi 0, %s66
      %s81 = sphi 0, %s67
      %s87 = sphi 0, %s89
      %s90 = sphi 0, %s87
      %s91 = sphi 0, %s90
      %s107 = sphi 0, %s91
    $region4: #{dqn_big2_forward.3} parent=1 // loop_header_branch
      %12 = sbr.rel (%p10) target = $region8
    $region5: #{dqn_big2_forward.3} parent=1 // loop_body
      %s14 = ssub.s32 %s9, 1
      %s15 = ssub.s32 %s9, 2
      %s16 = sadd.s32 %s9, 1
      %s18 = sadd.s32 %s17, 1
      %p21 = scmp.eq.s32.totalorder %s9, 2
      %p22 = scmp.ne.s32.totalorder %s17, %s19
      %p23 = scmp.eq.s32.totalorder %s9, 0
      %p24 = por %p22, %p23
      %p25 = scmp.ne.s32.totalorder %s17, %s19
      %p26 = scmp.eq.s32.totalorder %s14, 2
      %p27 = por %p25, %p26
      %p28 = scmp.ne.s32.totalorder %s19, %s20
      %p29 = scmp.eq.s32.totalorder %s14, 0
      %p30 = por %p28, %p29
      %p31 = scmp.ne.s32.totalorder %s19, %s20
      %p32 = scmp.eq.s32.totalorder %s15, 2
      %p33 = por %p31, %p32
      %p35 = scmp.ne.s32.totalorder %s20, %s34
      %p36 = scmp.eq.s32.totalorder %s15, 0
      %p37 = por %p35, %p36
      %s38 = ssub.s32 %s9, %s16
      %p39 = scmp.eq.s32.totalorder %s38, 0
      %s41 = sadd.s32 %s40, 1
      %s42 = scalar_select %p39, %s40, %s41
      %p45 = pneg %p39
      %p46 = scmp.eq.s32.totalorder %s9, 2
      %p47 = por %p45, %p46
      %p48 = scmp.ne.s32.totalorder %s40, %s43
      %p49 = scmp.eq.s32.totalorder %s9, 0
      %p50 = por %p48, %p49
      %p51 = scmp.ne.s32.totalorder %s40, %s43
      %p52 = scmp.eq.s32.totalorder %s14, 2
      %p53 = por %p51, %p52
      %p54 = scmp.ne.s32.totalorder %s43, %s44
      %p55 = scmp.eq.s32.totalorder %s14, 0
      %p56 = por %p54, %p55
      %p57 = scmp.ne.s32.totalorder %s43, %s44
      %p58 = scmp.eq.s32.totalorder %s15, 2
      %p59 = por %p57, %p58
      %p61 = scmp.ne.s32.totalorder %s44, %s60
      %p62 = scmp.eq.s32.totalorder %s15, 0
      %p63 = por %p61, %p62
      %s65 = sadd.s32 %s64, 1
      %p68 = scmp.eq.s32.totalorder %s9, 2
      %p69 = scmp.ne.s32.totalorder %s64, %s66
      %p70 = scmp.eq.s32.totalorder %s9, 0
      %p71 = por %p69, %p70
      %p72 = scmp.ne.s32.totalorder %s64, %s66
      %p73 = scmp.eq.s32.totalorder %s14, 2
      %p74 = por %p72, %p73
      %p75 = scmp.ne.s32.totalorder %s66, %s67
      %p76 = scmp.eq.s32.totalorder %s14, 0
      %p77 = por %p75, %p76
      %p78 = scmp.ne.s32.totalorder %s66, %s67
      %p79 = scmp.eq.s32.totalorder %s15, 2
      %p80 = por %p78, %p79
      %p82 = scmp.ne.s32.totalorder %s67, %s81
      %p83 = scmp.eq.s32.totalorder %s15, 0
      %p84 = por %p82, %p83
      %s85 = ssub.s32 %s9, %s16
      %p86 = scmp.eq.s32.totalorder %s85, 0
      %s88 = sadd.s32 %s87, 1
      %s89 = scalar_select %p86, %s87, %s88
      %p92 = pneg %p86
      %p93 = scmp.eq.s32.totalorder %s9, 2
      %p94 = por %p92, %p93
      %p95 = scmp.ne.s32.totalorder %s87, %s90
      %p96 = scmp.eq.s32.totalorder %s9, 0
      %p97 = por %p95, %p96
      %p98 = scmp.ne.s32.totalorder %s87, %s90
      %p99 = scmp.eq.s32.totalorder %s14, 2
      %p100 = por %p98, %p99
      %p101 = scmp.ne.s32.totalorder %s90, %s91
      %p102 = scmp.eq.s32.totalorder %s14, 0
      %p103 = por %p101, %p102
      %p104 = scmp.ne.s32.totalorder %s90, %s91
      %p105 = scmp.eq.s32.totalorder %s15, 2
      %p106 = por %p104, %p105
      %p108 = scmp.ne.s32.totalorder %s91, %s107
      %p109 = scmp.eq.s32.totalorder %s15, 0
      %p110 = por %p108, %p109
      %p111 = scmp.le.s32.totalorder 1, %s9
      %p112 = scmp.lt.s32.totalorder %s9, 4
      %p113 = pnand %p111, %p112
      %p114 = pneg %p113
      // Predicated region
      $region9: #{dqn_big2_forward.3} parent=5 // pred_check
        _
      $region10: #{dqn_big2_forward.3} parent=5 // pred_check_branch
        %116 = sbr.rel (%p113) target = $region12
      $region11: #{dqn_big2_forward.3} parent=5 // pred_region
        %s117 = ssub.s32 %s9, 1
        // Predicated region
        $region13: #{dqn_big2_forward.3} parent=11 // pred_check
          %p118 = pneg %p30
        $region14: #{dqn_big2_forward.3} parent=11 // pred_check_branch
          %120 = sbr.rel (%p118) target = $region16
        $region15: #{dqn_big2_forward.3} parent=11 // pred_region
          _
        $region16: #{dqn_big2_forward.3} parent=11 // pred_fallthru
          _
        // Predicated region
        $region17: #{dqn_big2_forward.3} parent=11 // pred_check
          %p121 = pneg %p77
        $region18: #{dqn_big2_forward.3} parent=11 // pred_check_branch
          %123 = sbr.rel (%p121) target = $region20
        $region19: #{dqn_big2_forward.3} parent=11 // pred_region
          _
        $region20: #{dqn_big2_forward.3} parent=11 // pred_fallthru
          _
      $region12: #{dqn_big2_forward.3} parent=5 // pred_fallthru
        _
      %p124 = scmp.lt.s32.totalorder %s9, 3
      // Predicated region
      $region21: #{dqn_big2_forward.3} parent=5 // pred_check
        %p125 = pneg %p124
      $region22: #{dqn_big2_forward.3} parent=5 // pred_check_branch
        %127 = sbr.rel (%p125) target = $region24
      $region23: #{dqn_big2_forward.3} parent=5 // pred_region
        // Predicated region
        $region25: #{dqn_big2_forward.3} parent=23 // pred_check
          %p128 = pneg %p50
        $region26: #{dqn_big2_forward.3} parent=23 // pred_check_branch
          %130 = sbr.rel (%p128) target = $region28
        $region27: #{dqn_big2_forward.3} parent=23 // pred_region
          %s131 = sand.u32 %s40, 1
          %s132 = sand.u32 %s40, 1
          %s133 = smul.addr %s132, 1280
          %s134 = scalar_lea.vmem [#allocation2], %s133
          %s135 = smul.u32 32, %s9
          %s136 = ssub.s32 77, %s135
          %p137 = scmp.lt.s32.totalorder %s136, 32
          %s138 = scalar_select %p137, %s136, 32
          %s139 = smul.u32 40, %s138
          %p140 = scmp.ne.s32.totalorder 0, %s139
          %s141 = smul.addr %s135, 8
          %s142 = scalar_lea.vmem %s1, %s141
          %s143 = smul.u32 %s138, 8
          // Predicated region
          $region29: #{dqn_big2_forward.3} parent=27 // pred_check
            %p144 = pneg %p140
          $region30: #{dqn_big2_forward.3} parent=27 // pred_check_branch
            %146 = sbr.rel (%p144) target = $region32
          $region31: #{dqn_big2_forward.3} parent=27 // pred_region
            %p147 = scmp.lt.u32.totalorder %s143, 8
            %p148 = pneg %p147
            // Predicated region
            $region33: #{dqn_big2_forward.3} parent=31 // pred_check
              _
            $region34: #{dqn_big2_forward.3} parent=31 // pred_check_branch
              %150 = sbr.rel (%p147) target = $region36
            $region35: #{dqn_big2_forward.3} parent=31 // pred_region
              %s174 = sand.u32 %s143, 7
              %p175 = scmp.eq.s32.totalorder %s174, 0
              // Predicated region
              $region48: #{dqn_big2_forward.3} parent=35 // pred_check
                %p176 = pneg %p175
              $region49: #{dqn_big2_forward.3} parent=35 // pred_check_branch
                %178 = sbr.rel (%p176) target = $region51
              $region50: #{dqn_big2_forward.3} parent=35 // pred_region
                %s179 = sshrl.u32 %s143, 3
                %s180 = sshrl.u32 %s179, 3
                // While loop
                $region52: #{dqn_big2_forward.3} parent=50 // loop_pre_header
                  _
                $region53: #{dqn_big2_forward.3} parent=50 // loop_header
                  %s182 = sphi 0, %s184
                  %p183 = scmp.ge.s32.totalorder %s182, %s180
                  %s187 = sphi 0, %s272
                  %s188 = sphi %s142, %s275
                  %s189 = sphi %s134, %s276
                $region54: #{dqn_big2_forward.3} parent=50 // loop_header_branch
                  %186 = sbr.rel (%p183) target = $region58
                $region55: #{dqn_big2_forward.3} parent=50 // loop_body
                  %v190 = vld [vmem:[%s188] sm:$0xff]
                  %191 = vst [vmem:[%s189] sm:$0xff] %v190
                  %v192 = vld [vmem:[%s188 + $0x8] sm:$0xff]
                  %193 = vst [vmem:[%s189 + $0x8] sm:$0xff] %v192
                  %v194 = vld [vmem:[%s188 + $0x10] sm:$0xff]
                  %195 = vst [vmem:[%s189 + $0x10] sm:$0xff] %v194
                  %v196 = vld [vmem:[%s188 + $0x18] sm:$0xff]
                  %197 = vst [vmem:[%s189 + $0x18] sm:$0xff] %v196
                  %v198 = vld [vmem:[%s188 + $0x20] sm:$0xff]
                  %199 = vst [vmem:[%s189 + $0x20] sm:$0xff] %v198
                  %v200 = vld [vmem:[%s188 + $0x28] sm:$0xff]
                  %201 = vst [vmem:[%s189 + $0x28] sm:$0xff] %v200
                  %v202 = vld [vmem:[%s188 + $0x30] sm:$0xff]
                  %203 = vst [vmem:[%s189 + $0x30] sm:$0xff] %v202
                  %v204 = vld [vmem:[%s188 + $0x38] sm:$0xff]
                  %205 = vst [vmem:[%s189 + $0x38] sm:$0xff] %v204
                  %v206 = vld [vmem:[%s188 + $0x268] sm:$0xff]
                  %207 = vst [vmem:[%s189 + $0x100] sm:$0xff] %v206
                  %v208 = vld [vmem:[%s188 + $0x270] sm:$0xff]
                  %209 = vst [vmem:[%s189 + $0x108] sm:$0xff] %v208
                  %v210 = vld [vmem:[%s188 + $0x278] sm:$0xff]
                  %211 = vst [vmem:[%s189 + $0x110] sm:$0xff] %v210
                  %v212 = vld [vmem:[%s188 + $0x280] sm:$0xff]
                  %213 = vst [vmem:[%s189 + $0x118] sm:$0xff] %v212
                  %v214 = vld [vmem:[%s188 + $0x288] sm:$0xff]
                  %215 = vst [vmem:[%s189 + $0x120] sm:$0xff] %v214
                  %v216 = vld [vmem:[%s188 + $0x290] sm:$0xff]
                  %217 = vst [vmem:[%s189 + $0x128] sm:$0xff] %v216
                  %v218 = vld [vmem:[%s188 + $0x298] sm:$0xff]
                  %219 = vst [vmem:[%s189 + $0x130] sm:$0xff] %v218
                  %v220 = vld [vmem:[%s188 + $0x2a0] sm:$0xff]
                  %221 = vst [vmem:[%s189 + $0x138] sm:$0xff] %v220
                  %v222 = vld [vmem:[%s188 + $0x4d0] sm:$0xff]
                  %223 = vst [vmem:[%s189 + $0x200] sm:$0xff] %v222
                  %v224 = vld [vmem:[%s188 + $0x4d8] sm:$0xff]
                  %225 = vst [vmem:[%s189 + $0x208] sm:$0xff] %v224
                  %v226 = vld [vmem:[%s188 + $0x4e0] sm:$0xff]
                  %227 = vst [vmem:[%s189 + $0x210] sm:$0xff] %v226
                  %v228 = vld [vmem:[%s188 + $0x4e8] sm:$0xff]
                  %229 = vst [vmem:[%s189 + $0x218] sm:$0xff] %v228
                  %v230 = vld [vmem:[%s188 + $0x4f0] sm:$0xff]
                  %231 = vst [vmem:[%s189 + $0x220] sm:$0xff] %v230
                  %v232 = vld [vmem:[%s188 + $0x4f8] sm:$0xff]
                  %233 = vst [vmem:[%s189 + $0x228] sm:$0xff] %v232
                  %v234 = vld [vmem:[%s188 + $0x500] sm:$0xff]
                  %235 = vst [vmem:[%s189 + $0x230] sm:$0xff] %v234
                  %v236 = vld [vmem:[%s188 + $0x508] sm:$0xff]
                  %237 = vst [vmem:[%s189 + $0x238] sm:$0xff] %v236
                  %v238 = vld [vmem:[%s188 + $0x738] sm:$0xff]
                  %239 = vst [vmem:[%s189 + $0x300] sm:$0xff] %v238
                  %v240 = vld [vmem:[%s188 + $0x740] sm:$0xff]
                  %241 = vst [vmem:[%s189 + $0x308] sm:$0xff] %v240
                  %v242 = vld [vmem:[%s188 + $0x748] sm:$0xff]
                  %243 = vst [vmem:[%s189 + $0x310] sm:$0xff] %v242
                  %v244 = vld [vmem:[%s188 + $0x750] sm:$0xff]
                  %245 = vst [vmem:[%s189 + $0x318] sm:$0xff] %v244
                  %v246 = vld [vmem:[%s188 + $0x758] sm:$0xff]
                  %247 = vst [vmem:[%s189 + $0x320] sm:$0xff] %v246
                  %v248 = vld [vmem:[%s188 + $0x760] sm:$0xff]
                  %249 = vst [vmem:[%s189 + $0x328] sm:$0xff] %v248
                  %v250 = vld [vmem:[%s188 + $0x768] sm:$0xff]
                  %251 = vst [vmem:[%s189 + $0x330] sm:$0xff] %v250
                  %v252 = vld [vmem:[%s188 + $0x770] sm:$0xff]
                  %253 = vst [vmem:[%s189 + $0x338] sm:$0xff] %v252
                  %v254 = vld [vmem:[%s188 + $0x9a0] sm:$0xff]
                  %255 = vst [vmem:[%s189 + $0x400] sm:$0xff] %v254
                  %v256 = vld [vmem:[%s188 + $0x9a8] sm:$0xff]
                  %257 = vst [vmem:[%s189 + $0x408] sm:$0xff] %v256
                  %v258 = vld [vmem:[%s188 + $0x9b0] sm:$0xff]
                  %259 = vst [vmem:[%s189 + $0x410] sm:$0xff] %v258
                  %v260 = vld [vmem:[%s188 + $0x9b8] sm:$0xff]
                  %261 = vst [vmem:[%s189 + $0x418] sm:$0xff] %v260
                  %v262 = vld [vmem:[%s188 + $0x9c0] sm:$0xff]
                  %263 = vst [vmem:[%s189 + $0x420] sm:$0xff] %v262
                  %v264 = vld [vmem:[%s188 + $0x9c8] sm:$0xff]
                  %265 = vst [vmem:[%s189 + $0x428] sm:$0xff] %v264
                  %v266 = vld [vmem:[%s188 + $0x9d0] sm:$0xff]
                  %267 = vst [vmem:[%s189 + $0x430] sm:$0xff] %v266
                  %v268 = vld [vmem:[%s188 + $0x9d8] sm:$0xff]
                  %269 = vst [vmem:[%s189 + $0x438] sm:$0xff] %v268
                  %s270 = sadd.s32 1, %s187
                  %p271 = scmp.ge.s32.totalorder %s270, %s180
                  %s272 = scalar_select %p271, 0, %s270
                  %s273 = smul.u32 %s272, 64
                  %s274 = smul.u32 %s272, 64
                  %s275 = scalar_lea.vmem %s142, %s273
                  %s276 = scalar_lea.vmem %s134, %s274 [#allocation2]
                $region56: #{dqn_big2_forward.3} parent=50 // loop_footer
                  %s184 = sadd.s32 %s182, 1
                $region57: #{dqn_big2_forward.3} parent=50 // loop_footer_branch
                  %181 = sbr.rel target = $region53
                $region58: #{dqn_big2_forward.3} parent=50 // loop_exit
                  _
                %s277 = sshrl.u32 %s179, 3
                %s278 = sand.u32 %s179, 7
                %s279 = smul.u32 %s277, 8
                %s280 = smul.u32 8, %s279
                %s281 = scalar_lea.vmem %s142, %s280
                %s282 = smul.u32 8, %s279
                %s283 = scalar_lea.vmem %s134, %s282 [#allocation2]
                // While loop
                $region59: #{dqn_big2_forward.3} parent=50 // loop_pre_header
                  _
                $region60: #{dqn_big2_forward.3} parent=50 // loop_header
                  %s285 = sphi 0, %s287
                  %p286 = scmp.ge.s32.totalorder %s285, %s278
                  %s290 = sphi 0, %s305
                  %s291 = sphi %s281, %s308
                  %s292 = sphi %s283, %s309
                $region61: #{dqn_big2_forward.3} parent=50 // loop_header_branch
                  %289 = sbr.rel (%p286) target = $region65
                $region62: #{dqn_big2_forward.3} parent=50 // loop_body
                  %v293 = vld [vmem:[%s291] sm:$0xff]
                  %294 = vst [vmem:[%s292] sm:$0xff] %v293
                  %v295 = vld [vmem:[%s291 + $0x268] sm:$0xff]
                  %296 = vst [vmem:[%s292 + $0x100] sm:$0xff] %v295
                  %v297 = vld [vmem:[%s291 + $0x4d0] sm:$0xff]
                  %298 = vst [vmem:[%s292 + $0x200] sm:$0xff] %v297
                  %v299 = vld [vmem:[%s291 + $0x738] sm:$0xff]
                  %300 = vst [vmem:[%s292 + $0x300] sm:$0xff] %v299
                  %v301 = vld [vmem:[%s291 + $0x9a0] sm:$0xff]
                  %302 = vst [vmem:[%s292 + $0x400] sm:$0xff] %v301
                  %s303 = sadd.s32 1, %s290
                  %p304 = scmp.ge.s32.totalorder %s303, %s278
                  %s305 = scalar_select %p304, 0, %s303
                  %s306 = smul.u32 %s305, 8
                  %s307 = smul.u32 %s305, 8
                  %s308 = scalar_lea.vmem %s281, %s306
                  %s309 = scalar_lea.vmem %s283, %s307 [#allocation2]
                $region63: #{dqn_big2_forward.3} parent=50 // loop_footer
                  %s287 = sadd.s32 %s285, 1
                $region64: #{dqn_big2_forward.3} parent=50 // loop_footer_branch
                  %284 = sbr.rel target = $region60
                $region65: #{dqn_big2_forward.3} parent=50 // loop_exit
                  _
              $region51: #{dqn_big2_forward.3} parent=35 // pred_fallthru
                _
              %p310 = pneg %p175
              // Predicated region
              $region66: #{dqn_big2_forward.3} parent=35 // pred_check
                _
              $region67: #{dqn_big2_forward.3} parent=35 // pred_check_branch
                %312 = sbr.rel (%p175) target = $region69
              $region68: #{dqn_big2_forward.3} parent=35 // pred_region
                %s313 = sand.u32 %s143, 7
                %s314 = ssub.s32 %s143, %s313
                %s315 = scalar_lea.vmem %s142, %s314
                %s316 = ssub.s32 %s143, %s313
                %s317 = scalar_lea.vmem %s134, %s316 [#allocation2]
                %s318 = sshrl.u32 %s143, 3
                %s319 = sshrl.u32 %s318, 3
                // While loop
                $region70: #{dqn_big2_forward.3} parent=68 // loop_pre_header
                  _
                $region71: #{dqn_big2_forward.3} parent=68 // loop_header
                  %s321 = sphi 0, %s323
                  %p322 = scmp.ge.s32.totalorder %s321, %s319
                  %s326 = sphi 0, %s411
                  %s327 = sphi %s142, %s414
                  %s328 = sphi %s134, %s415
                $region72: #{dqn_big2_forward.3} parent=68 // loop_header_branch
                  %325 = sbr.rel (%p322) target = $region76
                $region73: #{dqn_big2_forward.3} parent=68 // loop_body
                  %v329 = vld [vmem:[%s327] sm:$0xff]
                  %330 = vst [vmem:[%s328] sm:$0xff] %v329
                  %v331 = vld [vmem:[%s327 + $0x8] sm:$0xff]
                  %332 = vst [vmem:[%s328 + $0x8] sm:$0xff] %v331
                  %v333 = vld [vmem:[%s327 + $0x10] sm:$0xff]
                  %334 = vst [vmem:[%s328 + $0x10] sm:$0xff] %v333
                  %v335 = vld [vmem:[%s327 + $0x18] sm:$0xff]
                  %336 = vst [vmem:[%s328 + $0x18] sm:$0xff] %v335
                  %v337 = vld [vmem:[%s327 + $0x20] sm:$0xff]
                  %338 = vst [vmem:[%s328 + $0x20] sm:$0xff] %v337
                  %v339 = vld [vmem:[%s327 + $0x28] sm:$0xff]
                  %340 = vst [vmem:[%s328 + $0x28] sm:$0xff] %v339
                  %v341 = vld [vmem:[%s327 + $0x30] sm:$0xff]
                  %342 = vst [vmem:[%s328 + $0x30] sm:$0xff] %v341
                  %v343 = vld [vmem:[%s327 + $0x38] sm:$0xff]
                  %344 = vst [vmem:[%s328 + $0x38] sm:$0xff] %v343
                  %v345 = vld [vmem:[%s327 + $0x268] sm:$0xff]
                  %346 = vst [vmem:[%s328 + $0x100] sm:$0xff] %v345
                  %v347 = vld [vmem:[%s327 + $0x270] sm:$0xff]
                  %348 = vst [vmem:[%s328 + $0x108] sm:$0xff] %v347
                  %v349 = vld [vmem:[%s327 + $0x278] sm:$0xff]
                  %350 = vst [vmem:[%s328 + $0x110] sm:$0xff] %v349
                  %v351 = vld [vmem:[%s327 + $0x280] sm:$0xff]
                  %352 = vst [vmem:[%s328 + $0x118] sm:$0xff] %v351
                  %v353 = vld [vmem:[%s327 + $0x288] sm:$0xff]
                  %354 = vst [vmem:[%s328 + $0x120] sm:$0xff] %v353
                  %v355 = vld [vmem:[%s327 + $0x290] sm:$0xff]
                  %356 = vst [vmem:[%s328 + $0x128] sm:$0xff] %v355
                  %v357 = vld [vmem:[%s327 + $0x298] sm:$0xff]
                  %358 = vst [vmem:[%s328 + $0x130] sm:$0xff] %v357
                  %v359 = vld [vmem:[%s327 + $0x2a0] sm:$0xff]
                  %360 = vst [vmem:[%s328 + $0x138] sm:$0xff] %v359
                  %v361 = vld [vmem:[%s327 + $0x4d0] sm:$0xff]
                  %362 = vst [vmem:[%s328 + $0x200] sm:$0xff] %v361
                  %v363 = vld [vmem:[%s327 + $0x4d8] sm:$0xff]
                  %364 = vst [vmem:[%s328 + $0x208] sm:$0xff] %v363
                  %v365 = vld [vmem:[%s327 + $0x4e0] sm:$0xff]
                  %366 = vst [vmem:[%s328 + $0x210] sm:$0xff] %v365
                  %v367 = vld [vmem:[%s327 + $0x4e8] sm:$0xff]
                  %368 = vst [vmem:[%s328 + $0x218] sm:$0xff] %v367
                  %v369 = vld [vmem:[%s327 + $0x4f0] sm:$0xff]
                  %370 = vst [vmem:[%s328 + $0x220] sm:$0xff] %v369
                  %v371 = vld [vmem:[%s327 + $0x4f8] sm:$0xff]
                  %372 = vst [vmem:[%s328 + $0x228] sm:$0xff] %v371
                  %v373 = vld [vmem:[%s327 + $0x500] sm:$0xff]
                  %374 = vst [vmem:[%s328 + $0x230] sm:$0xff] %v373
                  %v375 = vld [vmem:[%s327 + $0x508] sm:$0xff]
                  %376 = vst [vmem:[%s328 + $0x238] sm:$0xff] %v375
                  %v377 = vld [vmem:[%s327 + $0x738] sm:$0xff]
                  %378 = vst [vmem:[%s328 + $0x300] sm:$0xff] %v377
                  %v379 = vld [vmem:[%s327 + $0x740] sm:$0xff]
                  %380 = vst [vmem:[%s328 + $0x308] sm:$0xff] %v379
                  %v381 = vld [vmem:[%s327 + $0x748] sm:$0xff]
                  %382 = vst [vmem:[%s328 + $0x310] sm:$0xff] %v381
                  %v383 = vld [vmem:[%s327 + $0x750] sm:$0xff]
                  %384 = vst [vmem:[%s328 + $0x318] sm:$0xff] %v383
                  %v385 = vld [vmem:[%s327 + $0x758] sm:$0xff]
                  %386 = vst [vmem:[%s328 + $0x320] sm:$0xff] %v385
                  %v387 = vld [vmem:[%s327 + $0x760] sm:$0xff]
                  %388 = vst [vmem:[%s328 + $0x328] sm:$0xff] %v387
                  %v389 = vld [vmem:[%s327 + $0x768] sm:$0xff]
                  %390 = vst [vmem:[%s328 + $0x330] sm:$0xff] %v389
                  %v391 = vld [vmem:[%s327 + $0x770] sm:$0xff]
                  %392 = vst [vmem:[%s328 + $0x338] sm:$0xff] %v391
                  %v393 = vld [vmem:[%s327 + $0x9a0] sm:$0xff]
                  %394 = vst [vmem:[%s328 + $0x400] sm:$0xff] %v393
                  %v395 = vld [vmem:[%s327 + $0x9a8] sm:$0xff]
                  %396 = vst [vmem:[%s328 + $0x408] sm:$0xff] %v395
                  %v397 = vld [vmem:[%s327 + $0x9b0] sm:$0xff]
                  %398 = vst [vmem:[%s328 + $0x410] sm:$0xff] %v397
                  %v399 = vld [vmem:[%s327 + $0x9b8] sm:$0xff]
                  %400 = vst [vmem:[%s328 + $0x418] sm:$0xff] %v399
                  %v401 = vld [vmem:[%s327 + $0x9c0] sm:$0xff]
                  %402 = vst [vmem:[%s328 + $0x420] sm:$0xff] %v401
                  %v403 = vld [vmem:[%s327 + $0x9c8] sm:$0xff]
                  %404 = vst [vmem:[%s328 + $0x428] sm:$0xff] %v403
                  %v405 = vld [vmem:[%s327 + $0x9d0] sm:$0xff]
                  %406 = vst [vmem:[%s328 + $0x430] sm:$0xff] %v405
                  %v407 = vld [vmem:[%s327 + $0x9d8] sm:$0xff]
                  %408 = vst [vmem:[%s328 + $0x438] sm:$0xff] %v407
                  %s409 = sadd.s32 1, %s326
                  %p410 = scmp.ge.s32.totalorder %s409, %s319
                  %s411 = scalar_select %p410, 0, %s409
                  %s412 = smul.u32 %s411, 64
                  %s413 = smul.u32 %s411, 64
                  %s414 = scalar_lea.vmem %s142, %s412
                  %s415 = scalar_lea.vmem %s134, %s413 [#allocation2]
                $region74: #{dqn_big2_forward.3} parent=68 // loop_footer
                  %s323 = sadd.s32 %s321, 1
                $region75: #{dqn_big2_forward.3} parent=68 // loop_footer_branch
                  %320 = sbr.rel target = $region71
                $region76: #{dqn_big2_forward.3} parent=68 // loop_exit
                  _
                %s416 = sshrl.u32 %s318, 3
                %s417 = sand.u32 %s318, 7
                %s418 = smul.u32 %s416, 8
                %s419 = smul.u32 8, %s418
                %s420 = scalar_lea.vmem %s142, %s419
                %s421 = smul.u32 8, %s418
                %s422 = scalar_lea.vmem %s134, %s421 [#allocation2]
                // While loop
                $region77: #{dqn_big2_forward.3} parent=68 // loop_pre_header
                  _
                $region78: #{dqn_big2_forward.3} parent=68 // loop_header
                  %s424 = sphi 0, %s426
                  %p425 = scmp.ge.s32.totalorder %s424, %s417
                  %s429 = sphi 0, %s444
                  %s430 = sphi %s420, %s447
                  %s431 = sphi %s422, %s448
                $region79: #{dqn_big2_forward.3} parent=68 // loop_header_branch
                  %428 = sbr.rel (%p425) target = $region83
                $region80: #{dqn_big2_forward.3} parent=68 // loop_body
                  %v432 = vld [vmem:[%s430] sm:$0xff]
                  %433 = vst [vmem:[%s431] sm:$0xff] %v432
                  %v434 = vld [vmem:[%s430 + $0x268] sm:$0xff]
                  %435 = vst [vmem:[%s431 + $0x100] sm:$0xff] %v434
                  %v436 = vld [vmem:[%s430 + $0x4d0] sm:$0xff]
                  %437 = vst [vmem:[%s431 + $0x200] sm:$0xff] %v436
                  %v438 = vld [vmem:[%s430 + $0x738] sm:$0xff]
                  %439 = vst [vmem:[%s431 + $0x300] sm:$0xff] %v438
                  %v440 = vld [vmem:[%s430 + $0x9a0] sm:$0xff]
                  %441 = vst [vmem:[%s431 + $0x400] sm:$0xff] %v440
                  %s442 = sadd.s32 1, %s429
                  %p443 = scmp.ge.s32.totalorder %s442, %s417
                  %s444 = scalar_select %p443, 0, %s442
                  %s445 = smul.u32 %s444, 8
                  %s446 = smul.u32 %s444, 8
                  %s447 = scalar_lea.vmem %s420, %s445
                  %s448 = scalar_lea.vmem %s422, %s446 [#allocation2]
                $region81: #{dqn_big2_forward.3} parent=68 // loop_footer
                  %s426 = sadd.s32 %s424, 1
                $region82: #{dqn_big2_forward.3} parent=68 // loop_footer_branch
                  %423 = sbr.rel target = $region78
                $region83: #{dqn_big2_forward.3} parent=68 // loop_exit
                  _
                %s449 = sshll.u32 1, %s313
                %s450 = ssub.s32 %s449, 1
                loop: start=0, step=1, limit=1
                $region84: #{dqn_big2_forward.3} parent=68 // loop_pre_header
                  _
                $region85: #{dqn_big2_forward.3} parent=68 // loop_header
                  %s452 = sphi 0, %s456
                  %p453 = scmp.ge.s32.totalorder %s452, 1
                  %s457 = sphi %s315, %s315
                  %s458 = sphi %s317, %s317
                $region86: #{dqn_big2_forward.3} parent=68 // loop_header_branch
                  %455 = sbr.rel (%p453) target = $region90
                $region87: #{dqn_big2_forward.3} parent=68 // loop_body
                  %v459 = vld [vmem:[%s457] sm:%s450]
                  %460 = vst [vmem:[%s458] sm:%s450] %v459
                  %v461 = vld [vmem:[%s457 + $0x268] sm:%s450]
                  %462 = vst [vmem:[%s458 + $0x100] sm:%s450] %v461
                  %v463 = vld [vmem:[%s457 + $0x4d0] sm:%s450]
                  %464 = vst [vmem:[%s458 + $0x200] sm:%s450] %v463
                  %v465 = vld [vmem:[%s457 + $0x738] sm:%s450]
                  %466 = vst [vmem:[%s458 + $0x300] sm:%s450] %v465
                  %v467 = vld [vmem:[%s457 + $0x9a0] sm:%s450]
                  %468 = vst [vmem:[%s458 + $0x400] sm:%s450] %v467
                $region88: #{dqn_big2_forward.3} parent=68 // loop_footer
                  %s456 = sadd.s32 1, %s452
                $region89: #{dqn_big2_forward.3} parent=68 // loop_footer_branch
                  %451 = sbr.rel target = $region85
                $region90: #{dqn_big2_forward.3} parent=68 // loop_exit
                  _
              $region69: #{dqn_big2_forward.3} parent=35 // pred_fallthru
                _
            $region36: #{dqn_big2_forward.3} parent=31 // pred_fallthru
              _
            // Predicated region
            $region37: #{dqn_big2_forward.3} parent=31 // pred_check
              %p151 = pneg %p147
            $region38: #{dqn_big2_forward.3} parent=31 // pred_check_branch
              %153 = sbr.rel (%p151) target = $region40
            $region39: #{dqn_big2_forward.3} parent=31 // pred_region
              %s154 = sshll.u32 1, %s143
              %s155 = ssub.s32 %s154, 1
              loop: start=0, step=1, limit=1
              $region41: #{dqn_big2_forward.3} parent=39 // loop_pre_header
                _
              $region42: #{dqn_big2_forward.3} parent=39 // loop_header
                %s157 = sphi 0, %s161
                %p158 = scmp.ge.s32.totalorder %s157, 1
                %s162 = sphi %s142, %s142
                %s163 = sphi %s134, %s134
              $region43: #{dqn_big2_forward.3} parent=39 // loop_header_branch
                %160 = sbr.rel (%p158) target = $region47
              $region44: #{dqn_big2_forward.3} parent=39 // loop_body
                %v164 = vld [vmem:[%s162] sm:%s155]
                %165 = vst [vmem:[%s163] sm:%s155] %v164
                %v166 = vld [vmem:[%s162 + $0x268] sm:%s155]
                %167 = vst [vmem:[%s163 + $0x100] sm:%s155] %v166
                %v168 = vld [vmem:[%s162 + $0x4d0] sm:%s155]
                %169 = vst [vmem:[%s163 + $0x200] sm:%s155] %v168
                %v170 = vld [vmem:[%s162 + $0x738] sm:%s155]
                %171 = vst [vmem:[%s163 + $0x300] sm:%s155] %v170
                %v172 = vld [vmem:[%s162 + $0x9a0] sm:%s155]
                %173 = vst [vmem:[%s163 + $0x400] sm:%s155] %v172
              $region45: #{dqn_big2_forward.3} parent=39 // loop_footer
                %s161 = sadd.s32 1, %s157
              $region46: #{dqn_big2_forward.3} parent=39 // loop_footer_branch
                %156 = sbr.rel target = $region42
              $region47: #{dqn_big2_forward.3} parent=39 // loop_exit
                _
            $region40: #{dqn_big2_forward.3} parent=31 // pred_fallthru
              _
          $region32: #{dqn_big2_forward.3} parent=27 // pred_fallthru
            _
          %469 = vnop
        $region28: #{dqn_big2_forward.3} parent=23 // pred_fallthru
          _
      $region24: #{dqn_big2_forward.3} parent=5 // pred_fallthru
        _
      %p470 = scmp.le.s32.totalorder 1, %s9
      %p471 = scmp.lt.s32.totalorder %s9, 4
      %p472 = pnand %p470, %p471
      %p473 = pneg %p472
      // Predicated region
      $region91: #{dqn_big2_forward.3} parent=5 // pred_check
        _
      $region92: #{dqn_big2_forward.3} parent=5 // pred_check_branch
        %475 = sbr.rel (%p472) target = $region94
      $region93: #{dqn_big2_forward.3} parent=5 // pred_region
        %s476 = ssub.s32 %s9, 1
        %s477 = sand.u32 %s43, 1
        %s478 = sand.u32 %s43, 1
        %s479 = smul.addr %s478, 1280
        %s480 = scalar_lea.vmem [#allocation2], %s479
        // Predicated region
        $region95: #{dqn_big2_forward.3} parent=93 // pred_check
          %p481 = pneg %p56
        $region96: #{dqn_big2_forward.3} parent=93 // pred_check_branch
          %483 = sbr.rel (%p481) target = $region98
        $region97: #{dqn_big2_forward.3} parent=93 // pred_region
          _
        $region98: #{dqn_big2_forward.3} parent=93 // pred_fallthru
          _
        %p484 = pneg %p30
        %p485 = pneg %p27
        %s486 = sand.u32 %s43, 1
        %s487 = sand.u32 %s43, 1
        %s488 = smul.addr %s487, 1280
        %s489 = scalar_lea.vmem [#allocation2], %s488
        %p490 = pneg %p56
        %p491 = pneg %p53
        %p492 = pneg %p77
        %p493 = pneg %p74
        %p494 = pneg %p103
        %p495 = pneg %p100
        %s496 = sand.u32 %s90, 1
        %s497 = sand.u32 %s90, 1
        %s498 = smul.addr %s497, 256
        %s499 = scalar_lea.vmem [#allocation3], %s498
        %s500 = smul.u32 32, %s14
        %s501 = ssub.s32 77, %s500
        %p502 = scmp.lt.s32.totalorder %s501, 32
        %s503 = scalar_select %p502, %s501, 32
        %s504 = smul.u32 40, %s503
        %s505 = smul.u32 32, %s14
        %s506 = ssub.s32 77, %s505
        %p507 = scmp.lt.s32.totalorder %s506, 32
        %s508 = scalar_select %p507, %s506, 32
        %s509 = smul.u32 8, %s508
        %v510 = vld [vmem:[%s0] sm:$0xff]
        %v511 = vld [vmem:[%s480] sm:$0xff]
        %v512 = vld [vmem:[%s480 + $0x8] sm:$0xff]
        %v513 = vld [vmem:[%s480 + $0x10] sm:$0xff]
        %v514 = vld [vmem:[%s480 + $0x18] sm:$0xff]
        %v515 = vld [vmem:[%s480 + $0x20] sm:$0xff]
        %v516 = vld [vmem:[%s480 + $0x28] sm:$0xff]
        %v517 = vld [vmem:[%s480 + $0x30] sm:$0xff]
        %v518 = vld [vmem:[%s480 + $0x38] sm:$0xff]
        %v519 = vld [vmem:[%s480 + $0x40] sm:$0xff]
        %v520 = vld [vmem:[%s480 + $0x48] sm:$0xff]
        %v521 = vld [vmem:[%s480 + $0x50] sm:$0xff]
        %v522 = vld [vmem:[%s480 + $0x58] sm:$0xff]
        %v523 = vld [vmem:[%s480 + $0x60] sm:$0xff]
        %v524 = vld [vmem:[%s480 + $0x68] sm:$0xff]
        %v525 = vld [vmem:[%s480 + $0x70] sm:$0xff]
        %v526 = vld [vmem:[%s480 + $0x78] sm:$0xff]
        %v527 = vld [vmem:[%s480 + $0x80] sm:$0xff]
        %v528 = vld [vmem:[%s480 + $0x88] sm:$0xff]
        %v529 = vld [vmem:[%s480 + $0x90] sm:$0xff]
        %v530 = vld [vmem:[%s480 + $0x98] sm:$0xff]
        %v531 = vld [vmem:[%s480 + $0xa0] sm:$0xff]
        %v532 = vld [vmem:[%s480 + $0xa8] sm:$0xff]
        %v533 = vld [vmem:[%s480 + $0xb0] sm:$0xff]
        %v534 = vld [vmem:[%s480 + $0xb8] sm:$0xff]
        %v535 = vld [vmem:[%s480 + $0xc0] sm:$0xff]
        %v536 = vld [vmem:[%s480 + $0xc8] sm:$0xff]
        %v537 = vld [vmem:[%s480 + $0xd0] sm:$0xff]
        %v538 = vld [vmem:[%s480 + $0xd8] sm:$0xff]
        %v539 = vld [vmem:[%s480 + $0xe0] sm:$0xff]
        %v540 = vld [vmem:[%s480 + $0xe8] sm:$0xff]
        %v541 = vld [vmem:[%s480 + $0xf0] sm:$0xff]
        %v542 = vld [vmem:[%s480 + $0xf8] sm:$0xff]
        %v543 = vld [vmem:[%s480 + $0x100] sm:$0xff]
        %v544 = vld [vmem:[%s480 + $0x108] sm:$0xff]
        %v545 = vld [vmem:[%s480 + $0x110] sm:$0xff]
        %v546 = vld [vmem:[%s480 + $0x118] sm:$0xff]
        %v547 = vld [vmem:[%s480 + $0x120] sm:$0xff]
        %v548 = vld [vmem:[%s480 + $0x128] sm:$0xff]
        %v549 = vld [vmem:[%s480 + $0x130] sm:$0xff]
        %v550 = vld [vmem:[%s480 + $0x138] sm:$0xff]
        %v551 = vld [vmem:[%s480 + $0x140] sm:$0xff]
        %v552 = vld [vmem:[%s480 + $0x148] sm:$0xff]
        %v553 = vld [vmem:[%s480 + $0x150] sm:$0xff]
        %v554 = vld [vmem:[%s480 + $0x158] sm:$0xff]
        %v555 = vld [vmem:[%s480 + $0x160] sm:$0xff]
        %v556 = vld [vmem:[%s480 + $0x168] sm:$0xff]
        %v557 = vld [vmem:[%s480 + $0x170] sm:$0xff]
        %v558 = vld [vmem:[%s480 + $0x178] sm:$0xff]
        %v559 = vld [vmem:[%s480 + $0x180] sm:$0xff]
        %v560 = vld [vmem:[%s480 + $0x188] sm:$0xff]
        %v561 = vld [vmem:[%s480 + $0x190] sm:$0xff]
        %v562 = vld [vmem:[%s480 + $0x198] sm:$0xff]
        %v563 = vld [vmem:[%s480 + $0x1a0] sm:$0xff]
        %v564 = vld [vmem:[%s480 + $0x1a8] sm:$0xff]
        %v565 = vld [vmem:[%s480 + $0x1b0] sm:$0xff]
        %v566 = vld [vmem:[%s480 + $0x1b8] sm:$0xff]
        %v567 = vld [vmem:[%s480 + $0x1c0] sm:$0xff]
        %v568 = vld [vmem:[%s480 + $0x1c8] sm:$0xff]
        %v569 = vld [vmem:[%s480 + $0x1d0] sm:$0xff]
        %v570 = vld [vmem:[%s480 + $0x1d8] sm:$0xff]
        %v571 = vld [vmem:[%s480 + $0x1e0] sm:$0xff]
        %v572 = vld [vmem:[%s480 + $0x1e8] sm:$0xff]
        %v573 = vld [vmem:[%s480 + $0x1f0] sm:$0xff]
        %v574 = vld [vmem:[%s480 + $0x1f8] sm:$0xff]
        %v575 = vld [vmem:[%s480 + $0x200] sm:$0xff]
        %v576 = vld [vmem:[%s480 + $0x208] sm:$0xff]
        %v577 = vld [vmem:[%s480 + $0x210] sm:$0xff]
        %v578 = vld [vmem:[%s480 + $0x218] sm:$0xff]
        %v579 = vld [vmem:[%s480 + $0x220] sm:$0xff]
        %v580 = vld [vmem:[%s480 + $0x228] sm:$0xff]
        %v581 = vld [vmem:[%s480 + $0x230] sm:$0xff]
        %v582 = vld [vmem:[%s480 + $0x238] sm:$0xff]
        %v583 = vld [vmem:[%s480 + $0x240] sm:$0xff]
        %v584 = vld [vmem:[%s480 + $0x248] sm:$0xff]
        %v585 = vld [vmem:[%s480 + $0x250] sm:$0xff]
        %v586 = vld [vmem:[%s480 + $0x258] sm:$0xff]
        %v587 = vld [vmem:[%s480 + $0x260] sm:$0xff]
        %v588 = vld [vmem:[%s480 + $0x268] sm:$0xff]
        %v589 = vld [vmem:[%s480 + $0x270] sm:$0xff]
        %v590 = vld [vmem:[%s480 + $0x278] sm:$0xff]
        %v591 = vld [vmem:[%s480 + $0x280] sm:$0xff]
        %v592 = vld [vmem:[%s480 + $0x288] sm:$0xff]
        %v593 = vld [vmem:[%s480 + $0x290] sm:$0xff]
        %v594 = vld [vmem:[%s480 + $0x298] sm:$0xff]
        %v595 = vld [vmem:[%s480 + $0x2a0] sm:$0xff]
        %v596 = vld [vmem:[%s480 + $0x2a8] sm:$0xff]
        %v597 = vld [vmem:[%s480 + $0x2b0] sm:$0xff]
        %v598 = vld [vmem:[%s480 + $0x2b8] sm:$0xff]
        %v599 = vld [vmem:[%s480 + $0x2c0] sm:$0xff]
        %v600 = vld [vmem:[%s480 + $0x2c8] sm:$0xff]
        %v601 = vld [vmem:[%s480 + $0x2d0] sm:$0xff]
        %v602 = vld [vmem:[%s480 + $0x2d8] sm:$0xff]
        %v603 = vld [vmem:[%s480 + $0x2e0] sm:$0xff]
        %v604 = vld [vmem:[%s480 + $0x2e8] sm:$0xff]
        %v605 = vld [vmem:[%s480 + $0x2f0] sm:$0xff]
        %v606 = vld [vmem:[%s480 + $0x2f8] sm:$0xff]
        %v607 = vld [vmem:[%s480 + $0x300] sm:$0xff]
        %v608 = vld [vmem:[%s480 + $0x308] sm:$0xff]
        %v609 = vld [vmem:[%s480 + $0x310] sm:$0xff]
        %v610 = vld [vmem:[%s480 + $0x318] sm:$0xff]
        %v611 = vld [vmem:[%s480 + $0x320] sm:$0xff]
        %v612 = vld [vmem:[%s480 + $0x328] sm:$0xff]
        %v613 = vld [vmem:[%s480 + $0x330] sm:$0xff]
        %v614 = vld [vmem:[%s480 + $0x338] sm:$0xff]
        %v615 = vld [vmem:[%s480 + $0x340] sm:$0xff]
        %v616 = vld [vmem:[%s480 + $0x348] sm:$0xff]
        %v617 = vld [vmem:[%s480 + $0x350] sm:$0xff]
        %v618 = vld [vmem:[%s480 + $0x358] sm:$0xff]
        %v619 = vld [vmem:[%s480 + $0x360] sm:$0xff]
        %v620 = vld [vmem:[%s480 + $0x368] sm:$0xff]
        %v621 = vld [vmem:[%s480 + $0x370] sm:$0xff]
        %v622 = vld [vmem:[%s480 + $0x378] sm:$0xff]
        %v623 = vld [vmem:[%s480 + $0x380] sm:$0xff]
        %v624 = vld [vmem:[%s480 + $0x388] sm:$0xff]
        %v625 = vld [vmem:[%s480 + $0x390] sm:$0xff]
        %v626 = vld [vmem:[%s480 + $0x398] sm:$0xff]
        %v627 = vld [vmem:[%s480 + $0x3a0] sm:$0xff]
        %v628 = vld [vmem:[%s480 + $0x3a8] sm:$0xff]
        %v629 = vld [vmem:[%s480 + $0x3b0] sm:$0xff]
        %v630 = vld [vmem:[%s480 + $0x3b8] sm:$0xff]
        %v631 = vld [vmem:[%s480 + $0x3c0] sm:$0xff]
        %v632 = vld [vmem:[%s480 + $0x3c8] sm:$0xff]
        %v633 = vld [vmem:[%s480 + $0x3d0] sm:$0xff]
        %v634 = vld [vmem:[%s480 + $0x3d8] sm:$0xff]
        %v635 = vld [vmem:[%s480 + $0x3e0] sm:$0xff]
        %v636 = vld [vmem:[%s480 + $0x3e8] sm:$0xff]
        %v637 = vld [vmem:[%s480 + $0x3f0] sm:$0xff]
        %v638 = vld [vmem:[%s480 + $0x3f8] sm:$0xff]
        %v639 = vld [vmem:[%s480 + $0x400] sm:$0xf]
        %v640 = vld [vmem:[%s480 + $0x408] sm:$0xf]
        %v641 = vld [vmem:[%s480 + $0x410] sm:$0xf]
        %v642 = vld [vmem:[%s480 + $0x418] sm:$0xf]
        %v643 = vld [vmem:[%s480 + $0x420] sm:$0xf]
        %v644 = vld [vmem:[%s480 + $0x428] sm:$0xf]
        %v645 = vld [vmem:[%s480 + $0x430] sm:$0xf]
        %v646 = vld [vmem:[%s480 + $0x438] sm:$0xf]
        %v647 = vld [vmem:[%s480 + $0x440] sm:$0xf]
        %v648 = vld [vmem:[%s480 + $0x448] sm:$0xf]
        %v649 = vld [vmem:[%s480 + $0x450] sm:$0xf]
        %v650 = vld [vmem:[%s480 + $0x458] sm:$0xf]
        %v651 = vld [vmem:[%s480 + $0x460] sm:$0xf]
        %v652 = vld [vmem:[%s480 + $0x468] sm:$0xf]
        %v653 = vld [vmem:[%s480 + $0x470] sm:$0xf]
        %v654 = vld [vmem:[%s480 + $0x478] sm:$0xf]
        %v655 = vld [vmem:[%s480 + $0x480] sm:$0xf]
        %v656 = vld [vmem:[%s480 + $0x488] sm:$0xf]
        %v657 = vld [vmem:[%s480 + $0x490] sm:$0xf]
        %v658 = vld [vmem:[%s480 + $0x498] sm:$0xf]
        %v659 = vld [vmem:[%s480 + $0x4a0] sm:$0xf]
        %v660 = vld [vmem:[%s480 + $0x4a8] sm:$0xf]
        %v661 = vld [vmem:[%s480 + $0x4b0] sm:$0xf]
        %v662 = vld [vmem:[%s480 + $0x4b8] sm:$0xf]
        %v663 = vld [vmem:[%s480 + $0x4c0] sm:$0xf]
        %v664 = vld [vmem:[%s480 + $0x4c8] sm:$0xf]
        %v665 = vld [vmem:[%s480 + $0x4d0] sm:$0xf]
        %v666 = vld [vmem:[%s480 + $0x4d8] sm:$0xf]
        %v667 = vld [vmem:[%s480 + $0x4e0] sm:$0xf]
        %v668 = vld [vmem:[%s480 + $0x4e8] sm:$0xf]
        %v669 = vld [vmem:[%s480 + $0x4f0] sm:$0xf]
        %v670 = vld [vmem:[%s480 + $0x4f8] sm:$0xf]
        %v671 = vld [vmem:[%s2] sm:$0xff]
        %673 = vset.pattern.permute.xlu0 0
        %674 = vperm.xlu0 %673, %v671
        %v675 = vpop.permute.xlu0 %674
        %vm677 = vcmask 293888
        %v679 = vsel %vm677, %v510, 0
        %vm681 = vcmask 1043456
        %v683 = vsel %vm681, %v639, 0
        %v686 = vsel %vm681, %v640, 0
        %v689 = vsel %vm681, %v641, 0
        %v692 = vsel %vm681, %v642, 0
        %v695 = vsel %vm681, %v643, 0
        %v698 = vsel %vm681, %v644, 0
        %v701 = vsel %vm681, %v645, 0
        %v704 = vsel %vm681, %v646, 0
        %v707 = vsel %vm681, %v647, 0
        %v710 = vsel %vm681, %v648, 0
        %v713 = vsel %vm681, %v649, 0
        %v716 = vsel %vm681, %v650, 0
        %v719 = vsel %vm681, %v651, 0
        %v722 = vsel %vm681, %v652, 0
        %v725 = vsel %vm681, %v653, 0
        %v728 = vsel %vm681, %v654, 0
        %v731 = vsel %vm681, %v655, 0
        %v734 = vsel %vm681, %v656, 0
        %v737 = vsel %vm681, %v657, 0
        %v740 = vsel %vm681, %v658, 0
        %v743 = vsel %vm681, %v659, 0
        %v746 = vsel %vm681, %v660, 0
        %v749 = vsel %vm681, %v661, 0
        %v752 = vsel %vm681, %v662, 0
        %v755 = vsel %vm681, %v663, 0
        %v758 = vsel %vm681, %v664, 0
        %v761 = vsel %vm681, %v665, 0
        %v764 = vsel %vm681, %v666, 0
        %v767 = vsel %vm681, %v667, 0
        %v770 = vsel %vm681, %v668, 0
        %v773 = vsel %vm681, %v669, 0
        %v776 = vsel %vm681, %v670, 0
        %778 = vmatpush.msra.mxu0 0.0
        %779 = vmatpush.msra.mxu0 0.0
        %780 = vmatpush.msra.mxu0 0.0
        %781 = vmatpush.msra.mxu0 0.0
        %782 = vmatpush.msra.mxu0 0.0
        %783 = vmatpush.msra.mxu0 0.0
        %784 = vmatpush.msra.mxu0 0.0
        %785 = vmatpush.msra.mxu0 0.0
        %786 = vmatpush.msra.mxu0 0.0
        %787 = vmatpush.msra.mxu0 0.0
        %788 = vmatpush.msra.mxu0 0.0
        %789 = vmatpush.msra.mxu0 %v683
        %790 = vmatpush.msra.mxu0 %v607
        %791 = vmatpush.msra.mxu0 %v575
        %792 = vmatpush.msra.mxu0 %v543
        %793 = vmatpush.msra.mxu0 %v511
        %794 = vmatmul.f32.gmra.mxu0 %v679
        %v795 = vpop.f32.mrf.mxu0
        %v796 = vadd.f32 %v675, %v795
        %797 = vdwg.mxu0
        %798 = vmatpush.msra.mxu0 0.0
        %799 = vmatpush.msra.mxu0 0.0
        %800 = vmatpush.msra.mxu0 0.0
        %801 = vmatpush.msra.mxu0 0.0
        %802 = vmatpush.msra.mxu0 0.0
        %803 = vmatpush.msra.mxu0 0.0
        %804 = vmatpush.msra.mxu0 0.0
        %805 = vmatpush.msra.mxu0 0.0
        %806 = vmatpush.msra.mxu0 0.0
        %807 = vmatpush.msra.mxu0 0.0
        %808 = vmatpush.msra.mxu0 0.0
        %809 = vmatpush.msra.mxu0 %v686
        %810 = vmatpush.msra.mxu0 %v608
        %811 = vmatpush.msra.mxu0 %v576
        %812 = vmatpush.msra.mxu0 %v544
        %813 = vmatpush.msra.mxu0 %v512
        %814 = vmatmul.f32.gmra.mxu0 %v679
        %v815 = vpop.f32.mrf.mxu0
        %v816 = vadd.f32 %v675, %v815
        %817 = vdwg.mxu0
        %818 = vmatpush.msra.mxu0 0.0
        %819 = vmatpush.msra.mxu0 0.0
        %820 = vmatpush.msra.mxu0 0.0
        %821 = vmatpush.msra.mxu0 0.0
        %822 = vmatpush.msra.mxu0 0.0
        %823 = vmatpush.msra.mxu0 0.0
        %824 = vmatpush.msra.mxu0 0.0
        %825 = vmatpush.msra.mxu0 0.0
        %826 = vmatpush.msra.mxu0 0.0
        %827 = vmatpush.msra.mxu0 0.0
        %828 = vmatpush.msra.mxu0 0.0
        %829 = vmatpush.msra.mxu0 %v689
        %830 = vmatpush.msra.mxu0 %v609
        %831 = vmatpush.msra.mxu0 %v577
        %832 = vmatpush.msra.mxu0 %v545
        %833 = vmatpush.msra.mxu0 %v513
        %834 = vmatmul.f32.gmra.mxu0 %v679
        %v835 = vpop.f32.mrf.mxu0
        %v836 = vadd.f32 %v675, %v835
        %837 = vdwg.mxu0
        %838 = vmatpush.msra.mxu0 0.0
        %839 = vmatpush.msra.mxu0 0.0
        %840 = vmatpush.msra.mxu0 0.0
        %841 = vmatpush.msra.mxu0 0.0
        %842 = vmatpush.msra.mxu0 0.0
        %843 = vmatpush.msra.mxu0 0.0
        %844 = vmatpush.msra.mxu0 0.0
        %845 = vmatpush.msra.mxu0 0.0
        %846 = vmatpush.msra.mxu0 0.0
        %847 = vmatpush.msra.mxu0 0.0
        %848 = vmatpush.msra.mxu0 0.0
        %849 = vmatpush.msra.mxu0 %v692
        %850 = vmatpush.msra.mxu0 %v610
        %851 = vmatpush.msra.mxu0 %v578
        %852 = vmatpush.msra.mxu0 %v546
        %853 = vmatpush.msra.mxu0 %v514
        %854 = vmatmul.f32.gmra.mxu0 %v679
        %v855 = vpop.f32.mrf.mxu0
        %v856 = vadd.f32 %v675, %v855
        %857 = vdwg.mxu0
        %858 = vmatpush.msra.mxu0 0.0
        %859 = vmatpush.msra.mxu0 0.0
        %860 = vmatpush.msra.mxu0 0.0
        %861 = vmatpush.msra.mxu0 0.0
        %862 = vmatpush.msra.mxu0 0.0
        %863 = vmatpush.msra.mxu0 0.0
        %864 = vmatpush.msra.mxu0 0.0
        %865 = vmatpush.msra.mxu0 0.0
        %866 = vmatpush.msra.mxu0 0.0
        %867 = vmatpush.msra.mxu0 0.0
        %868 = vmatpush.msra.mxu0 0.0
        %869 = vmatpush.msra.mxu0 %v695
        %870 = vmatpush.msra.mxu0 %v611
        %871 = vmatpush.msra.mxu0 %v579
        %872 = vmatpush.msra.mxu0 %v547
        %873 = vmatpush.msra.mxu0 %v515
        %874 = vmatmul.f32.gmra.mxu0 %v679
        %v875 = vpop.f32.mrf.mxu0
        %v876 = vadd.f32 %v675, %v875
        %877 = vdwg.mxu0
        %878 = vmatpush.msra.mxu0 0.0
        %879 = vmatpush.msra.mxu0 0.0
        %880 = vmatpush.msra.mxu0 0.0
        %881 = vmatpush.msra.mxu0 0.0
        %882 = vmatpush.msra.mxu0 0.0
        %883 = vmatpush.msra.mxu0 0.0
        %884 = vmatpush.msra.mxu0 0.0
        %885 = vmatpush.msra.mxu0 0.0
        %886 = vmatpush.msra.mxu0 0.0
        %887 = vmatpush.msra.mxu0 0.0
        %888 = vmatpush.msra.mxu0 0.0
        %889 = vmatpush.msra.mxu0 %v698
        %890 = vmatpush.msra.mxu0 %v612
        %891 = vmatpush.msra.mxu0 %v580
        %892 = vmatpush.msra.mxu0 %v548
        %893 = vmatpush.msra.mxu0 %v516
        %894 = vmatmul.f32.gmra.mxu0 %v679
        %v895 = vpop.f32.mrf.mxu0
        %v896 = vadd.f32 %v675, %v895
        %897 = vdwg.mxu0
        %898 = vmatpush.msra.mxu0 0.0
        %899 = vmatpush.msra.mxu0 0.0
        %900 = vmatpush.msra.mxu0 0.0
        %901 = vmatpush.msra.mxu0 0.0
        %902 = vmatpush.msra.mxu0 0.0
        %903 = vmatpush.msra.mxu0 0.0
        %904 = vmatpush.msra.mxu0 0.0
        %905 = vmatpush.msra.mxu0 0.0
        %906 = vmatpush.msra.mxu0 0.0
        %907 = vmatpush.msra.mxu0 0.0
        %908 = vmatpush.msra.mxu0 0.0
        %909 = vmatpush.msra.mxu0 %v701
        %910 = vmatpush.msra.mxu0 %v613
        %911 = vmatpush.msra.mxu0 %v581
        %912 = vmatpush.msra.mxu0 %v549
        %913 = vmatpush.msra.mxu0 %v517
        %914 = vmatmul.f32.gmra.mxu0 %v679
        %v915 = vpop.f32.mrf.mxu0
        %v916 = vadd.f32 %v675, %v915
        %917 = vdwg.mxu0
        %918 = vmatpush.msra.mxu0 0.0
        %919 = vmatpush.msra.mxu0 0.0
        %920 = vmatpush.msra.mxu0 0.0
        %921 = vmatpush.msra.mxu0 0.0
        %922 = vmatpush.msra.mxu0 0.0
        %923 = vmatpush.msra.mxu0 0.0
        %924 = vmatpush.msra.mxu0 0.0
        %925 = vmatpush.msra.mxu0 0.0
        %926 = vmatpush.msra.mxu0 0.0
        %927 = vmatpush.msra.mxu0 0.0
        %928 = vmatpush.msra.mxu0 0.0
        %929 = vmatpush.msra.mxu0 %v704
        %930 = vmatpush.msra.mxu0 %v614
        %931 = vmatpush.msra.mxu0 %v582
        %932 = vmatpush.msra.mxu0 %v550
        %933 = vmatpush.msra.mxu0 %v518
        %934 = vmatmul.f32.gmra.mxu0 %v679
        %v935 = vpop.f32.mrf.mxu0
        %v936 = vadd.f32 %v675, %v935
        %937 = vdwg.mxu0
        %938 = vmatpush.msra.mxu0 0.0
        %939 = vmatpush.msra.mxu0 0.0
        %940 = vmatpush.msra.mxu0 0.0
        %941 = vmatpush.msra.mxu0 0.0
        %942 = vmatpush.msra.mxu0 0.0
        %943 = vmatpush.msra.mxu0 0.0
        %944 = vmatpush.msra.mxu0 0.0
        %945 = vmatpush.msra.mxu0 0.0
        %946 = vmatpush.msra.mxu0 0.0
        %947 = vmatpush.msra.mxu0 0.0
        %948 = vmatpush.msra.mxu0 0.0
        %949 = vmatpush.msra.mxu0 %v707
        %950 = vmatpush.msra.mxu0 %v615
        %951 = vmatpush.msra.mxu0 %v583
        %952 = vmatpush.msra.mxu0 %v551
        %953 = vmatpush.msra.mxu0 %v519
        %954 = vmatmul.f32.gmra.mxu0 %v679
        %v955 = vpop.f32.mrf.mxu0
        %v956 = vadd.f32 %v675, %v955
        %957 = vdwg.mxu0
        %958 = vmatpush.msra.mxu0 0.0
        %959 = vmatpush.msra.mxu0 0.0
        %960 = vmatpush.msra.mxu0 0.0
        %961 = vmatpush.msra.mxu0 0.0
        %962 = vmatpush.msra.mxu0 0.0
        %963 = vmatpush.msra.mxu0 0.0
        %964 = vmatpush.msra.mxu0 0.0
        %965 = vmatpush.msra.mxu0 0.0
        %966 = vmatpush.msra.mxu0 0.0
        %967 = vmatpush.msra.mxu0 0.0
        %968 = vmatpush.msra.mxu0 0.0
        %969 = vmatpush.msra.mxu0 %v710
        %970 = vmatpush.msra.mxu0 %v616
        %971 = vmatpush.msra.mxu0 %v584
        %972 = vmatpush.msra.mxu0 %v552
        %973 = vmatpush.msra.mxu0 %v520
        %974 = vmatmul.f32.gmra.mxu0 %v679
        %v975 = vpop.f32.mrf.mxu0
        %v976 = vadd.f32 %v675, %v975
        %977 = vdwg.mxu0
        %978 = vmatpush.msra.mxu0 0.0
        %979 = vmatpush.msra.mxu0 0.0
        %980 = vmatpush.msra.mxu0 0.0
        %981 = vmatpush.msra.mxu0 0.0
        %982 = vmatpush.msra.mxu0 0.0
        %983 = vmatpush.msra.mxu0 0.0
        %984 = vmatpush.msra.mxu0 0.0
        %985 = vmatpush.msra.mxu0 0.0
        %986 = vmatpush.msra.mxu0 0.0
        %987 = vmatpush.msra.mxu0 0.0
        %988 = vmatpush.msra.mxu0 0.0
        %989 = vmatpush.msra.mxu0 %v713
        %990 = vmatpush.msra.mxu0 %v617
        %991 = vmatpush.msra.mxu0 %v585
        %992 = vmatpush.msra.mxu0 %v553
        %993 = vmatpush.msra.mxu0 %v521
        %994 = vmatmul.f32.gmra.mxu0 %v679
        %v995 = vpop.f32.mrf.mxu0
        %v996 = vadd.f32 %v675, %v995
        %997 = vdwg.mxu0
        %998 = vmatpush.msra.mxu0 0.0
        %999 = vmatpush.msra.mxu0 0.0
        %1000 = vmatpush.msra.mxu0 0.0
        %1001 = vmatpush.msra.mxu0 0.0
        %1002 = vmatpush.msra.mxu0 0.0
        %1003 = vmatpush.msra.mxu0 0.0
        %1004 = vmatpush.msra.mxu0 0.0
        %1005 = vmatpush.msra.mxu0 0.0
        %1006 = vmatpush.msra.mxu0 0.0
        %1007 = vmatpush.msra.mxu0 0.0
        %1008 = vmatpush.msra.mxu0 0.0
        %1009 = vmatpush.msra.mxu0 %v716
        %1010 = vmatpush.msra.mxu0 %v618
        %1011 = vmatpush.msra.mxu0 %v586
        %1012 = vmatpush.msra.mxu0 %v554
        %1013 = vmatpush.msra.mxu0 %v522
        %1014 = vmatmul.f32.gmra.mxu0 %v679
        %v1015 = vpop.f32.mrf.mxu0
        %v1016 = vadd.f32 %v675, %v1015
        %1017 = vdwg.mxu0
        %1018 = vmatpush.msra.mxu0 0.0
        %1019 = vmatpush.msra.mxu0 0.0
        %1020 = vmatpush.msra.mxu0 0.0
        %1021 = vmatpush.msra.mxu0 0.0
        %1022 = vmatpush.msra.mxu0 0.0
        %1023 = vmatpush.msra.mxu0 0.0
        %1024 = vmatpush.msra.mxu0 0.0
        %1025 = vmatpush.msra.mxu0 0.0
        %1026 = vmatpush.msra.mxu0 0.0
        %1027 = vmatpush.msra.mxu0 0.0
        %1028 = vmatpush.msra.mxu0 0.0
        %1029 = vmatpush.msra.mxu0 %v719
        %1030 = vmatpush.msra.mxu0 %v619
        %1031 = vmatpush.msra.mxu0 %v587
        %1032 = vmatpush.msra.mxu0 %v555
        %1033 = vmatpush.msra.mxu0 %v523
        %1034 = vmatmul.f32.gmra.mxu0 %v679
        %v1035 = vpop.f32.mrf.mxu0
        %v1036 = vadd.f32 %v675, %v1035
        %1037 = vdwg.mxu0
        %1038 = vmatpush.msra.mxu0 0.0
        %1039 = vmatpush.msra.mxu0 0.0
        %1040 = vmatpush.msra.mxu0 0.0
        %1041 = vmatpush.msra.mxu0 0.0
        %1042 = vmatpush.msra.mxu0 0.0
        %1043 = vmatpush.msra.mxu0 0.0
        %1044 = vmatpush.msra.mxu0 0.0
        %1045 = vmatpush.msra.mxu0 0.0
        %1046 = vmatpush.msra.mxu0 0.0
        %1047 = vmatpush.msra.mxu0 0.0
        %1048 = vmatpush.msra.mxu0 0.0
        %1049 = vmatpush.msra.mxu0 %v722
        %1050 = vmatpush.msra.mxu0 %v620
        %1051 = vmatpush.msra.mxu0 %v588
        %1052 = vmatpush.msra.mxu0 %v556
        %1053 = vmatpush.msra.mxu0 %v524
        %1054 = vmatmul.f32.gmra.mxu0 %v679
        %v1055 = vpop.f32.mrf.mxu0
        %v1056 = vadd.f32 %v675, %v1055
        %1057 = vdwg.mxu0
        %1058 = vmatpush.msra.mxu0 0.0
        %1059 = vmatpush.msra.mxu0 0.0
        %1060 = vmatpush.msra.mxu0 0.0
        %1061 = vmatpush.msra.mxu0 0.0
        %1062 = vmatpush.msra.mxu0 0.0
        %1063 = vmatpush.msra.mxu0 0.0
        %1064 = vmatpush.msra.mxu0 0.0
        %1065 = vmatpush.msra.mxu0 0.0
        %1066 = vmatpush.msra.mxu0 0.0
        %1067 = vmatpush.msra.mxu0 0.0
        %1068 = vmatpush.msra.mxu0 0.0
        %1069 = vmatpush.msra.mxu0 %v725
        %1070 = vmatpush.msra.mxu0 %v621
        %1071 = vmatpush.msra.mxu0 %v589
        %1072 = vmatpush.msra.mxu0 %v557
        %1073 = vmatpush.msra.mxu0 %v525
        %1074 = vmatmul.f32.gmra.mxu0 %v679
        %v1075 = vpop.f32.mrf.mxu0
        %v1076 = vadd.f32 %v675, %v1075
        %1077 = vdwg.mxu0
        %1078 = vmatpush.msra.mxu0 0.0
        %1079 = vmatpush.msra.mxu0 0.0
        %1080 = vmatpush.msra.mxu0 0.0
        %1081 = vmatpush.msra.mxu0 0.0
        %1082 = vmatpush.msra.mxu0 0.0
        %1083 = vmatpush.msra.mxu0 0.0
        %1084 = vmatpush.msra.mxu0 0.0
        %1085 = vmatpush.msra.mxu0 0.0
        %1086 = vmatpush.msra.mxu0 0.0
        %1087 = vmatpush.msra.mxu0 0.0
        %1088 = vmatpush.msra.mxu0 0.0
        %1089 = vmatpush.msra.mxu0 %v728
        %1090 = vmatpush.msra.mxu0 %v622
        %1091 = vmatpush.msra.mxu0 %v590
        %1092 = vmatpush.msra.mxu0 %v558
        %1093 = vmatpush.msra.mxu0 %v526
        %1094 = vmatmul.f32.gmra.mxu0 %v679
        %v1095 = vpop.f32.mrf.mxu0
        %v1096 = vadd.f32 %v675, %v1095
        %1097 = vdwg.mxu0
        %1098 = vmatpush.msra.mxu0 0.0
        %1099 = vmatpush.msra.mxu0 0.0
        %1100 = vmatpush.msra.mxu0 0.0
        %1101 = vmatpush.msra.mxu0 0.0
        %1102 = vmatpush.msra.mxu0 0.0
        %1103 = vmatpush.msra.mxu0 0.0
        %1104 = vmatpush.msra.mxu0 0.0
        %1105 = vmatpush.msra.mxu0 0.0
        %1106 = vmatpush.msra.mxu0 0.0
        %1107 = vmatpush.msra.mxu0 0.0
        %1108 = vmatpush.msra.mxu0 0.0
        %1109 = vmatpush.msra.mxu0 %v731
        %1110 = vmatpush.msra.mxu0 %v623
        %1111 = vmatpush.msra.mxu0 %v591
        %1112 = vmatpush.msra.mxu0 %v559
        %1113 = vmatpush.msra.mxu0 %v527
        %1114 = vmatmul.f32.gmra.mxu0 %v679
        %v1115 = vpop.f32.mrf.mxu0
        %v1116 = vadd.f32 %v675, %v1115
        %1117 = vdwg.mxu0
        %1118 = vmatpush.msra.mxu0 0.0
        %1119 = vmatpush.msra.mxu0 0.0
        %1120 = vmatpush.msra.mxu0 0.0
        %1121 = vmatpush.msra.mxu0 0.0
        %1122 = vmatpush.msra.mxu0 0.0
        %1123 = vmatpush.msra.mxu0 0.0
        %1124 = vmatpush.msra.mxu0 0.0
        %1125 = vmatpush.msra.mxu0 0.0
        %1126 = vmatpush.msra.mxu0 0.0
        %1127 = vmatpush.msra.mxu0 0.0
        %1128 = vmatpush.msra.mxu0 0.0
        %1129 = vmatpush.msra.mxu0 %v734
        %1130 = vmatpush.msra.mxu0 %v624
        %1131 = vmatpush.msra.mxu0 %v592
        %1132 = vmatpush.msra.mxu0 %v560
        %1133 = vmatpush.msra.mxu0 %v528
        %1134 = vmatmul.f32.gmra.mxu0 %v679
        %v1135 = vpop.f32.mrf.mxu0
        %v1136 = vadd.f32 %v675, %v1135
        %1137 = vdwg.mxu0
        %1138 = vmatpush.msra.mxu0 0.0
        %1139 = vmatpush.msra.mxu0 0.0
        %1140 = vmatpush.msra.mxu0 0.0
        %1141 = vmatpush.msra.mxu0 0.0
        %1142 = vmatpush.msra.mxu0 0.0
        %1143 = vmatpush.msra.mxu0 0.0
        %1144 = vmatpush.msra.mxu0 0.0
        %1145 = vmatpush.msra.mxu0 0.0
        %1146 = vmatpush.msra.mxu0 0.0
        %1147 = vmatpush.msra.mxu0 0.0
        %1148 = vmatpush.msra.mxu0 0.0
        %1149 = vmatpush.msra.mxu0 %v737
        %1150 = vmatpush.msra.mxu0 %v625
        %1151 = vmatpush.msra.mxu0 %v593
        %1152 = vmatpush.msra.mxu0 %v561
        %1153 = vmatpush.msra.mxu0 %v529
        %1154 = vmatmul.f32.gmra.mxu0 %v679
        %v1155 = vpop.f32.mrf.mxu0
        %v1156 = vadd.f32 %v675, %v1155
        %1157 = vdwg.mxu0
        %1158 = vmatpush.msra.mxu0 0.0
        %1159 = vmatpush.msra.mxu0 0.0
        %1160 = vmatpush.msra.mxu0 0.0
        %1161 = vmatpush.msra.mxu0 0.0
        %1162 = vmatpush.msra.mxu0 0.0
        %1163 = vmatpush.msra.mxu0 0.0
        %1164 = vmatpush.msra.mxu0 0.0
        %1165 = vmatpush.msra.mxu0 0.0
        %1166 = vmatpush.msra.mxu0 0.0
        %1167 = vmatpush.msra.mxu0 0.0
        %1168 = vmatpush.msra.mxu0 0.0
        %1169 = vmatpush.msra.mxu0 %v740
        %1170 = vmatpush.msra.mxu0 %v626
        %1171 = vmatpush.msra.mxu0 %v594
        %1172 = vmatpush.msra.mxu0 %v562
        %1173 = vmatpush.msra.mxu0 %v530
        %1174 = vmatmul.f32.gmra.mxu0 %v679
        %v1175 = vpop.f32.mrf.mxu0
        %v1176 = vadd.f32 %v675, %v1175
        %1177 = vdwg.mxu0
        %1178 = vmatpush.msra.mxu0 0.0
        %1179 = vmatpush.msra.mxu0 0.0
        %1180 = vmatpush.msra.mxu0 0.0
        %1181 = vmatpush.msra.mxu0 0.0
        %1182 = vmatpush.msra.mxu0 0.0
        %1183 = vmatpush.msra.mxu0 0.0
        %1184 = vmatpush.msra.mxu0 0.0
        %1185 = vmatpush.msra.mxu0 0.0
        %1186 = vmatpush.msra.mxu0 0.0
        %1187 = vmatpush.msra.mxu0 0.0
        %1188 = vmatpush.msra.mxu0 0.0
        %1189 = vmatpush.msra.mxu0 %v743
        %1190 = vmatpush.msra.mxu0 %v627
        %1191 = vmatpush.msra.mxu0 %v595
        %1192 = vmatpush.msra.mxu0 %v563
        %1193 = vmatpush.msra.mxu0 %v531
        %1194 = vmatmul.f32.gmra.mxu0 %v679
        %v1195 = vpop.f32.mrf.mxu0
        %v1196 = vadd.f32 %v675, %v1195
        %1197 = vdwg.mxu0
        %1198 = vmatpush.msra.mxu0 0.0
        %1199 = vmatpush.msra.mxu0 0.0
        %1200 = vmatpush.msra.mxu0 0.0
        %1201 = vmatpush.msra.mxu0 0.0
        %1202 = vmatpush.msra.mxu0 0.0
        %1203 = vmatpush.msra.mxu0 0.0
        %1204 = vmatpush.msra.mxu0 0.0
        %1205 = vmatpush.msra.mxu0 0.0
        %1206 = vmatpush.msra.mxu0 0.0
        %1207 = vmatpush.msra.mxu0 0.0
        %1208 = vmatpush.msra.mxu0 0.0
        %1209 = vmatpush.msra.mxu0 %v746
        %1210 = vmatpush.msra.mxu0 %v628
        %1211 = vmatpush.msra.mxu0 %v596
        %1212 = vmatpush.msra.mxu0 %v564
        %1213 = vmatpush.msra.mxu0 %v532
        %1214 = vmatmul.f32.gmra.mxu0 %v679
        %v1215 = vpop.f32.mrf.mxu0
        %v1216 = vadd.f32 %v675, %v1215
        %1217 = vdwg.mxu0
        %1218 = vmatpush.msra.mxu0 0.0
        %1219 = vmatpush.msra.mxu0 0.0
        %1220 = vmatpush.msra.mxu0 0.0
        %1221 = vmatpush.msra.mxu0 0.0
        %1222 = vmatpush.msra.mxu0 0.0
        %1223 = vmatpush.msra.mxu0 0.0
        %1224 = vmatpush.msra.mxu0 0.0
        %1225 = vmatpush.msra.mxu0 0.0
        %1226 = vmatpush.msra.mxu0 0.0
        %1227 = vmatpush.msra.mxu0 0.0
        %1228 = vmatpush.msra.mxu0 0.0
        %1229 = vmatpush.msra.mxu0 %v749
        %1230 = vmatpush.msra.mxu0 %v629
        %1231 = vmatpush.msra.mxu0 %v597
        %1232 = vmatpush.msra.mxu0 %v565
        %1233 = vmatpush.msra.mxu0 %v533
        %1234 = vmatmul.f32.gmra.mxu0 %v679
        %v1235 = vpop.f32.mrf.mxu0
        %v1236 = vadd.f32 %v675, %v1235
        %1237 = vdwg.mxu0
        %1238 = vmatpush.msra.mxu0 0.0
        %1239 = vmatpush.msra.mxu0 0.0
        %1240 = vmatpush.msra.mxu0 0.0
        %1241 = vmatpush.msra.mxu0 0.0
        %1242 = vmatpush.msra.mxu0 0.0
        %1243 = vmatpush.msra.mxu0 0.0
        %1244 = vmatpush.msra.mxu0 0.0
        %1245 = vmatpush.msra.mxu0 0.0
        %1246 = vmatpush.msra.mxu0 0.0
        %1247 = vmatpush.msra.mxu0 0.0
        %1248 = vmatpush.msra.mxu0 0.0
        %1249 = vmatpush.msra.mxu0 %v752
        %1250 = vmatpush.msra.mxu0 %v630
        %1251 = vmatpush.msra.mxu0 %v598
        %1252 = vmatpush.msra.mxu0 %v566
        %1253 = vmatpush.msra.mxu0 %v534
        %1254 = vmatmul.f32.gmra.mxu0 %v679
        %v1255 = vpop.f32.mrf.mxu0
        %v1256 = vadd.f32 %v675, %v1255
        %1257 = vdwg.mxu0
        %1258 = vmatpush.msra.mxu0 0.0
        %1259 = vmatpush.msra.mxu0 0.0
        %1260 = vmatpush.msra.mxu0 0.0
        %1261 = vmatpush.msra.mxu0 0.0
        %1262 = vmatpush.msra.mxu0 0.0
        %1263 = vmatpush.msra.mxu0 0.0
        %1264 = vmatpush.msra.mxu0 0.0
        %1265 = vmatpush.msra.mxu0 0.0
        %1266 = vmatpush.msra.mxu0 0.0
        %1267 = vmatpush.msra.mxu0 0.0
        %1268 = vmatpush.msra.mxu0 0.0
        %1269 = vmatpush.msra.mxu0 %v755
        %1270 = vmatpush.msra.mxu0 %v631
        %1271 = vmatpush.msra.mxu0 %v599
        %1272 = vmatpush.msra.mxu0 %v567
        %1273 = vmatpush.msra.mxu0 %v535
        %1274 = vmatmul.f32.gmra.mxu0 %v679
        %v1275 = vpop.f32.mrf.mxu0
        %v1276 = vadd.f32 %v675, %v1275
        %1277 = vdwg.mxu0
        %1278 = vmatpush.msra.mxu0 0.0
        %1279 = vmatpush.msra.mxu0 0.0
        %1280 = vmatpush.msra.mxu0 0.0
        %1281 = vmatpush.msra.mxu0 0.0
        %1282 = vmatpush.msra.mxu0 0.0
        %1283 = vmatpush.msra.mxu0 0.0
        %1284 = vmatpush.msra.mxu0 0.0
        %1285 = vmatpush.msra.mxu0 0.0
        %1286 = vmatpush.msra.mxu0 0.0
        %1287 = vmatpush.msra.mxu0 0.0
        %1288 = vmatpush.msra.mxu0 0.0
        %1289 = vmatpush.msra.mxu0 %v758
        %1290 = vmatpush.msra.mxu0 %v632
        %1291 = vmatpush.msra.mxu0 %v600
        %1292 = vmatpush.msra.mxu0 %v568
        %1293 = vmatpush.msra.mxu0 %v536
        %1294 = vmatmul.f32.gmra.mxu0 %v679
        %v1295 = vpop.f32.mrf.mxu0
        %v1296 = vadd.f32 %v675, %v1295
        %1297 = vdwg.mxu0
        %1298 = vmatpush.msra.mxu0 0.0
        %1299 = vmatpush.msra.mxu0 0.0
        %1300 = vmatpush.msra.mxu0 0.0
        %1301 = vmatpush.msra.mxu0 0.0
        %1302 = vmatpush.msra.mxu0 0.0
        %1303 = vmatpush.msra.mxu0 0.0
        %1304 = vmatpush.msra.mxu0 0.0
        %1305 = vmatpush.msra.mxu0 0.0
        %1306 = vmatpush.msra.mxu0 0.0
        %1307 = vmatpush.msra.mxu0 0.0
        %1308 = vmatpush.msra.mxu0 0.0
        %1309 = vmatpush.msra.mxu0 %v761
        %1310 = vmatpush.msra.mxu0 %v633
        %1311 = vmatpush.msra.mxu0 %v601
        %1312 = vmatpush.msra.mxu0 %v569
        %1313 = vmatpush.msra.mxu0 %v537
        %1314 = vmatmul.f32.gmra.mxu0 %v679
        %v1315 = vpop.f32.mrf.mxu0
        %v1316 = vadd.f32 %v675, %v1315
        %1317 = vdwg.mxu0
        %1318 = vmatpush.msra.mxu0 0.0
        %1319 = vmatpush.msra.mxu0 0.0
        %1320 = vmatpush.msra.mxu0 0.0
        %1321 = vmatpush.msra.mxu0 0.0
        %1322 = vmatpush.msra.mxu0 0.0
        %1323 = vmatpush.msra.mxu0 0.0
        %1324 = vmatpush.msra.mxu0 0.0
        %1325 = vmatpush.msra.mxu0 0.0
        %1326 = vmatpush.msra.mxu0 0.0
        %1327 = vmatpush.msra.mxu0 0.0
        %1328 = vmatpush.msra.mxu0 0.0
        %1329 = vmatpush.msra.mxu0 %v764
        %1330 = vmatpush.msra.mxu0 %v634
        %1331 = vmatpush.msra.mxu0 %v602
        %1332 = vmatpush.msra.mxu0 %v570
        %1333 = vmatpush.msra.mxu0 %v538
        %1334 = vmatmul.f32.gmra.mxu0 %v679
        %v1335 = vpop.f32.mrf.mxu0
        %v1336 = vadd.f32 %v675, %v1335
        %1337 = vdwg.mxu0
        %1338 = vmatpush.msra.mxu0 0.0
        %1339 = vmatpush.msra.mxu0 0.0
        %1340 = vmatpush.msra.mxu0 0.0
        %1341 = vmatpush.msra.mxu0 0.0
        %1342 = vmatpush.msra.mxu0 0.0
        %1343 = vmatpush.msra.mxu0 0.0
        %1344 = vmatpush.msra.mxu0 0.0
        %1345 = vmatpush.msra.mxu0 0.0
        %1346 = vmatpush.msra.mxu0 0.0
        %1347 = vmatpush.msra.mxu0 0.0
        %1348 = vmatpush.msra.mxu0 0.0
        %1349 = vmatpush.msra.mxu0 %v767
        %1350 = vmatpush.msra.mxu0 %v635
        %1351 = vmatpush.msra.mxu0 %v603
        %1352 = vmatpush.msra.mxu0 %v571
        %1353 = vmatpush.msra.mxu0 %v539
        %1354 = vmatmul.f32.gmra.mxu0 %v679
        %v1355 = vpop.f32.mrf.mxu0
        %v1356 = vadd.f32 %v675, %v1355
        %1357 = vdwg.mxu0
        %1358 = vmatpush.msra.mxu0 0.0
        %1359 = vmatpush.msra.mxu0 0.0
        %1360 = vmatpush.msra.mxu0 0.0
        %1361 = vmatpush.msra.mxu0 0.0
        %1362 = vmatpush.msra.mxu0 0.0
        %1363 = vmatpush.msra.mxu0 0.0
        %1364 = vmatpush.msra.mxu0 0.0
        %1365 = vmatpush.msra.mxu0 0.0
        %1366 = vmatpush.msra.mxu0 0.0
        %1367 = vmatpush.msra.mxu0 0.0
        %1368 = vmatpush.msra.mxu0 0.0
        %1369 = vmatpush.msra.mxu0 %v770
        %1370 = vmatpush.msra.mxu0 %v636
        %1371 = vmatpush.msra.mxu0 %v604
        %1372 = vmatpush.msra.mxu0 %v572
        %1373 = vmatpush.msra.mxu0 %v540
        %1374 = vmatmul.f32.gmra.mxu0 %v679
        %v1375 = vpop.f32.mrf.mxu0
        %v1376 = vadd.f32 %v675, %v1375
        %1377 = vdwg.mxu0
        %1378 = vmatpush.msra.mxu0 0.0
        %1379 = vmatpush.msra.mxu0 0.0
        %1380 = vmatpush.msra.mxu0 0.0
        %1381 = vmatpush.msra.mxu0 0.0
        %1382 = vmatpush.msra.mxu0 0.0
        %1383 = vmatpush.msra.mxu0 0.0
        %1384 = vmatpush.msra.mxu0 0.0
        %1385 = vmatpush.msra.mxu0 0.0
        %1386 = vmatpush.msra.mxu0 0.0
        %1387 = vmatpush.msra.mxu0 0.0
        %1388 = vmatpush.msra.mxu0 0.0
        %1389 = vmatpush.msra.mxu0 %v773
        %1390 = vmatpush.msra.mxu0 %v637
        %1391 = vmatpush.msra.mxu0 %v605
        %1392 = vmatpush.msra.mxu0 %v573
        %1393 = vmatpush.msra.mxu0 %v541
        %1394 = vmatmul.f32.gmra.mxu0 %v679
        %v1395 = vpop.f32.mrf.mxu0
        %v1396 = vadd.f32 %v675, %v1395
        %1397 = vdwg.mxu0
        %1398 = vmatpush.msra.mxu0 0.0
        %1399 = vmatpush.msra.mxu0 0.0
        %1400 = vmatpush.msra.mxu0 0.0
        %1401 = vmatpush.msra.mxu0 0.0
        %1402 = vmatpush.msra.mxu0 0.0
        %1403 = vmatpush.msra.mxu0 0.0
        %1404 = vmatpush.msra.mxu0 0.0
        %1405 = vmatpush.msra.mxu0 0.0
        %1406 = vmatpush.msra.mxu0 0.0
        %1407 = vmatpush.msra.mxu0 0.0
        %1408 = vmatpush.msra.mxu0 0.0
        %1409 = vmatpush.msra.mxu0 %v776
        %1410 = vmatpush.msra.mxu0 %v638
        %1411 = vmatpush.msra.mxu0 %v606
        %1412 = vmatpush.msra.mxu0 %v574
        %1413 = vmatpush.msra.mxu0 %v542
        %1414 = vmatmul.f32.gmra.mxu0 %v679
        %v1415 = vpop.f32.mrf.mxu0
        %v1416 = vadd.f32 %v675, %v1415
        %1417 = vdwg.mxu0
        %v1418 = vmax.f32 %v796, 0.0
        %v1419 = vmax.f32 %v816, 0.0
        %v1420 = vmax.f32 %v836, 0.0
        %v1421 = vmax.f32 %v856, 0.0
        %v1422 = vmax.f32 %v876, 0.0
        %v1423 = vmax.f32 %v896, 0.0
        %v1424 = vmax.f32 %v916, 0.0
        %v1425 = vmax.f32 %v936, 0.0
        %v1426 = vmax.f32 %v956, 0.0
        %v1427 = vmax.f32 %v976, 0.0
        %v1428 = vmax.f32 %v996, 0.0
        %v1429 = vmax.f32 %v1016, 0.0
        %v1430 = vmax.f32 %v1036, 0.0
        %v1431 = vmax.f32 %v1056, 0.0
        %v1432 = vmax.f32 %v1076, 0.0
        %v1433 = vmax.f32 %v1096, 0.0
        %v1434 = vmax.f32 %v1116, 0.0
        %v1435 = vmax.f32 %v1136, 0.0
        %v1436 = vmax.f32 %v1156, 0.0
        %v1437 = vmax.f32 %v1176, 0.0
        %v1438 = vmax.f32 %v1196, 0.0
        %v1439 = vmax.f32 %v1216, 0.0
        %v1440 = vmax.f32 %v1236, 0.0
        %v1441 = vmax.f32 %v1256, 0.0
        %v1442 = vmax.f32 %v1276, 0.0
        %v1443 = vmax.f32 %v1296, 0.0
        %v1444 = vmax.f32 %v1316, 0.0
        %v1445 = vmax.f32 %v1336, 0.0
        %v1446 = vmax.f32 %v1356, 0.0
        %v1447 = vmax.f32 %v1376, 0.0
        %v1448 = vmax.f32 %v1396, 0.0
        %v1449 = vmax.f32 %v1416, 0.0
        %1450 = vst [vmem:[%s499] sm:$0xff] %v1418
        %1451 = vst [vmem:[%s499 + $0x8] sm:$0xff] %v1419
        %1452 = vst [vmem:[%s499 + $0x10] sm:$0xff] %v1420
        %1453 = vst [vmem:[%s499 + $0x18] sm:$0xff] %v1421
        %1454 = vst [vmem:[%s499 + $0x20] sm:$0xff] %v1422
        %1455 = vst [vmem:[%s499 + $0x28] sm:$0xff] %v1423
        %1456 = vst [vmem:[%s499 + $0x30] sm:$0xff] %v1424
        %1457 = vst [vmem:[%s499 + $0x38] sm:$0xff] %v1425
        %1458 = vst [vmem:[%s499 + $0x40] sm:$0xff] %v1426
        %1459 = vst [vmem:[%s499 + $0x48] sm:$0xff] %v1427
        %1460 = vst [vmem:[%s499 + $0x50] sm:$0xff] %v1428
        %1461 = vst [vmem:[%s499 + $0x58] sm:$0xff] %v1429
        %1462 = vst [vmem:[%s499 + $0x60] sm:$0xff] %v1430
        %1463 = vst [vmem:[%s499 + $0x68] sm:$0xff] %v1431
        %1464 = vst [vmem:[%s499 + $0x70] sm:$0xff] %v1432
        %1465 = vst [vmem:[%s499 + $0x78] sm:$0xff] %v1433
        %1466 = vst [vmem:[%s499 + $0x80] sm:$0xff] %v1434
        %1467 = vst [vmem:[%s499 + $0x88] sm:$0xff] %v1435
        %1468 = vst [vmem:[%s499 + $0x90] sm:$0xff] %v1436
        %1469 = vst [vmem:[%s499 + $0x98] sm:$0xff] %v1437
        %1470 = vst [vmem:[%s499 + $0xa0] sm:$0xff] %v1438
        %1471 = vst [vmem:[%s499 + $0xa8] sm:$0xff] %v1439
        %1472 = vst [vmem:[%s499 + $0xb0] sm:$0xff] %v1440
        %1473 = vst [vmem:[%s499 + $0xb8] sm:$0xff] %v1441
        %1474 = vst [vmem:[%s499 + $0xc0] sm:$0xff] %v1442
        %1475 = vst [vmem:[%s499 + $0xc8] sm:$0xff] %v1443
        %1476 = vst [vmem:[%s499 + $0xd0] sm:$0xff] %v1444
        %1477 = vst [vmem:[%s499 + $0xd8] sm:$0xff] %v1445
        %1478 = vst [vmem:[%s499 + $0xe0] sm:$0xff] %v1446
        %1479 = vst [vmem:[%s499 + $0xe8] sm:$0xff] %v1447
        %1480 = vst [vmem:[%s499 + $0xf0] sm:$0xff] %v1448
        %1481 = vst [vmem:[%s499 + $0xf8] sm:$0xff] %v1449
        %s1482 = sand.u32 %s90, 1
        %s1483 = sand.u32 %s90, 1
        %s1484 = smul.addr %s1483, 256
        %s1485 = scalar_lea.vmem [#allocation3], %s1484
        // Predicated region
        $region99: #{dqn_big2_forward.3} parent=93 // pred_check
          %p1486 = pneg %p100
        $region100: #{dqn_big2_forward.3} parent=93 // pred_check_branch
          %1488 = sbr.rel (%p1486) target = $region102
        $region101: #{dqn_big2_forward.3} parent=93 // pred_region
          %s1489 = smul.u32 32, %s14
          %s1490 = ssub.s32 77, %s1489
          %p1491 = scmp.lt.s32.totalorder %s1490, 32
          %s1492 = scalar_select %p1491, %s1490, 32
          %s1493 = smul.u32 8, %s1492
          %p1494 = scmp.ne.s32.totalorder 0, %s1493
          %s1495 = smul.addr %s1489, 8
          %s1496 = scalar_lea.vmem %s3, %s1495
          %s1497 = smul.u32 %s1492, 8
          // Predicated region
          $region103: #{dqn_big2_forward.3} parent=101 // pred_check
            %p1498 = pneg %p1494
          $region104: #{dqn_big2_forward.3} parent=101 // pred_check_branch
            %1500 = sbr.rel (%p1498) target = $region106
          $region105: #{dqn_big2_forward.3} parent=101 // pred_region
            %p1501 = scmp.lt.u32.totalorder %s1497, 8
            %p1502 = pneg %p1501
            // Predicated region
            $region107: #{dqn_big2_forward.3} parent=105 // pred_check
              _
            $region108: #{dqn_big2_forward.3} parent=105 // pred_check_branch
              %1504 = sbr.rel (%p1501) target = $region110
            $region109: #{dqn_big2_forward.3} parent=105 // pred_region
              %s1520 = sand.u32 %s1497, 7
              %p1521 = scmp.eq.s32.totalorder %s1520, 0
              // Predicated region
              $region122: #{dqn_big2_forward.3} parent=109 // pred_check
                %p1522 = pneg %p1521
              $region123: #{dqn_big2_forward.3} parent=109 // pred_check_branch
                %1524 = sbr.rel (%p1522) target = $region125
              $region124: #{dqn_big2_forward.3} parent=109 // pred_region
                %s1525 = sshrl.u32 %s1497, 3
                %s1526 = sshrl.u32 %s1525, 5
                // While loop
                $region126: #{dqn_big2_forward.3} parent=124 // loop_pre_header
                  _
                $region127: #{dqn_big2_forward.3} parent=124 // loop_header
                  %s1528 = sphi 0, %s1530
                  %p1529 = scmp.ge.s32.totalorder %s1528, %s1526
                  %s1533 = sphi 0, %s1602
                  %s1534 = sphi %s1485, %s1605
                  %s1535 = sphi %s1496, %s1606
                $region128: #{dqn_big2_forward.3} parent=124 // loop_header_branch
                  %1532 = sbr.rel (%p1529) target = $region132
                $region129: #{dqn_big2_forward.3} parent=124 // loop_body
                  %v1536 = vld [vmem:[%s1534] sm:$0xff]
                  %1537 = vst [vmem:[%s1535] sm:$0xff] %v1536
                  %v1538 = vld [vmem:[%s1534 + $0x8] sm:$0xff]
                  %1539 = vst [vmem:[%s1535 + $0x8] sm:$0xff] %v1538
                  %v1540 = vld [vmem:[%s1534 + $0x10] sm:$0xff]
                  %1541 = vst [vmem:[%s1535 + $0x10] sm:$0xff] %v1540
                  %v1542 = vld [vmem:[%s1534 + $0x18] sm:$0xff]
                  %1543 = vst [vmem:[%s1535 + $0x18] sm:$0xff] %v1542
                  %v1544 = vld [vmem:[%s1534 + $0x20] sm:$0xff]
                  %1545 = vst [vmem:[%s1535 + $0x20] sm:$0xff] %v1544
                  %v1546 = vld [vmem:[%s1534 + $0x28] sm:$0xff]
                  %1547 = vst [vmem:[%s1535 + $0x28] sm:$0xff] %v1546
                  %v1548 = vld [vmem:[%s1534 + $0x30] sm:$0xff]
                  %1549 = vst [vmem:[%s1535 + $0x30] sm:$0xff] %v1548
                  %v1550 = vld [vmem:[%s1534 + $0x38] sm:$0xff]
                  %1551 = vst [vmem:[%s1535 + $0x38] sm:$0xff] %v1550
                  %v1552 = vld [vmem:[%s1534 + $0x40] sm:$0xff]
                  %1553 = vst [vmem:[%s1535 + $0x40] sm:$0xff] %v1552
                  %v1554 = vld [vmem:[%s1534 + $0x48] sm:$0xff]
                  %1555 = vst [vmem:[%s1535 + $0x48] sm:$0xff] %v1554
                  %v1556 = vld [vmem:[%s1534 + $0x50] sm:$0xff]
                  %1557 = vst [vmem:[%s1535 + $0x50] sm:$0xff] %v1556
                  %v1558 = vld [vmem:[%s1534 + $0x58] sm:$0xff]
                  %1559 = vst [vmem:[%s1535 + $0x58] sm:$0xff] %v1558
                  %v1560 = vld [vmem:[%s1534 + $0x60] sm:$0xff]
                  %1561 = vst [vmem:[%s1535 + $0x60] sm:$0xff] %v1560
                  %v1562 = vld [vmem:[%s1534 + $0x68] sm:$0xff]
                  %1563 = vst [vmem:[%s1535 + $0x68] sm:$0xff] %v1562
                  %v1564 = vld [vmem:[%s1534 + $0x70] sm:$0xff]
                  %1565 = vst [vmem:[%s1535 + $0x70] sm:$0xff] %v1564
                  %v1566 = vld [vmem:[%s1534 + $0x78] sm:$0xff]
                  %1567 = vst [vmem:[%s1535 + $0x78] sm:$0xff] %v1566
                  %v1568 = vld [vmem:[%s1534 + $0x80] sm:$0xff]
                  %1569 = vst [vmem:[%s1535 + $0x80] sm:$0xff] %v1568
                  %v1570 = vld [vmem:[%s1534 + $0x88] sm:$0xff]
                  %1571 = vst [vmem:[%s1535 + $0x88] sm:$0xff] %v1570
                  %v1572 = vld [vmem:[%s1534 + $0x90] sm:$0xff]
                  %1573 = vst [vmem:[%s1535 + $0x90] sm:$0xff] %v1572
                  %v1574 = vld [vmem:[%s1534 + $0x98] sm:$0xff]
                  %1575 = vst [vmem:[%s1535 + $0x98] sm:$0xff] %v1574
                  %v1576 = vld [vmem:[%s1534 + $0xa0] sm:$0xff]
                  %1577 = vst [vmem:[%s1535 + $0xa0] sm:$0xff] %v1576
                  %v1578 = vld [vmem:[%s1534 + $0xa8] sm:$0xff]
                  %1579 = vst [vmem:[%s1535 + $0xa8] sm:$0xff] %v1578
                  %v1580 = vld [vmem:[%s1534 + $0xb0] sm:$0xff]
                  %1581 = vst [vmem:[%s1535 + $0xb0] sm:$0xff] %v1580
                  %v1582 = vld [vmem:[%s1534 + $0xb8] sm:$0xff]
                  %1583 = vst [vmem:[%s1535 + $0xb8] sm:$0xff] %v1582
                  %v1584 = vld [vmem:[%s1534 + $0xc0] sm:$0xff]
                  %1585 = vst [vmem:[%s1535 + $0xc0] sm:$0xff] %v1584
                  %v1586 = vld [vmem:[%s1534 + $0xc8] sm:$0xff]
                  %1587 = vst [vmem:[%s1535 + $0xc8] sm:$0xff] %v1586
                  %v1588 = vld [vmem:[%s1534 + $0xd0] sm:$0xff]
                  %1589 = vst [vmem:[%s1535 + $0xd0] sm:$0xff] %v1588
                  %v1590 = vld [vmem:[%s1534 + $0xd8] sm:$0xff]
                  %1591 = vst [vmem:[%s1535 + $0xd8] sm:$0xff] %v1590
                  %v1592 = vld [vmem:[%s1534 + $0xe0] sm:$0xff]
                  %1593 = vst [vmem:[%s1535 + $0xe0] sm:$0xff] %v1592
                  %v1594 = vld [vmem:[%s1534 + $0xe8] sm:$0xff]
                  %1595 = vst [vmem:[%s1535 + $0xe8] sm:$0xff] %v1594
                  %v1596 = vld [vmem:[%s1534 + $0xf0] sm:$0xff]
                  %1597 = vst [vmem:[%s1535 + $0xf0] sm:$0xff] %v1596
                  %v1598 = vld [vmem:[%s1534 + $0xf8] sm:$0xff]
                  %1599 = vst [vmem:[%s1535 + $0xf8] sm:$0xff] %v1598
                  %s1600 = sadd.s32 1, %s1533
                  %p1601 = scmp.ge.s32.totalorder %s1600, %s1526
                  %s1602 = scalar_select %p1601, 0, %s1600
                  %s1603 = smul.u32 %s1602, 256
                  %s1604 = smul.u32 %s1602, 256
                  %s1605 = scalar_lea.vmem %s1485, %s1603 [#allocation3]
                  %s1606 = scalar_lea.vmem %s1496, %s1604
                $region130: #{dqn_big2_forward.3} parent=124 // loop_footer
                  %s1530 = sadd.s32 %s1528, 1
                $region131: #{dqn_big2_forward.3} parent=124 // loop_footer_branch
                  %1527 = sbr.rel target = $region127
                $region132: #{dqn_big2_forward.3} parent=124 // loop_exit
                  _
                %s1607 = sshrl.u32 %s1525, 5
                %s1608 = sand.u32 %s1525, 31
                %s1609 = smul.u32 %s1607, 32
                %s1610 = smul.u32 8, %s1609
                %s1611 = scalar_lea.vmem %s1485, %s1610 [#allocation3]
                %s1612 = smul.u32 8, %s1609
                %s1613 = scalar_lea.vmem %s1496, %s1612
                // While loop
                $region133: #{dqn_big2_forward.3} parent=124 // loop_pre_header
                  _
                $region134: #{dqn_big2_forward.3} parent=124 // loop_header
                  %s1615 = sphi 0, %s1617
                  %p1616 = scmp.ge.s32.totalorder %s1615, %s1608
                  %s1620 = sphi 0, %s1627
                  %s1621 = sphi %s1611, %s1630
                  %s1622 = sphi %s1613, %s1631
                $region135: #{dqn_big2_forward.3} parent=124 // loop_header_branch
                  %1619 = sbr.rel (%p1616) target = $region139
                $region136: #{dqn_big2_forward.3} parent=124 // loop_body
                  %v1623 = vld [vmem:[%s1621] sm:$0xff]
                  %1624 = vst [vmem:[%s1622] sm:$0xff] %v1623
                  %s1625 = sadd.s32 1, %s1620
                  %p1626 = scmp.ge.s32.totalorder %s1625, %s1608
                  %s1627 = scalar_select %p1626, 0, %s1625
                  %s1628 = smul.u32 %s1627, 8
                  %s1629 = smul.u32 %s1627, 8
                  %s1630 = scalar_lea.vmem %s1611, %s1628 [#allocation3]
                  %s1631 = scalar_lea.vmem %s1613, %s1629
                $region137: #{dqn_big2_forward.3} parent=124 // loop_footer
                  %s1617 = sadd.s32 %s1615, 1
                $region138: #{dqn_big2_forward.3} parent=124 // loop_footer_branch
                  %1614 = sbr.rel target = $region134
                $region139: #{dqn_big2_forward.3} parent=124 // loop_exit
                  _
              $region125: #{dqn_big2_forward.3} parent=109 // pred_fallthru
                _
              %p1632 = pneg %p1521
              // Predicated region
              $region140: #{dqn_big2_forward.3} parent=109 // pred_check
                _
              $region141: #{dqn_big2_forward.3} parent=109 // pred_check_branch
                %1634 = sbr.rel (%p1521) target = $region143
              $region142: #{dqn_big2_forward.3} parent=109 // pred_region
                %s1635 = sand.u32 %s1497, 7
                %s1636 = ssub.s32 %s1497, %s1635
                %s1637 = scalar_lea.vmem %s1485, %s1636 [#allocation3]
                %s1638 = ssub.s32 %s1497, %s1635
                %s1639 = scalar_lea.vmem %s1496, %s1638
                %s1640 = sshrl.u32 %s1497, 3
                %s1641 = sshrl.u32 %s1640, 5
                // While loop
                $region144: #{dqn_big2_forward.3} parent=142 // loop_pre_header
                  _
                $region145: #{dqn_big2_forward.3} parent=142 // loop_header
                  %s1643 = sphi 0, %s1645
                  %p1644 = scmp.ge.s32.totalorder %s1643, %s1641
                  %s1648 = sphi 0, %s1717
                  %s1649 = sphi %s1485, %s1720
                  %s1650 = sphi %s1496, %s1721
                $region146: #{dqn_big2_forward.3} parent=142 // loop_header_branch
                  %1647 = sbr.rel (%p1644) target = $region150
                $region147: #{dqn_big2_forward.3} parent=142 // loop_body
                  %v1651 = vld [vmem:[%s1649] sm:$0xff]
                  %1652 = vst [vmem:[%s1650] sm:$0xff] %v1651
                  %v1653 = vld [vmem:[%s1649 + $0x8] sm:$0xff]
                  %1654 = vst [vmem:[%s1650 + $0x8] sm:$0xff] %v1653
                  %v1655 = vld [vmem:[%s1649 + $0x10] sm:$0xff]
                  %1656 = vst [vmem:[%s1650 + $0x10] sm:$0xff] %v1655
                  %v1657 = vld [vmem:[%s1649 + $0x18] sm:$0xff]
                  %1658 = vst [vmem:[%s1650 + $0x18] sm:$0xff] %v1657
                  %v1659 = vld [vmem:[%s1649 + $0x20] sm:$0xff]
                  %1660 = vst [vmem:[%s1650 + $0x20] sm:$0xff] %v1659
                  %v1661 = vld [vmem:[%s1649 + $0x28] sm:$0xff]
                  %1662 = vst [vmem:[%s1650 + $0x28] sm:$0xff] %v1661
                  %v1663 = vld [vmem:[%s1649 + $0x30] sm:$0xff]
                  %1664 = vst [vmem:[%s1650 + $0x30] sm:$0xff] %v1663
                  %v1665 = vld [vmem:[%s1649 + $0x38] sm:$0xff]
                  %1666 = vst [vmem:[%s1650 + $0x38] sm:$0xff] %v1665
                  %v1667 = vld [vmem:[%s1649 + $0x40] sm:$0xff]
                  %1668 = vst [vmem:[%s1650 + $0x40] sm:$0xff] %v1667
                  %v1669 = vld [vmem:[%s1649 + $0x48] sm:$0xff]
                  %1670 = vst [vmem:[%s1650 + $0x48] sm:$0xff] %v1669
                  %v1671 = vld [vmem:[%s1649 + $0x50] sm:$0xff]
                  %1672 = vst [vmem:[%s1650 + $0x50] sm:$0xff] %v1671
                  %v1673 = vld [vmem:[%s1649 + $0x58] sm:$0xff]
                  %1674 = vst [vmem:[%s1650 + $0x58] sm:$0xff] %v1673
                  %v1675 = vld [vmem:[%s1649 + $0x60] sm:$0xff]
                  %1676 = vst [vmem:[%s1650 + $0x60] sm:$0xff] %v1675
                  %v1677 = vld [vmem:[%s1649 + $0x68] sm:$0xff]
                  %1678 = vst [vmem:[%s1650 + $0x68] sm:$0xff] %v1677
                  %v1679 = vld [vmem:[%s1649 + $0x70] sm:$0xff]
                  %1680 = vst [vmem:[%s1650 + $0x70] sm:$0xff] %v1679
                  %v1681 = vld [vmem:[%s1649 + $0x78] sm:$0xff]
                  %1682 = vst [vmem:[%s1650 + $0x78] sm:$0xff] %v1681
                  %v1683 = vld [vmem:[%s1649 + $0x80] sm:$0xff]
                  %1684 = vst [vmem:[%s1650 + $0x80] sm:$0xff] %v1683
                  %v1685 = vld [vmem:[%s1649 + $0x88] sm:$0xff]
                  %1686 = vst [vmem:[%s1650 + $0x88] sm:$0xff] %v1685
                  %v1687 = vld [vmem:[%s1649 + $0x90] sm:$0xff]
                  %1688 = vst [vmem:[%s1650 + $0x90] sm:$0xff] %v1687
                  %v1689 = vld [vmem:[%s1649 + $0x98] sm:$0xff]
                  %1690 = vst [vmem:[%s1650 + $0x98] sm:$0xff] %v1689
                  %v1691 = vld [vmem:[%s1649 + $0xa0] sm:$0xff]
                  %1692 = vst [vmem:[%s1650 + $0xa0] sm:$0xff] %v1691
                  %v1693 = vld [vmem:[%s1649 + $0xa8] sm:$0xff]
                  %1694 = vst [vmem:[%s1650 + $0xa8] sm:$0xff] %v1693
                  %v1695 = vld [vmem:[%s1649 + $0xb0] sm:$0xff]
                  %1696 = vst [vmem:[%s1650 + $0xb0] sm:$0xff] %v1695
                  %v1697 = vld [vmem:[%s1649 + $0xb8] sm:$0xff]
                  %1698 = vst [vmem:[%s1650 + $0xb8] sm:$0xff] %v1697
                  %v1699 = vld [vmem:[%s1649 + $0xc0] sm:$0xff]
                  %1700 = vst [vmem:[%s1650 + $0xc0] sm:$0xff] %v1699
                  %v1701 = vld [vmem:[%s1649 + $0xc8] sm:$0xff]
                  %1702 = vst [vmem:[%s1650 + $0xc8] sm:$0xff] %v1701
                  %v1703 = vld [vmem:[%s1649 + $0xd0] sm:$0xff]
                  %1704 = vst [vmem:[%s1650 + $0xd0] sm:$0xff] %v1703
                  %v1705 = vld [vmem:[%s1649 + $0xd8] sm:$0xff]
                  %1706 = vst [vmem:[%s1650 + $0xd8] sm:$0xff] %v1705
                  %v1707 = vld [vmem:[%s1649 + $0xe0] sm:$0xff]
                  %1708 = vst [vmem:[%s1650 + $0xe0] sm:$0xff] %v1707
                  %v1709 = vld [vmem:[%s1649 + $0xe8] sm:$0xff]
                  %1710 = vst [vmem:[%s1650 + $0xe8] sm:$0xff] %v1709
                  %v1711 = vld [vmem:[%s1649 + $0xf0] sm:$0xff]
                  %1712 = vst [vmem:[%s1650 + $0xf0] sm:$0xff] %v1711
                  %v1713 = vld [vmem:[%s1649 + $0xf8] sm:$0xff]
                  %1714 = vst [vmem:[%s1650 + $0xf8] sm:$0xff] %v1713
                  %s1715 = sadd.s32 1, %s1648
                  %p1716 = scmp.ge.s32.totalorder %s1715, %s1641
                  %s1717 = scalar_select %p1716, 0, %s1715
                  %s1718 = smul.u32 %s1717, 256
                  %s1719 = smul.u32 %s1717, 256
                  %s1720 = scalar_lea.vmem %s1485, %s1718 [#allocation3]
                  %s1721 = scalar_lea.vmem %s1496, %s1719
                $region148: #{dqn_big2_forward.3} parent=142 // loop_footer
                  %s1645 = sadd.s32 %s1643, 1
                $region149: #{dqn_big2_forward.3} parent=142 // loop_footer_branch
                  %1642 = sbr.rel target = $region145
                $region150: #{dqn_big2_forward.3} parent=142 // loop_exit
                  _
                %s1722 = sshrl.u32 %s1640, 5
                %s1723 = sand.u32 %s1640, 31
                %s1724 = smul.u32 %s1722, 32
                %s1725 = smul.u32 8, %s1724
                %s1726 = scalar_lea.vmem %s1485, %s1725 [#allocation3]
                %s1727 = smul.u32 8, %s1724
                %s1728 = scalar_lea.vmem %s1496, %s1727
                // While loop
                $region151: #{dqn_big2_forward.3} parent=142 // loop_pre_header
                  _
                $region152: #{dqn_big2_forward.3} parent=142 // loop_header
                  %s1730 = sphi 0, %s1732
                  %p1731 = scmp.ge.s32.totalorder %s1730, %s1723
                  %s1735 = sphi 0, %s1742
                  %s1736 = sphi %s1726, %s1745
                  %s1737 = sphi %s1728, %s1746
                $region153: #{dqn_big2_forward.3} parent=142 // loop_header_branch
                  %1734 = sbr.rel (%p1731) target = $region157
                $region154: #{dqn_big2_forward.3} parent=142 // loop_body
                  %v1738 = vld [vmem:[%s1736] sm:$0xff]
                  %1739 = vst [vmem:[%s1737] sm:$0xff] %v1738
                  %s1740 = sadd.s32 1, %s1735
                  %p1741 = scmp.ge.s32.totalorder %s1740, %s1723
                  %s1742 = scalar_select %p1741, 0, %s1740
                  %s1743 = smul.u32 %s1742, 8
                  %s1744 = smul.u32 %s1742, 8
                  %s1745 = scalar_lea.vmem %s1726, %s1743 [#allocation3]
                  %s1746 = scalar_lea.vmem %s1728, %s1744
                $region155: #{dqn_big2_forward.3} parent=142 // loop_footer
                  %s1732 = sadd.s32 %s1730, 1
                $region156: #{dqn_big2_forward.3} parent=142 // loop_footer_branch
                  %1729 = sbr.rel target = $region152
                $region157: #{dqn_big2_forward.3} parent=142 // loop_exit
                  _
                %s1747 = sshll.u32 1, %s1635
                %s1748 = ssub.s32 %s1747, 1
                loop: start=0, step=1, limit=1
                $region158: #{dqn_big2_forward.3} parent=142 // loop_pre_header
                  _
                $region159: #{dqn_big2_forward.3} parent=142 // loop_header
                  %s1750 = sphi 0, %s1754
                  %p1751 = scmp.ge.s32.totalorder %s1750, 1
                  %s1755 = sphi %s1637, %s1637
                  %s1756 = sphi %s1639, %s1639
                $region160: #{dqn_big2_forward.3} parent=142 // loop_header_branch
                  %1753 = sbr.rel (%p1751) target = $region164
                $region161: #{dqn_big2_forward.3} parent=142 // loop_body
                  %v1757 = vld [vmem:[%s1755] sm:%s1748]
                  %1758 = vst [vmem:[%s1756] sm:%s1748] %v1757
                $region162: #{dqn_big2_forward.3} parent=142 // loop_footer
                  %s1754 = sadd.s32 1, %s1750
                $region163: #{dqn_big2_forward.3} parent=142 // loop_footer_branch
                  %1749 = sbr.rel target = $region159
                $region164: #{dqn_big2_forward.3} parent=142 // loop_exit
                  _
              $region143: #{dqn_big2_forward.3} parent=109 // pred_fallthru
                _
            $region110: #{dqn_big2_forward.3} parent=105 // pred_fallthru
              _
            // Predicated region
            $region111: #{dqn_big2_forward.3} parent=105 // pred_check
              %p1505 = pneg %p1501
            $region112: #{dqn_big2_forward.3} parent=105 // pred_check_branch
              %1507 = sbr.rel (%p1505) target = $region114
            $region113: #{dqn_big2_forward.3} parent=105 // pred_region
              %s1508 = sshll.u32 1, %s1497
              %s1509 = ssub.s32 %s1508, 1
              loop: start=0, step=1, limit=1
              $region115: #{dqn_big2_forward.3} parent=113 // loop_pre_header
                _
              $region116: #{dqn_big2_forward.3} parent=113 // loop_header
                %s1511 = sphi 0, %s1515
                %p1512 = scmp.ge.s32.totalorder %s1511, 1
                %s1516 = sphi %s1485, %s1485
                %s1517 = sphi %s1496, %s1496
              $region117: #{dqn_big2_forward.3} parent=113 // loop_header_branch
                %1514 = sbr.rel (%p1512) target = $region121
              $region118: #{dqn_big2_forward.3} parent=113 // loop_body
                %v1518 = vld [vmem:[%s1516] sm:%s1509]
                %1519 = vst [vmem:[%s1517] sm:%s1509] %v1518
              $region119: #{dqn_big2_forward.3} parent=113 // loop_footer
                %s1515 = sadd.s32 1, %s1511
              $region120: #{dqn_big2_forward.3} parent=113 // loop_footer_branch
                %1510 = sbr.rel target = $region116
              $region121: #{dqn_big2_forward.3} parent=113 // loop_exit
                _
            $region114: #{dqn_big2_forward.3} parent=105 // pred_fallthru
              _
          $region106: #{dqn_big2_forward.3} parent=101 // pred_fallthru
            _
          %1759 = vnop
        $region102: #{dqn_big2_forward.3} parent=93 // pred_fallthru
          _
      $region94: #{dqn_big2_forward.3} parent=5 // pred_fallthru
        _
      %p1760 = scmp.le.s32.totalorder 2, %s9
      // Predicated region
      $region165: #{dqn_big2_forward.3} parent=5 // pred_check
        %p1761 = pneg %p1760
      $region166: #{dqn_big2_forward.3} parent=5 // pred_check_branch
        %1763 = sbr.rel (%p1761) target = $region168
      $region167: #{dqn_big2_forward.3} parent=5 // pred_region
        %s1764 = ssub.s32 %s9, 2
        // Predicated region
        $region169: #{dqn_big2_forward.3} parent=167 // pred_check
          %p1765 = pneg %p106
        $region170: #{dqn_big2_forward.3} parent=167 // pred_check_branch
          %1767 = sbr.rel (%p1765) target = $region172
        $region171: #{dqn_big2_forward.3} parent=167 // pred_region
          %s1768 = sand.u32 %s91, 1
          %s1769 = sand.u32 %s91, 1
          %s1770 = smul.addr %s1769, 256
          %s1771 = scalar_lea.vmem [#allocation3], %s1770
        $region172: #{dqn_big2_forward.3} parent=167 // pred_fallthru
          _
      $region168: #{dqn_big2_forward.3} parent=5 // pred_fallthru
        _
    $region6: #{dqn_big2_forward.3} parent=1 // loop_footer
      %s13 = sadd.s32 1, %s9
    $region7: #{dqn_big2_forward.3} parent=1 // loop_footer_branch
      %8 = sbr.rel target = $region3
    $region8: #{dqn_big2_forward.3} parent=1 // loop_exit
      _

// kernel: dqn_big2_forward.4
$region0: #{dqn_big2_forward.4}
  #allocation0 [shape = 'u32[]', space=smem, size = 0x4, offset = 0x4, fixed_abs, tag = 'smem constant byte address 0x4 - core index']
  #allocation1 [shape = 'u32[72,128]{1,0:T(1,128)}', space=vmem, size = 0x9000, scoped, tag = 'internal scratch']
  %s0 = inlined_call_operand.vmem [shape: f32[32,392], index: 0, kind: input, shape index: {}]
  %s1 = inlined_call_operand.vmem [shape: f32[392,512], index: 1, kind: input, shape index: {}]
  %s2 = inlined_call_operand.vmem [shape: f32[32,1], index: 2, kind: input, shape index: {}]
  %s3 = inlined_call_operand.vmem [shape: f32[32,512], index: 3, kind: output, shape index: {}]
  %s4 = sld [smem:[#allocation0]]
  $region22: #{dqn_big2_forward.4} parent=0
    _
  %s6 = ssub.s32 1, %s4
  %s7 = scalar_select 0, %s6, %s4
  // Predicated region
  $region2: #{dqn_big2_forward.4} parent=0 // pred_check
    _
  $region3: #{dqn_big2_forward.4} parent=0 // pred_check_branch
    %9 = sbr.rel (0) target = $region5
  $region4: #{dqn_big2_forward.4} parent=0 // pred_region
    _
  $region5: #{dqn_big2_forward.4} parent=0 // pred_fallthru
    _
  // Predicated region
  $region6: #{dqn_big2_forward.4} parent=0 // pred_check
    _
  $region7: #{dqn_big2_forward.4} parent=0 // pred_check_branch
    %11 = sbr.rel (0) target = $region9
  $region8: #{dqn_big2_forward.4} parent=0 // pred_region
    _
  $region9: #{dqn_big2_forward.4} parent=0 // pred_fallthru
    _
  // Predicated region
  $region10: #{dqn_big2_forward.4} parent=0 // pred_check
    _
  $region11: #{dqn_big2_forward.4} parent=0 // pred_check_branch
    %13 = sbr.rel (0) target = $region13
  $region12: #{dqn_big2_forward.4} parent=0 // pred_region
    _
  $region13: #{dqn_big2_forward.4} parent=0 // pred_fallthru
    _
  %v14 = vld [vmem:[%s0] sm:$0xff]
  %v15 = vld [vmem:[%s0 + $0x8] sm:$0xff]
  %v16 = vld [vmem:[%s0 + $0x10] sm:$0xff]
  %v17 = vld [vmem:[%s0 + $0x18] sm:$0xff]
  %v18 = vld [vmem:[%s0 + $0x20] sm:$0xff]
  %v19 = vld [vmem:[%s0 + $0x28] sm:$0xff]
  %v20 = vld [vmem:[%s0 + $0x30] sm:$0xff]
  %v21 = vld [vmem:[%s0 + $0x38] sm:$0xff]
  %v22 = vld [vmem:[%s0 + $0x40] sm:$0xff]
  %v23 = vld [vmem:[%s0 + $0x48] sm:$0xff]
  %v24 = vld [vmem:[%s0 + $0x50] sm:$0xff]
  %v25 = vld [vmem:[%s0 + $0x58] sm:$0xff]
  %v26 = vld [vmem:[%s0 + $0x60] sm:$0xff]
  %v27 = vld [vmem:[%s0 + $0x68] sm:$0xff]
  %v28 = vld [vmem:[%s0 + $0x70] sm:$0xff]
  %v29 = vld [vmem:[%s0 + $0x78] sm:$0xff]
  %v30 = vld [vmem:[%s1] sm:$0xff]
  %v31 = vld [vmem:[%s1 + $0x8] sm:$0xff]
  %v32 = vld [vmem:[%s1 + $0x10] sm:$0xff]
  %v33 = vld [vmem:[%s1 + $0x18] sm:$0xff]
  %v34 = vld [vmem:[%s1 + $0x20] sm:$0xff]
  %v35 = vld [vmem:[%s1 + $0x28] sm:$0xff]
  %v36 = vld [vmem:[%s1 + $0x30] sm:$0xff]
  %v37 = vld [vmem:[%s1 + $0x38] sm:$0xff]
  %v38 = vld [vmem:[%s1 + $0x40] sm:$0xff]
  %v39 = vld [vmem:[%s1 + $0x48] sm:$0xff]
  %v40 = vld [vmem:[%s1 + $0x50] sm:$0xff]
  %v41 = vld [vmem:[%s1 + $0x58] sm:$0xff]
  %v42 = vld [vmem:[%s1 + $0x60] sm:$0xff]
  %v43 = vld [vmem:[%s1 + $0x68] sm:$0xff]
  %v44 = vld [vmem:[%s1 + $0x70] sm:$0xff]
  %v45 = vld [vmem:[%s1 + $0x78] sm:$0xff]
  %v46 = vld [vmem:[%s1 + $0x80] sm:$0xff]
  %v47 = vld [vmem:[%s1 + $0x88] sm:$0xff]
  %v48 = vld [vmem:[%s1 + $0x90] sm:$0xff]
  %v49 = vld [vmem:[%s1 + $0x98] sm:$0xff]
  %v50 = vld [vmem:[%s1 + $0xa0] sm:$0xff]
  %v51 = vld [vmem:[%s1 + $0xa8] sm:$0xff]
  %v52 = vld [vmem:[%s1 + $0xb0] sm:$0xff]
  %v53 = vld [vmem:[%s1 + $0xb8] sm:$0xff]
  %v54 = vld [vmem:[%s1 + $0xc0] sm:$0xff]
  %v55 = vld [vmem:[%s1 + $0xc8] sm:$0xff]
  %v56 = vld [vmem:[%s1 + $0xd0] sm:$0xff]
  %v57 = vld [vmem:[%s1 + $0xd8] sm:$0xff]
  %v58 = vld [vmem:[%s1 + $0xe0] sm:$0xff]
  %v59 = vld [vmem:[%s1 + $0xe8] sm:$0xff]
  %v60 = vld [vmem:[%s1 + $0xf0] sm:$0xff]
  %v61 = vld [vmem:[%s1 + $0xf8] sm:$0xff]
  %v62 = vld [vmem:[%s1 + $0x100] sm:$0xff]
  %v63 = vld [vmem:[%s1 + $0x108] sm:$0xff]
  %v64 = vld [vmem:[%s1 + $0x110] sm:$0xff]
  %v65 = vld [vmem:[%s1 + $0x118] sm:$0xff]
  %v66 = vld [vmem:[%s1 + $0x120] sm:$0xff]
  %v67 = vld [vmem:[%s1 + $0x128] sm:$0xff]
  %v68 = vld [vmem:[%s1 + $0x130] sm:$0xff]
  %v69 = vld [vmem:[%s1 + $0x138] sm:$0xff]
  %v70 = vld [vmem:[%s1 + $0x140] sm:$0xff]
  %v71 = vld [vmem:[%s1 + $0x148] sm:$0xff]
  %v72 = vld [vmem:[%s1 + $0x150] sm:$0xff]
  %v73 = vld [vmem:[%s1 + $0x158] sm:$0xff]
  %v74 = vld [vmem:[%s1 + $0x160] sm:$0xff]
  %v75 = vld [vmem:[%s1 + $0x168] sm:$0xff]
  %v76 = vld [vmem:[%s1 + $0x170] sm:$0xff]
  %v77 = vld [vmem:[%s1 + $0x178] sm:$0xff]
  %v78 = vld [vmem:[%s1 + $0x180] sm:$0xff]
  %v79 = vld [vmem:[%s1 + $0x188] sm:$0xff]
  %v80 = vld [vmem:[%s1 + $0x190] sm:$0xff]
  %v81 = vld [vmem:[%s1 + $0x198] sm:$0xff]
  %v82 = vld [vmem:[%s1 + $0x1a0] sm:$0xff]
  %v83 = vld [vmem:[%s1 + $0x1a8] sm:$0xff]
  %v84 = vld [vmem:[%s1 + $0x1b0] sm:$0xff]
  %v85 = vld [vmem:[%s1 + $0x1b8] sm:$0xff]
  %v86 = vld [vmem:[%s1 + $0x1c0] sm:$0xff]
  %v87 = vld [vmem:[%s1 + $0x1c8] sm:$0xff]
  %v88 = vld [vmem:[%s1 + $0x1d0] sm:$0xff]
  %v89 = vld [vmem:[%s1 + $0x1d8] sm:$0xff]
  %v90 = vld [vmem:[%s1 + $0x1e0] sm:$0xff]
  %v91 = vld [vmem:[%s1 + $0x1e8] sm:$0xff]
  %v92 = vld [vmem:[%s1 + $0x1f0] sm:$0xff]
  %v93 = vld [vmem:[%s1 + $0x1f8] sm:$0xff]
  %v94 = vld [vmem:[%s1 + $0x200] sm:$0xff]
  %v95 = vld [vmem:[%s1 + $0x208] sm:$0xff]
  %v96 = vld [vmem:[%s1 + $0x210] sm:$0xff]
  %v97 = vld [vmem:[%s1 + $0x218] sm:$0xff]
  %v98 = vld [vmem:[%s1 + $0x220] sm:$0xff]
  %v99 = vld [vmem:[%s1 + $0x228] sm:$0xff]
  %v100 = vld [vmem:[%s1 + $0x230] sm:$0xff]
  %v101 = vld [vmem:[%s1 + $0x238] sm:$0xff]
  %v102 = vld [vmem:[%s1 + $0x240] sm:$0xff]
  %v103 = vld [vmem:[%s1 + $0x248] sm:$0xff]
  %v104 = vld [vmem:[%s1 + $0x250] sm:$0xff]
  %v105 = vld [vmem:[%s1 + $0x258] sm:$0xff]
  %v106 = vld [vmem:[%s1 + $0x260] sm:$0xff]
  %v107 = vld [vmem:[%s1 + $0x268] sm:$0xff]
  %v108 = vld [vmem:[%s1 + $0x270] sm:$0xff]
  %v109 = vld [vmem:[%s1 + $0x278] sm:$0xff]
  %v110 = vld [vmem:[%s1 + $0x280] sm:$0xff]
  %v111 = vld [vmem:[%s1 + $0x288] sm:$0xff]
  %v112 = vld [vmem:[%s1 + $0x290] sm:$0xff]
  %v113 = vld [vmem:[%s1 + $0x298] sm:$0xff]
  %v114 = vld [vmem:[%s1 + $0x2a0] sm:$0xff]
  %v115 = vld [vmem:[%s1 + $0x2a8] sm:$0xff]
  %v116 = vld [vmem:[%s1 + $0x2b0] sm:$0xff]
  %v117 = vld [vmem:[%s1 + $0x2b8] sm:$0xff]
  %v118 = vld [vmem:[%s1 + $0x2c0] sm:$0xff]
  %v119 = vld [vmem:[%s1 + $0x2c8] sm:$0xff]
  %v120 = vld [vmem:[%s1 + $0x2d0] sm:$0xff]
  %v121 = vld [vmem:[%s1 + $0x2d8] sm:$0xff]
  %v122 = vld [vmem:[%s1 + $0x2e0] sm:$0xff]
  %v123 = vld [vmem:[%s1 + $0x2e8] sm:$0xff]
  %v124 = vld [vmem:[%s1 + $0x2f0] sm:$0xff]
  %v125 = vld [vmem:[%s1 + $0x2f8] sm:$0xff]
  %v126 = vld [vmem:[%s1 + $0x300] sm:$0xff]
  %v127 = vld [vmem:[%s1 + $0x308] sm:$0xff]
  %v128 = vld [vmem:[%s1 + $0x310] sm:$0xff]
  %v129 = vld [vmem:[%s1 + $0x318] sm:$0xff]
  %v130 = vld [vmem:[%s1 + $0x320] sm:$0xff]
  %v131 = vld [vmem:[%s1 + $0x328] sm:$0xff]
  %v132 = vld [vmem:[%s1 + $0x330] sm:$0xff]
  %v133 = vld [vmem:[%s1 + $0x338] sm:$0xff]
  %v134 = vld [vmem:[%s1 + $0x340] sm:$0xff]
  %v135 = vld [vmem:[%s1 + $0x348] sm:$0xff]
  %v136 = vld [vmem:[%s1 + $0x350] sm:$0xff]
  %v137 = vld [vmem:[%s1 + $0x358] sm:$0xff]
  %v138 = vld [vmem:[%s1 + $0x360] sm:$0xff]
  %v139 = vld [vmem:[%s1 + $0x368] sm:$0xff]
  %v140 = vld [vmem:[%s1 + $0x370] sm:$0xff]
  %v141 = vld [vmem:[%s1 + $0x378] sm:$0xff]
  %v142 = vld [vmem:[%s1 + $0x380] sm:$0xff]
  %v143 = vld [vmem:[%s1 + $0x388] sm:$0xff]
  %v144 = vld [vmem:[%s1 + $0x390] sm:$0xff]
  %v145 = vld [vmem:[%s1 + $0x398] sm:$0xff]
  %v146 = vld [vmem:[%s1 + $0x3a0] sm:$0xff]
  %v147 = vld [vmem:[%s1 + $0x3a8] sm:$0xff]
  %v148 = vld [vmem:[%s1 + $0x3b0] sm:$0xff]
  %v149 = vld [vmem:[%s1 + $0x3b8] sm:$0xff]
  %v150 = vld [vmem:[%s1 + $0x3c0] sm:$0xff]
  %v151 = vld [vmem:[%s1 + $0x3c8] sm:$0xff]
  %v152 = vld [vmem:[%s1 + $0x3d0] sm:$0xff]
  %v153 = vld [vmem:[%s1 + $0x3d8] sm:$0xff]
  %v154 = vld [vmem:[%s1 + $0x3e0] sm:$0xff]
  %v155 = vld [vmem:[%s1 + $0x3e8] sm:$0xff]
  %v156 = vld [vmem:[%s1 + $0x3f0] sm:$0xff]
  %v157 = vld [vmem:[%s1 + $0x3f8] sm:$0xff]
  %v158 = vld [vmem:[%s1 + $0x400] sm:$0xff]
  %v159 = vld [vmem:[%s1 + $0x408] sm:$0xff]
  %v160 = vld [vmem:[%s1 + $0x410] sm:$0xff]
  %v161 = vld [vmem:[%s1 + $0x418] sm:$0xff]
  %v162 = vld [vmem:[%s1 + $0x420] sm:$0xff]
  %v163 = vld [vmem:[%s1 + $0x428] sm:$0xff]
  %v164 = vld [vmem:[%s1 + $0x430] sm:$0xff]
  %v165 = vld [vmem:[%s1 + $0x438] sm:$0xff]
  %v166 = vld [vmem:[%s1 + $0x440] sm:$0xff]
  %v167 = vld [vmem:[%s1 + $0x448] sm:$0xff]
  %v168 = vld [vmem:[%s1 + $0x450] sm:$0xff]
  %v169 = vld [vmem:[%s1 + $0x458] sm:$0xff]
  %v170 = vld [vmem:[%s1 + $0x460] sm:$0xff]
  %v171 = vld [vmem:[%s1 + $0x468] sm:$0xff]
  %v172 = vld [vmem:[%s1 + $0x470] sm:$0xff]
  %v173 = vld [vmem:[%s1 + $0x478] sm:$0xff]
  %v174 = vld [vmem:[%s1 + $0x480] sm:$0xff]
  %v175 = vld [vmem:[%s1 + $0x488] sm:$0xff]
  %v176 = vld [vmem:[%s1 + $0x490] sm:$0xff]
  %v177 = vld [vmem:[%s1 + $0x498] sm:$0xff]
  %v178 = vld [vmem:[%s1 + $0x4a0] sm:$0xff]
  %v179 = vld [vmem:[%s1 + $0x4a8] sm:$0xff]
  %v180 = vld [vmem:[%s1 + $0x4b0] sm:$0xff]
  %v181 = vld [vmem:[%s1 + $0x4b8] sm:$0xff]
  %v182 = vld [vmem:[%s1 + $0x4c0] sm:$0xff]
  %v183 = vld [vmem:[%s1 + $0x4c8] sm:$0xff]
  %v184 = vld [vmem:[%s1 + $0x4d0] sm:$0xff]
  %v185 = vld [vmem:[%s1 + $0x4d8] sm:$0xff]
  %v186 = vld [vmem:[%s1 + $0x4e0] sm:$0xff]
  %v187 = vld [vmem:[%s1 + $0x4e8] sm:$0xff]
  %v188 = vld [vmem:[%s1 + $0x4f0] sm:$0xff]
  %v189 = vld [vmem:[%s1 + $0x4f8] sm:$0xff]
  %v190 = vld [vmem:[%s1 + $0x500] sm:$0xff]
  %v191 = vld [vmem:[%s1 + $0x508] sm:$0xff]
  %v192 = vld [vmem:[%s1 + $0x510] sm:$0xff]
  %v193 = vld [vmem:[%s1 + $0x518] sm:$0xff]
  %v194 = vld [vmem:[%s1 + $0x520] sm:$0xff]
  %v195 = vld [vmem:[%s1 + $0x528] sm:$0xff]
  %v196 = vld [vmem:[%s1 + $0x530] sm:$0xff]
  %v197 = vld [vmem:[%s1 + $0x538] sm:$0xff]
  %v198 = vld [vmem:[%s1 + $0x540] sm:$0xff]
  %v199 = vld [vmem:[%s1 + $0x548] sm:$0xff]
  %v200 = vld [vmem:[%s1 + $0x550] sm:$0xff]
  %v201 = vld [vmem:[%s1 + $0x558] sm:$0xff]
  %v202 = vld [vmem:[%s1 + $0x560] sm:$0xff]
  %v203 = vld [vmem:[%s1 + $0x568] sm:$0xff]
  %v204 = vld [vmem:[%s1 + $0x570] sm:$0xff]
  %v205 = vld [vmem:[%s1 + $0x578] sm:$0xff]
  %v206 = vld [vmem:[%s1 + $0x580] sm:$0xff]
  %v207 = vld [vmem:[%s1 + $0x588] sm:$0xff]
  %v208 = vld [vmem:[%s1 + $0x590] sm:$0xff]
  %v209 = vld [vmem:[%s1 + $0x598] sm:$0xff]
  %v210 = vld [vmem:[%s1 + $0x5a0] sm:$0xff]
  %v211 = vld [vmem:[%s1 + $0x5a8] sm:$0xff]
  %v212 = vld [vmem:[%s1 + $0x5b0] sm:$0xff]
  %v213 = vld [vmem:[%s1 + $0x5b8] sm:$0xff]
  %v214 = vld [vmem:[%s1 + $0x5c0] sm:$0xff]
  %v215 = vld [vmem:[%s1 + $0x5c8] sm:$0xff]
  %v216 = vld [vmem:[%s1 + $0x5d0] sm:$0xff]
  %v217 = vld [vmem:[%s1 + $0x5d8] sm:$0xff]
  %v218 = vld [vmem:[%s1 + $0x5e0] sm:$0xff]
  %v219 = vld [vmem:[%s1 + $0x5e8] sm:$0xff]
  %v220 = vld [vmem:[%s1 + $0x5f0] sm:$0xff]
  %v221 = vld [vmem:[%s1 + $0x5f8] sm:$0xff]
  %v222 = vld [vmem:[%s1 + $0x600] sm:$0xff]
  %v223 = vld [vmem:[%s1 + $0x608] sm:$0xff]
  %v224 = vld [vmem:[%s1 + $0x610] sm:$0xff]
  %v225 = vld [vmem:[%s1 + $0x618] sm:$0xff]
  %v226 = vld [vmem:[%s2] sm:$0xff]
  %v227 = vld [vmem:[%s2 + $0x8] sm:$0xff]
  %v228 = vld [vmem:[%s2 + $0x10] sm:$0xff]
  %v229 = vld [vmem:[%s2 + $0x18] sm:$0xff]
  %231 = vset.pattern.permute.xlu0 0
  %232 = vperm.xlu0 %231, %v226
  %v233 = vpop.permute.xlu0 %232
  %236 = vset.pattern.permute.xlu0 0
  %237 = vperm.xlu0 %236, %v227
  %v238 = vpop.permute.xlu0 %237
  %241 = vset.pattern.permute.xlu0 0
  %242 = vperm.xlu0 %241, %v228
  %v243 = vpop.permute.xlu0 %242
  %246 = vset.pattern.permute.xlu0 0
  %247 = vperm.xlu0 %246, %v229
  %v248 = vpop.permute.xlu0 %247
  %vm250 = vcmask 64512
  %v252 = vsel %vm250, %v17, 0
  %v255 = vsel %vm250, %v21, 0
  %v258 = vsel %vm250, %v25, 0
  %v261 = vsel %vm250, %v29, 0
  %263 = vmatpush.msra.mxu0 %v90
  %264 = vmatpush.msra.mxu0 %v86
  %265 = vmatpush.msra.mxu0 %v82
  %266 = vmatpush.msra.mxu0 %v78
  %267 = vmatpush.msra.mxu0 %v74
  %268 = vmatpush.msra.mxu0 %v70
  %269 = vmatpush.msra.mxu0 %v66
  %270 = vmatpush.msra.mxu0 %v62
  %271 = vmatpush.msra.mxu0 %v58
  %272 = vmatpush.msra.mxu0 %v54
  %273 = vmatpush.msra.mxu0 %v50
  %274 = vmatpush.msra.mxu0 %v46
  %275 = vmatpush.msra.mxu0 %v42
  %276 = vmatpush.msra.mxu0 %v38
  %277 = vmatpush.msra.mxu0 %v34
  %278 = vmatpush.msra.mxu0 %v30
  %279 = vmatmul.f32.gmra.mxu0 %v14
  %v280 = vpop.f32.mrf.mxu0
  %v281 = vadd.f32 %v233, %v280
  %282 = vmatmul.f32.gmra.mxu0 %v18
  %v283 = vpop.f32.mrf.mxu0
  %v284 = vadd.f32 %v238, %v283
  %285 = vmatmul.f32.gmra.mxu0 %v22
  %v286 = vpop.f32.mrf.mxu0
  %v287 = vadd.f32 %v243, %v286
  %288 = vmatmul.f32.gmra.mxu0 %v26
  %v289 = vpop.f32.mrf.mxu0
  %v290 = vadd.f32 %v248, %v289
  %291 = vdwg.mxu0
  %292 = vmatpush.msra.mxu0 %v154
  %293 = vmatpush.msra.mxu0 %v150
  %294 = vmatpush.msra.mxu0 %v146
  %295 = vmatpush.msra.mxu0 %v142
  %296 = vmatpush.msra.mxu0 %v138
  %297 = vmatpush.msra.mxu0 %v134
  %298 = vmatpush.msra.mxu0 %v130
  %299 = vmatpush.msra.mxu0 %v126
  %300 = vmatpush.msra.mxu0 %v122
  %301 = vmatpush.msra.mxu0 %v118
  %302 = vmatpush.msra.mxu0 %v114
  %303 = vmatpush.msra.mxu0 %v110
  %304 = vmatpush.msra.mxu0 %v106
  %305 = vmatpush.msra.mxu0 %v102
  %306 = vmatpush.msra.mxu0 %v98
  %307 = vmatpush.msra.mxu0 %v94
  %308 = vmatmul.f32.gmra.mxu0 %v15
  %v309 = vpop.f32.mrf.mxu0
  %v310 = vadd.f32 %v281, %v309
  %311 = vmatmul.f32.gmra.mxu0 %v19
  %v312 = vpop.f32.mrf.mxu0
  %v313 = vadd.f32 %v284, %v312
  %314 = vmatmul.f32.gmra.mxu0 %v23
  %v315 = vpop.f32.mrf.mxu0
  %v316 = vadd.f32 %v287, %v315
  %317 = vmatmul.f32.gmra.mxu0 %v27
  %v318 = vpop.f32.mrf.mxu0
  %v319 = vadd.f32 %v290, %v318
  %320 = vdwg.mxu0
  %321 = vmatpush.msra.mxu0 %v218
  %322 = vmatpush.msra.mxu0 %v214
  %323 = vmatpush.msra.mxu0 %v210
  %324 = vmatpush.msra.mxu0 %v206
  %325 = vmatpush.msra.mxu0 %v202
  %326 = vmatpush.msra.mxu0 %v198
  %327 = vmatpush.msra.mxu0 %v194
  %328 = vmatpush.msra.mxu0 %v190
  %329 = vmatpush.msra.mxu0 %v186
  %330 = vmatpush.msra.mxu0 %v182
  %331 = vmatpush.msra.mxu0 %v178
  %332 = vmatpush.msra.mxu0 %v174
  %333 = vmatpush.msra.mxu0 %v170
  %334 = vmatpush.msra.mxu0 %v166
  %335 = vmatpush.msra.mxu0 %v162
  %336 = vmatpush.msra.mxu0 %v158
  %337 = vmatmul.f32.gmra.mxu0 %v16
  %v338 = vpop.f32.mrf.mxu0
  %v339 = vadd.f32 %v310, %v338
  %340 = vmatmul.f32.gmra.mxu0 %v20
  %v341 = vpop.f32.mrf.mxu0
  %v342 = vadd.f32 %v313, %v341
  %343 = vmatmul.f32.gmra.mxu0 %v24
  %v344 = vpop.f32.mrf.mxu0
  %v345 = vadd.f32 %v316, %v344
  %346 = vmatmul.f32.gmra.mxu0 %v28
  %v347 = vpop.f32.mrf.mxu0
  %v348 = vadd.f32 %v319, %v347
  %349 = vdwg.mxu0
  %350 = vmatpush.msra.mxu0 0.0
  %351 = vmatpush.msra.mxu0 0.0
  %352 = vmatpush.msra.mxu0 0.0
  %353 = vmatpush.msra.mxu0 0.0
  %354 = vmatpush.msra.mxu0 0.0
  %355 = vmatpush.msra.mxu0 0.0
  %356 = vmatpush.msra.mxu0 0.0
  %357 = vmatpush.msra.mxu0 0.0
  %358 = vmatpush.msra.mxu0 0.0
  %359 = vmatpush.msra.mxu0 0.0
  %360 = vmatpush.msra.mxu0 0.0
  %361 = vmatpush.msra.mxu0 0.0
  %362 = vmatpush.msra.mxu0 0.0
  %363 = vmatpush.msra.mxu0 0.0
  %364 = vmatpush.msra.mxu0 0.0
  %365 = vmatpush.msra.mxu0 %v222
  %366 = vmatmul.f32.gmra.mxu0 %v252
  %v367 = vpop.f32.mrf.mxu0
  %v368 = vadd.f32 %v339, %v367
  %369 = vmatmul.f32.gmra.mxu0 %v255
  %v370 = vpop.f32.mrf.mxu0
  %v371 = vadd.f32 %v342, %v370
  %372 = vmatmul.f32.gmra.mxu0 %v258
  %v373 = vpop.f32.mrf.mxu0
  %v374 = vadd.f32 %v345, %v373
  %375 = vmatmul.f32.gmra.mxu0 %v261
  %v376 = vpop.f32.mrf.mxu0
  %v377 = vadd.f32 %v348, %v376
  %378 = vdwg.mxu0
  %379 = vmatpush.msra.mxu0 %v91
  %380 = vmatpush.msra.mxu0 %v87
  %381 = vmatpush.msra.mxu0 %v83
  %382 = vmatpush.msra.mxu0 %v79
  %383 = vmatpush.msra.mxu0 %v75
  %384 = vmatpush.msra.mxu0 %v71
  %385 = vmatpush.msra.mxu0 %v67
  %386 = vmatpush.msra.mxu0 %v63
  %387 = vmatpush.msra.mxu0 %v59
  %388 = vmatpush.msra.mxu0 %v55
  %389 = vmatpush.msra.mxu0 %v51
  %390 = vmatpush.msra.mxu0 %v47
  %391 = vmatpush.msra.mxu0 %v43
  %392 = vmatpush.msra.mxu0 %v39
  %393 = vmatpush.msra.mxu0 %v35
  %394 = vmatpush.msra.mxu0 %v31
  %395 = vmatmul.f32.gmra.mxu0 %v14
  %v396 = vpop.f32.mrf.mxu0
  %v397 = vadd.f32 %v233, %v396
  %398 = vmatmul.f32.gmra.mxu0 %v18
  %v399 = vpop.f32.mrf.mxu0
  %v400 = vadd.f32 %v238, %v399
  %401 = vmatmul.f32.gmra.mxu0 %v22
  %v402 = vpop.f32.mrf.mxu0
  %v403 = vadd.f32 %v243, %v402
  %404 = vmatmul.f32.gmra.mxu0 %v26
  %v405 = vpop.f32.mrf.mxu0
  %v406 = vadd.f32 %v248, %v405
  %407 = vdwg.mxu0
  %408 = vmatpush.msra.mxu0 %v155
  %409 = vmatpush.msra.mxu0 %v151
  %410 = vmatpush.msra.mxu0 %v147
  %411 = vmatpush.msra.mxu0 %v143
  %412 = vmatpush.msra.mxu0 %v139
  %413 = vmatpush.msra.mxu0 %v135
  %414 = vmatpush.msra.mxu0 %v131
  %415 = vmatpush.msra.mxu0 %v127
  %416 = vmatpush.msra.mxu0 %v123
  %417 = vmatpush.msra.mxu0 %v119
  %418 = vmatpush.msra.mxu0 %v115
  %419 = vmatpush.msra.mxu0 %v111
  %420 = vmatpush.msra.mxu0 %v107
  %421 = vmatpush.msra.mxu0 %v103
  %422 = vmatpush.msra.mxu0 %v99
  %423 = vmatpush.msra.mxu0 %v95
  %424 = vmatmul.f32.gmra.mxu0 %v15
  %v425 = vpop.f32.mrf.mxu0
  %v426 = vadd.f32 %v397, %v425
  %427 = vmatmul.f32.gmra.mxu0 %v19
  %v428 = vpop.f32.mrf.mxu0
  %v429 = vadd.f32 %v400, %v428
  %430 = vmatmul.f32.gmra.mxu0 %v23
  %v431 = vpop.f32.mrf.mxu0
  %v432 = vadd.f32 %v403, %v431
  %433 = vmatmul.f32.gmra.mxu0 %v27
  %v434 = vpop.f32.mrf.mxu0
  %v435 = vadd.f32 %v406, %v434
  %436 = vdwg.mxu0
  %437 = vmatpush.msra.mxu0 %v219
  %438 = vmatpush.msra.mxu0 %v215
  %439 = vmatpush.msra.mxu0 %v211
  %440 = vmatpush.msra.mxu0 %v207
  %441 = vmatpush.msra.mxu0 %v203
  %442 = vmatpush.msra.mxu0 %v199
  %443 = vmatpush.msra.mxu0 %v195
  %444 = vmatpush.msra.mxu0 %v191
  %445 = vmatpush.msra.mxu0 %v187
  %446 = vmatpush.msra.mxu0 %v183
  %447 = vmatpush.msra.mxu0 %v179
  %448 = vmatpush.msra.mxu0 %v175
  %449 = vmatpush.msra.mxu0 %v171
  %450 = vmatpush.msra.mxu0 %v167
  %451 = vmatpush.msra.mxu0 %v163
  %452 = vmatpush.msra.mxu0 %v159
  %453 = vmatmul.f32.gmra.mxu0 %v16
  %v454 = vpop.f32.mrf.mxu0
  %v455 = vadd.f32 %v426, %v454
  %456 = vmatmul.f32.gmra.mxu0 %v20
  %v457 = vpop.f32.mrf.mxu0
  %v458 = vadd.f32 %v429, %v457
  %459 = vmatmul.f32.gmra.mxu0 %v24
  %v460 = vpop.f32.mrf.mxu0
  %v461 = vadd.f32 %v432, %v460
  %462 = vmatmul.f32.gmra.mxu0 %v28
  %v463 = vpop.f32.mrf.mxu0
  %v464 = vadd.f32 %v435, %v463
  %465 = vdwg.mxu0
  %466 = vmatpush.msra.mxu0 0.0
  %467 = vmatpush.msra.mxu0 0.0
  %468 = vmatpush.msra.mxu0 0.0
  %469 = vmatpush.msra.mxu0 0.0
  %470 = vmatpush.msra.mxu0 0.0
  %471 = vmatpush.msra.mxu0 0.0
  %472 = vmatpush.msra.mxu0 0.0
  %473 = vmatpush.msra.mxu0 0.0
  %474 = vmatpush.msra.mxu0 0.0
  %475 = vmatpush.msra.mxu0 0.0
  %476 = vmatpush.msra.mxu0 0.0
  %477 = vmatpush.msra.mxu0 0.0
  %478 = vmatpush.msra.mxu0 0.0
  %479 = vmatpush.msra.mxu0 0.0
  %480 = vmatpush.msra.mxu0 0.0
  %481 = vmatpush.msra.mxu0 %v223
  %482 = vmatmul.f32.gmra.mxu0 %v252
  %v483 = vpop.f32.mrf.mxu0
  %v484 = vadd.f32 %v455, %v483
  %485 = vmatmul.f32.gmra.mxu0 %v255
  %v486 = vpop.f32.mrf.mxu0
  %v487 = vadd.f32 %v458, %v486
  %488 = vmatmul.f32.gmra.mxu0 %v258
  %v489 = vpop.f32.mrf.mxu0
  %v490 = vadd.f32 %v461, %v489
  %491 = vmatmul.f32.gmra.mxu0 %v261
  %v492 = vpop.f32.mrf.mxu0
  %v493 = vadd.f32 %v464, %v492
  %494 = vdwg.mxu0
  %495 = vmatpush.msra.mxu0 %v92
  %496 = vmatpush.msra.mxu0 %v88
  %497 = vmatpush.msra.mxu0 %v84
  %498 = vmatpush.msra.mxu0 %v80
  %499 = vmatpush.msra.mxu0 %v76
  %500 = vmatpush.msra.mxu0 %v72
  %501 = vmatpush.msra.mxu0 %v68
  %502 = vmatpush.msra.mxu0 %v64
  %503 = vmatpush.msra.mxu0 %v60
  %504 = vmatpush.msra.mxu0 %v56
  %505 = vmatpush.msra.mxu0 %v52
  %506 = vmatpush.msra.mxu0 %v48
  %507 = vmatpush.msra.mxu0 %v44
  %508 = vmatpush.msra.mxu0 %v40
  %509 = vmatpush.msra.mxu0 %v36
  %510 = vmatpush.msra.mxu0 %v32
  %511 = vmatmul.f32.gmra.mxu0 %v14
  %v512 = vpop.f32.mrf.mxu0
  %v513 = vadd.f32 %v233, %v512
  %514 = vmatmul.f32.gmra.mxu0 %v18
  %v515 = vpop.f32.mrf.mxu0
  %v516 = vadd.f32 %v238, %v515
  %517 = vmatmul.f32.gmra.mxu0 %v22
  %v518 = vpop.f32.mrf.mxu0
  %v519 = vadd.f32 %v243, %v518
  %520 = vmatmul.f32.gmra.mxu0 %v26
  %v521 = vpop.f32.mrf.mxu0
  %v522 = vadd.f32 %v248, %v521
  %523 = vdwg.mxu0
  %524 = vmatpush.msra.mxu0 %v156
  %525 = vmatpush.msra.mxu0 %v152
  %526 = vmatpush.msra.mxu0 %v148
  %527 = vmatpush.msra.mxu0 %v144
  %528 = vmatpush.msra.mxu0 %v140
  %529 = vmatpush.msra.mxu0 %v136
  %530 = vmatpush.msra.mxu0 %v132
  %531 = vmatpush.msra.mxu0 %v128
  %532 = vmatpush.msra.mxu0 %v124
  %533 = vmatpush.msra.mxu0 %v120
  %534 = vmatpush.msra.mxu0 %v116
  %535 = vmatpush.msra.mxu0 %v112
  %536 = vmatpush.msra.mxu0 %v108
  %537 = vmatpush.msra.mxu0 %v104
  %538 = vmatpush.msra.mxu0 %v100
  %539 = vmatpush.msra.mxu0 %v96
  %540 = vmatmul.f32.gmra.mxu0 %v15
  %v541 = vpop.f32.mrf.mxu0
  %v542 = vadd.f32 %v513, %v541
  %543 = vmatmul.f32.gmra.mxu0 %v19
  %v544 = vpop.f32.mrf.mxu0
  %v545 = vadd.f32 %v516, %v544
  %546 = vmatmul.f32.gmra.mxu0 %v23
  %v547 = vpop.f32.mrf.mxu0
  %v548 = vadd.f32 %v519, %v547
  %549 = vmatmul.f32.gmra.mxu0 %v27
  %v550 = vpop.f32.mrf.mxu0
  %v551 = vadd.f32 %v522, %v550
  %552 = vdwg.mxu0
  %553 = vmatpush.msra.mxu0 %v220
  %554 = vmatpush.msra.mxu0 %v216
  %555 = vmatpush.msra.mxu0 %v212
  %556 = vmatpush.msra.mxu0 %v208
  %557 = vmatpush.msra.mxu0 %v204
  %558 = vmatpush.msra.mxu0 %v200
  %559 = vmatpush.msra.mxu0 %v196
  %560 = vmatpush.msra.mxu0 %v192
  %561 = vmatpush.msra.mxu0 %v188
  %562 = vmatpush.msra.mxu0 %v184
  %563 = vmatpush.msra.mxu0 %v180
  %564 = vmatpush.msra.mxu0 %v176
  %565 = vmatpush.msra.mxu0 %v172
  %566 = vmatpush.msra.mxu0 %v168
  %567 = vmatpush.msra.mxu0 %v164
  %568 = vmatpush.msra.mxu0 %v160
  %569 = vmatmul.f32.gmra.mxu0 %v16
  %v570 = vpop.f32.mrf.mxu0
  %v571 = vadd.f32 %v542, %v570
  %572 = vmatmul.f32.gmra.mxu0 %v20
  %v573 = vpop.f32.mrf.mxu0
  %v574 = vadd.f32 %v545, %v573
  %575 = vmatmul.f32.gmra.mxu0 %v24
  %v576 = vpop.f32.mrf.mxu0
  %v577 = vadd.f32 %v548, %v576
  %578 = vmatmul.f32.gmra.mxu0 %v28
  %v579 = vpop.f32.mrf.mxu0
  %v580 = vadd.f32 %v551, %v579
  %581 = vdwg.mxu0
  %582 = vmatpush.msra.mxu0 0.0
  %583 = vmatpush.msra.mxu0 0.0
  %584 = vmatpush.msra.mxu0 0.0
  %585 = vmatpush.msra.mxu0 0.0
  %586 = vmatpush.msra.mxu0 0.0
  %587 = vmatpush.msra.mxu0 0.0
  %588 = vmatpush.msra.mxu0 0.0
  %589 = vmatpush.msra.mxu0 0.0
  %590 = vmatpush.msra.mxu0 0.0
  %591 = vmatpush.msra.mxu0 0.0
  %592 = vmatpush.msra.mxu0 0.0
  %593 = vmatpush.msra.mxu0 0.0
  %594 = vmatpush.msra.mxu0 0.0
  %595 = vmatpush.msra.mxu0 0.0
  %596 = vmatpush.msra.mxu0 0.0
  %597 = vmatpush.msra.mxu0 %v224
  %598 = vmatmul.f32.gmra.mxu0 %v252
  %v599 = vpop.f32.mrf.mxu0
  %v600 = vadd.f32 %v571, %v599
  %601 = vmatmul.f32.gmra.mxu0 %v255
  %v602 = vpop.f32.mrf.mxu0
  %v603 = vadd.f32 %v574, %v602
  %604 = vmatmul.f32.gmra.mxu0 %v258
  %v605 = vpop.f32.mrf.mxu0
  %v606 = vadd.f32 %v577, %v605
  %607 = vmatmul.f32.gmra.mxu0 %v261
  %v608 = vpop.f32.mrf.mxu0
  %v609 = vadd.f32 %v580, %v608
  %610 = vdwg.mxu0
  %611 = vmatpush.msra.mxu0 %v93
  %612 = vmatpush.msra.mxu0 %v89
  %613 = vmatpush.msra.mxu0 %v85
  %614 = vmatpush.msra.mxu0 %v81
  %615 = vmatpush.msra.mxu0 %v77
  %616 = vmatpush.msra.mxu0 %v73
  %617 = vmatpush.msra.mxu0 %v69
  %618 = vmatpush.msra.mxu0 %v65
  %619 = vmatpush.msra.mxu0 %v61
  %620 = vmatpush.msra.mxu0 %v57
  %621 = vmatpush.msra.mxu0 %v53
  %622 = vmatpush.msra.mxu0 %v49
  %623 = vmatpush.msra.mxu0 %v45
  %624 = vmatpush.msra.mxu0 %v41
  %625 = vmatpush.msra.mxu0 %v37
  %626 = vmatpush.msra.mxu0 %v33
  %627 = vmatmul.f32.gmra.mxu0 %v14
  %v628 = vpop.f32.mrf.mxu0
  %v629 = vadd.f32 %v233, %v628
  %630 = vmatmul.f32.gmra.mxu0 %v18
  %v631 = vpop.f32.mrf.mxu0
  %v632 = vadd.f32 %v238, %v631
  %633 = vmatmul.f32.gmra.mxu0 %v22
  %v634 = vpop.f32.mrf.mxu0
  %v635 = vadd.f32 %v243, %v634
  %636 = vmatmul.f32.gmra.mxu0 %v26
  %v637 = vpop.f32.mrf.mxu0
  %v638 = vadd.f32 %v248, %v637
  %639 = vdwg.mxu0
  %640 = vmatpush.msra.mxu0 %v157
  %641 = vmatpush.msra.mxu0 %v153
  %642 = vmatpush.msra.mxu0 %v149
  %643 = vmatpush.msra.mxu0 %v145
  %644 = vmatpush.msra.mxu0 %v141
  %645 = vmatpush.msra.mxu0 %v137
  %646 = vmatpush.msra.mxu0 %v133
  %647 = vmatpush.msra.mxu0 %v129
  %648 = vmatpush.msra.mxu0 %v125
  %649 = vmatpush.msra.mxu0 %v121
  %650 = vmatpush.msra.mxu0 %v117
  %651 = vmatpush.msra.mxu0 %v113
  %652 = vmatpush.msra.mxu0 %v109
  %653 = vmatpush.msra.mxu0 %v105
  %654 = vmatpush.msra.mxu0 %v101
  %655 = vmatpush.msra.mxu0 %v97
  %656 = vmatmul.f32.gmra.mxu0 %v15
  %v657 = vpop.f32.mrf.mxu0
  %v658 = vadd.f32 %v629, %v657
  %659 = vmatmul.f32.gmra.mxu0 %v19
  %v660 = vpop.f32.mrf.mxu0
  %v661 = vadd.f32 %v632, %v660
  %662 = vmatmul.f32.gmra.mxu0 %v23
  %v663 = vpop.f32.mrf.mxu0
  %v664 = vadd.f32 %v635, %v663
  %665 = vmatmul.f32.gmra.mxu0 %v27
  %v666 = vpop.f32.mrf.mxu0
  %v667 = vadd.f32 %v638, %v666
  %668 = vdwg.mxu0
  %669 = vmatpush.msra.mxu0 %v221
  %670 = vmatpush.msra.mxu0 %v217
  %671 = vmatpush.msra.mxu0 %v213
  %672 = vmatpush.msra.mxu0 %v209
  %673 = vmatpush.msra.mxu0 %v205
  %674 = vmatpush.msra.mxu0 %v201
  %675 = vmatpush.msra.mxu0 %v197
  %676 = vmatpush.msra.mxu0 %v193
  %677 = vmatpush.msra.mxu0 %v189
  %678 = vmatpush.msra.mxu0 %v185
  %679 = vmatpush.msra.mxu0 %v181
  %680 = vmatpush.msra.mxu0 %v177
  %681 = vmatpush.msra.mxu0 %v173
  %682 = vmatpush.msra.mxu0 %v169
  %683 = vmatpush.msra.mxu0 %v165
  %684 = vmatpush.msra.mxu0 %v161
  %685 = vmatmul.f32.gmra.mxu0 %v16
  %v686 = vpop.f32.mrf.mxu0
  %v687 = vadd.f32 %v658, %v686
  %688 = vmatmul.f32.gmra.mxu0 %v20
  %v689 = vpop.f32.mrf.mxu0
  %v690 = vadd.f32 %v661, %v689
  %691 = vmatmul.f32.gmra.mxu0 %v24
  %v692 = vpop.f32.mrf.mxu0
  %v693 = vadd.f32 %v664, %v692
  %694 = vmatmul.f32.gmra.mxu0 %v28
  %v695 = vpop.f32.mrf.mxu0
  %v696 = vadd.f32 %v667, %v695
  %697 = vdwg.mxu0
  %698 = vmatpush.msra.mxu0 0.0
  %699 = vmatpush.msra.mxu0 0.0
  %700 = vmatpush.msra.mxu0 0.0
  %701 = vmatpush.msra.mxu0 0.0
  %702 = vmatpush.msra.mxu0 0.0
  %703 = vmatpush.msra.mxu0 0.0
  %704 = vmatpush.msra.mxu0 0.0
  %705 = vmatpush.msra.mxu0 0.0
  %706 = vmatpush.msra.mxu0 0.0
  %707 = vmatpush.msra.mxu0 0.0
  %708 = vmatpush.msra.mxu0 0.0
  %709 = vmatpush.msra.mxu0 0.0
  %710 = vmatpush.msra.mxu0 0.0
  %711 = vmatpush.msra.mxu0 0.0
  %712 = vmatpush.msra.mxu0 0.0
  %713 = vmatpush.msra.mxu0 %v225
  %714 = vmatmul.f32.gmra.mxu0 %v252
  %v715 = vpop.f32.mrf.mxu0
  %v716 = vadd.f32 %v687, %v715
  %717 = vmatmul.f32.gmra.mxu0 %v255
  %v718 = vpop.f32.mrf.mxu0
  %v719 = vadd.f32 %v690, %v718
  %720 = vmatmul.f32.gmra.mxu0 %v258
  %v721 = vpop.f32.mrf.mxu0
  %v722 = vadd.f32 %v693, %v721
  %723 = vmatmul.f32.gmra.mxu0 %v261
  %v724 = vpop.f32.mrf.mxu0
  %v725 = vadd.f32 %v696, %v724
  %726 = vdwg.mxu0
  %v727 = vmax.f32 %v368, 0.0
  %v728 = vmax.f32 %v484, 0.0
  %v729 = vmax.f32 %v600, 0.0
  %v730 = vmax.f32 %v716, 0.0
  %v731 = vmax.f32 %v371, 0.0
  %v732 = vmax.f32 %v487, 0.0
  %v733 = vmax.f32 %v603, 0.0
  %v734 = vmax.f32 %v719, 0.0
  %v735 = vmax.f32 %v374, 0.0
  %v736 = vmax.f32 %v490, 0.0
  %v737 = vmax.f32 %v606, 0.0
  %v738 = vmax.f32 %v722, 0.0
  %v739 = vmax.f32 %v377, 0.0
  %v740 = vmax.f32 %v493, 0.0
  %v741 = vmax.f32 %v609, 0.0
  %v742 = vmax.f32 %v725, 0.0
  %743 = vst [vmem:[%s3] sm:$0xff] %v727
  %744 = vst [vmem:[%s3 + $0x8] sm:$0xff] %v728
  %745 = vst [vmem:[%s3 + $0x10] sm:$0xff] %v729
  %746 = vst [vmem:[%s3 + $0x18] sm:$0xff] %v730
  %747 = vst [vmem:[%s3 + $0x20] sm:$0xff] %v731
  %748 = vst [vmem:[%s3 + $0x28] sm:$0xff] %v732
  %749 = vst [vmem:[%s3 + $0x30] sm:$0xff] %v733
  %750 = vst [vmem:[%s3 + $0x38] sm:$0xff] %v734
  %751 = vst [vmem:[%s3 + $0x40] sm:$0xff] %v735
  %752 = vst [vmem:[%s3 + $0x48] sm:$0xff] %v736
  %753 = vst [vmem:[%s3 + $0x50] sm:$0xff] %v737
  %754 = vst [vmem:[%s3 + $0x58] sm:$0xff] %v738
  %755 = vst [vmem:[%s3 + $0x60] sm:$0xff] %v739
  %756 = vst [vmem:[%s3 + $0x68] sm:$0xff] %v740
  %757 = vst [vmem:[%s3 + $0x70] sm:$0xff] %v741
  %758 = vst [vmem:[%s3 + $0x78] sm:$0xff] %v742
  // Predicated region
  $region14: #{dqn_big2_forward.4} parent=0 // pred_check
    _
  $region15: #{dqn_big2_forward.4} parent=0 // pred_check_branch
    %760 = sbr.rel (0) target = $region17
  $region16: #{dqn_big2_forward.4} parent=0 // pred_region
    _
  $region17: #{dqn_big2_forward.4} parent=0 // pred_fallthru
    _
  // Predicated region
  $region18: #{dqn_big2_forward.4} parent=0 // pred_check
    _
  $region19: #{dqn_big2_forward.4} parent=0 // pred_check_branch
    %762 = sbr.rel (0) target = $region21
  $region20: #{dqn_big2_forward.4} parent=0 // pred_region
    _
  $region21: #{dqn_big2_forward.4} parent=0 // pred_fallthru
    _

// kernel: dqn_big2_forward.5
$region0: #{dqn_big2_forward.5}
  #allocation0 [shape = 'u32[]', space=smem, size = 0x4, offset = 0x4, fixed_abs, tag = 'smem constant byte address 0x4 - core index']
  #allocation1 [shape = 'u32[72,128]{1,0:T(1,128)}', space=vmem, size = 0x9000, scoped, tag = 'internal scratch']
  %s0 = inlined_call_operand.vmem [shape: f32[18,800], index: 0, kind: input, shape index: {}]
  %s1 = inlined_call_operand.vmem [shape: f32[2,48], index: 1, kind: input, shape index: {}]
  %s2 = inlined_call_operand.vmem [shape: f32[800,32], index: 2, kind: input, shape index: {}]
  %s3 = inlined_call_operand.vmem [shape: f32[1,32], index: 3, kind: input, shape index: {}]
  %s4 = inlined_call_operand.vmem [shape: f32[9,32,64], index: 4, kind: input, shape index: {}]
  %s5 = inlined_call_operand.vmem [shape: f32[48,64], index: 5, kind: input, shape index: {}]
  %s6 = inlined_call_operand.vmem [shape: f32[1,64], index: 6, kind: input, shape index: {}]
  %s7 = inlined_call_operand.vmem [shape: f32[64,4], index: 7, kind: input, shape index: {}]
  %s8 = inlined_call_operand.vmem [shape: f32[1,4], index: 8, kind: input, shape index: {}]
  %s9 = inlined_call_operand.hbm [shape: f32[2,4], index: 9, kind: output, shape index: {}]
  %s10 = sld [smem:[#allocation0]]
  $region46: #{dqn_big2_forward.5} parent=0
    _
  %s12 = ssub.s32 1, %s10
  %s13 = scalar_select 0, %s12, %s10
  $region1: #{dqn_big2_forward.5} parent=0
    #allocation2 [shape = 'u8[1024]{0}', space=vmem, size = 0x400, scoped, tag = 'output window, operand 0, single buffered']
    #allocation3 [shape = 's32[1]{0}', space=sflag, size = 0x4, scoped, tag = 'scoped memory for dqn_big2_forward.5']
    %14 = vsyncpa [#allocation3], 0
    // Predicated region
    $region2: #{dqn_big2_forward.5} parent=1 // pred_check
      _
    $region3: #{dqn_big2_forward.5} parent=1 // pred_check_branch
      %16 = sbr.rel (0) target = $region5
    $region4: #{dqn_big2_forward.5} parent=1 // pred_region
      _
    $region5: #{dqn_big2_forward.5} parent=1 // pred_fallthru
      _
    // Predicated region
    $region6: #{dqn_big2_forward.5} parent=1 // pred_check
      _
    $region7: #{dqn_big2_forward.5} parent=1 // pred_check_branch
      %18 = sbr.rel (0) target = $region9
    $region8: #{dqn_big2_forward.5} parent=1 // pred_region
      _
    $region9: #{dqn_big2_forward.5} parent=1 // pred_fallthru
      _
    // Predicated region
    $region10: #{dqn_big2_forward.5} parent=1 // pred_check
      _
    $region11: #{dqn_big2_forward.5} parent=1 // pred_check_branch
      %20 = sbr.rel (0) target = $region13
    $region12: #{dqn_big2_forward.5} parent=1 // pred_region
      _
    $region13: #{dqn_big2_forward.5} parent=1 // pred_fallthru
      _
    // Predicated region
    $region14: #{dqn_big2_forward.5} parent=1 // pred_check
      _
    $region15: #{dqn_big2_forward.5} parent=1 // pred_check_branch
      %22 = sbr.rel (0) target = $region17
    $region16: #{dqn_big2_forward.5} parent=1 // pred_region
      _
    $region17: #{dqn_big2_forward.5} parent=1 // pred_fallthru
      _
    // Predicated region
    $region18: #{dqn_big2_forward.5} parent=1 // pred_check
      _
    $region19: #{dqn_big2_forward.5} parent=1 // pred_check_branch
      %24 = sbr.rel (0) target = $region21
    $region20: #{dqn_big2_forward.5} parent=1 // pred_region
      _
    $region21: #{dqn_big2_forward.5} parent=1 // pred_fallthru
      _
    // Predicated region
    $region22: #{dqn_big2_forward.5} parent=1 // pred_check
      _
    $region23: #{dqn_big2_forward.5} parent=1 // pred_check_branch
      %26 = sbr.rel (0) target = $region25
    $region24: #{dqn_big2_forward.5} parent=1 // pred_region
      _
    $region25: #{dqn_big2_forward.5} parent=1 // pred_fallthru
      _
    // Predicated region
    $region26: #{dqn_big2_forward.5} parent=1 // pred_check
      _
    $region27: #{dqn_big2_forward.5} parent=1 // pred_check_branch
      %28 = sbr.rel (0) target = $region29
    $region28: #{dqn_big2_forward.5} parent=1 // pred_region
      _
    $region29: #{dqn_big2_forward.5} parent=1 // pred_fallthru
      _
    // Predicated region
    $region30: #{dqn_big2_forward.5} parent=1 // pred_check
      _
    $region31: #{dqn_big2_forward.5} parent=1 // pred_check_branch
      %30 = sbr.rel (0) target = $region33
    $region32: #{dqn_big2_forward.5} parent=1 // pred_region
      _
    $region33: #{dqn_big2_forward.5} parent=1 // pred_fallthru
      _
    // Predicated region
    $region34: #{dqn_big2_forward.5} parent=1 // pred_check
      _
    $region35: #{dqn_big2_forward.5} parent=1 // pred_check_branch
      %32 = sbr.rel (0) target = $region37
    $region36: #{dqn_big2_forward.5} parent=1 // pred_region
      _
    $region37: #{dqn_big2_forward.5} parent=1 // pred_fallthru
      _
    %v33 = vld [vmem:[%s0] sm:$0xff]
    %v34 = vld [vmem:[%s0 + $0x8] sm:$0xff]
    %v35 = vld [vmem:[%s0 + $0x10] sm:$0xff]
    %v36 = vld [vmem:[%s0 + $0x18] sm:$0xff]
    %v37 = vld [vmem:[%s0 + $0x20] sm:$0xff]
    %v38 = vld [vmem:[%s0 + $0x28] sm:$0xff]
    %v39 = vld [vmem:[%s0 + $0x30] sm:$0xff]
    %v40 = vld [vmem:[%s0 + $0x38] sm:$0xff]
    %v41 = vld [vmem:[%s0 + $0x40] sm:$0xff]
    %v42 = vld [vmem:[%s0 + $0x48] sm:$0xff]
    %v43 = vld [vmem:[%s0 + $0x50] sm:$0xff]
    %v44 = vld [vmem:[%s0 + $0x58] sm:$0xff]
    %v45 = vld [vmem:[%s0 + $0x60] sm:$0xff]
    %v46 = vld [vmem:[%s0 + $0x68] sm:$0xff]
    %v47 = vld [vmem:[%s0 + $0x70] sm:$0x3]
    %v48 = vld [vmem:[%s0 + $0x78] sm:$0x3]
    %v49 = vld [vmem:[%s0 + $0x80] sm:$0x3]
    %v50 = vld [vmem:[%s0 + $0x88] sm:$0x3]
    %v51 = vld [vmem:[%s0 + $0x90] sm:$0x3]
    %v52 = vld [vmem:[%s0 + $0x98] sm:$0x3]
    %v53 = vld [vmem:[%s0 + $0xa0] sm:$0x3]
    %v54 = vld [vmem:[%s2] sm:$0xff]
    %v55 = vld [vmem:[%s2 + $0x8] sm:$0xff]
    %v56 = vld [vmem:[%s2 + $0x10] sm:$0xff]
    %v57 = vld [vmem:[%s2 + $0x18] sm:$0xff]
    %v58 = vld [vmem:[%s2 + $0x20] sm:$0xff]
    %v59 = vld [vmem:[%s2 + $0x28] sm:$0xff]
    %v60 = vld [vmem:[%s2 + $0x30] sm:$0xff]
    %v61 = vld [vmem:[%s2 + $0x38] sm:$0xff]
    %v62 = vld [vmem:[%s2 + $0x40] sm:$0xff]
    %v63 = vld [vmem:[%s2 + $0x48] sm:$0xff]
    %v64 = vld [vmem:[%s2 + $0x50] sm:$0xff]
    %v65 = vld [vmem:[%s2 + $0x58] sm:$0xff]
    %v66 = vld [vmem:[%s2 + $0x60] sm:$0xff]
    %v67 = vld [vmem:[%s2 + $0x68] sm:$0xff]
    %v68 = vld [vmem:[%s2 + $0x70] sm:$0xff]
    %v69 = vld [vmem:[%s2 + $0x78] sm:$0xff]
    %v70 = vld [vmem:[%s2 + $0x80] sm:$0xff]
    %v71 = vld [vmem:[%s2 + $0x88] sm:$0xff]
    %v72 = vld [vmem:[%s2 + $0x90] sm:$0xff]
    %v73 = vld [vmem:[%s2 + $0x98] sm:$0xff]
    %v74 = vld [vmem:[%s2 + $0xa0] sm:$0xff]
    %v75 = vld [vmem:[%s2 + $0xa8] sm:$0xff]
    %v76 = vld [vmem:[%s2 + $0xb0] sm:$0xff]
    %v77 = vld [vmem:[%s2 + $0xb8] sm:$0xff]
    %v78 = vld [vmem:[%s2 + $0xc0] sm:$0xff]
    %v79 = vld [vmem:[%s2 + $0xc8] sm:$0xff]
    %v80 = vld [vmem:[%s2 + $0xd0] sm:$0xff]
    %v81 = vld [vmem:[%s2 + $0xd8] sm:$0xff]
    %v82 = vld [vmem:[%s2 + $0xe0] sm:$0xff]
    %v83 = vld [vmem:[%s2 + $0xe8] sm:$0xff]
    %v84 = vld [vmem:[%s2 + $0xf0] sm:$0xff]
    %v85 = vld [vmem:[%s2 + $0xf8] sm:$0xff]
    %v86 = vld [vmem:[%s2 + $0x100] sm:$0xff]
    %v87 = vld [vmem:[%s2 + $0x108] sm:$0xff]
    %v88 = vld [vmem:[%s2 + $0x110] sm:$0xff]
    %v89 = vld [vmem:[%s2 + $0x118] sm:$0xff]
    %v90 = vld [vmem:[%s2 + $0x120] sm:$0xff]
    %v91 = vld [vmem:[%s2 + $0x128] sm:$0xff]
    %v92 = vld [vmem:[%s2 + $0x130] sm:$0xff]
    %v93 = vld [vmem:[%s2 + $0x138] sm:$0xff]
    %v94 = vld [vmem:[%s2 + $0x140] sm:$0xff]
    %v95 = vld [vmem:[%s2 + $0x148] sm:$0xff]
    %v96 = vld [vmem:[%s2 + $0x150] sm:$0xff]
    %v97 = vld [vmem:[%s2 + $0x158] sm:$0xff]
    %v98 = vld [vmem:[%s2 + $0x160] sm:$0xff]
    %v99 = vld [vmem:[%s2 + $0x168] sm:$0xff]
    %v100 = vld [vmem:[%s2 + $0x170] sm:$0xff]
    %v101 = vld [vmem:[%s2 + $0x178] sm:$0xff]
    %v102 = vld [vmem:[%s2 + $0x180] sm:$0xff]
    %v103 = vld [vmem:[%s2 + $0x188] sm:$0xff]
    %v104 = vld [vmem:[%s2 + $0x190] sm:$0xff]
    %v105 = vld [vmem:[%s2 + $0x198] sm:$0xff]
    %v106 = vld [vmem:[%s2 + $0x1a0] sm:$0xff]
    %v107 = vld [vmem:[%s2 + $0x1a8] sm:$0xff]
    %v108 = vld [vmem:[%s2 + $0x1b0] sm:$0xff]
    %v109 = vld [vmem:[%s2 + $0x1b8] sm:$0xff]
    %v110 = vld [vmem:[%s2 + $0x1c0] sm:$0xff]
    %v111 = vld [vmem:[%s2 + $0x1c8] sm:$0xff]
    %v112 = vld [vmem:[%s2 + $0x1d0] sm:$0xff]
    %v113 = vld [vmem:[%s2 + $0x1d8] sm:$0xff]
    %v114 = vld [vmem:[%s2 + $0x1e0] sm:$0xff]
    %v115 = vld [vmem:[%s2 + $0x1e8] sm:$0xff]
    %v116 = vld [vmem:[%s2 + $0x1f0] sm:$0xff]
    %v117 = vld [vmem:[%s2 + $0x1f8] sm:$0xff]
    %v118 = vld [vmem:[%s2 + $0x200] sm:$0xff]
    %v119 = vld [vmem:[%s2 + $0x208] sm:$0xff]
    %v120 = vld [vmem:[%s2 + $0x210] sm:$0xff]
    %v121 = vld [vmem:[%s2 + $0x218] sm:$0xff]
    %v122 = vld [vmem:[%s2 + $0x220] sm:$0xff]
    %v123 = vld [vmem:[%s2 + $0x228] sm:$0xff]
    %v124 = vld [vmem:[%s2 + $0x230] sm:$0xff]
    %v125 = vld [vmem:[%s2 + $0x238] sm:$0xff]
    %v126 = vld [vmem:[%s2 + $0x240] sm:$0xff]
    %v127 = vld [vmem:[%s2 + $0x248] sm:$0xff]
    %v128 = vld [vmem:[%s2 + $0x250] sm:$0xff]
    %v129 = vld [vmem:[%s2 + $0x258] sm:$0xff]
    %v130 = vld [vmem:[%s2 + $0x260] sm:$0xff]
    %v131 = vld [vmem:[%s2 + $0x268] sm:$0xff]
    %v132 = vld [vmem:[%s2 + $0x270] sm:$0xff]
    %v133 = vld [vmem:[%s2 + $0x278] sm:$0xff]
    %v134 = vld [vmem:[%s2 + $0x280] sm:$0xff]
    %v135 = vld [vmem:[%s2 + $0x288] sm:$0xff]
    %v136 = vld [vmem:[%s2 + $0x290] sm:$0xff]
    %v137 = vld [vmem:[%s2 + $0x298] sm:$0xff]
    %v138 = vld [vmem:[%s2 + $0x2a0] sm:$0xff]
    %v139 = vld [vmem:[%s2 + $0x2a8] sm:$0xff]
    %v140 = vld [vmem:[%s2 + $0x2b0] sm:$0xff]
    %v141 = vld [vmem:[%s2 + $0x2b8] sm:$0xff]
    %v142 = vld [vmem:[%s2 + $0x2c0] sm:$0xff]
    %v143 = vld [vmem:[%s2 + $0x2c8] sm:$0xff]
    %v144 = vld [vmem:[%s2 + $0x2d0] sm:$0xff]
    %v145 = vld [vmem:[%s2 + $0x2d8] sm:$0xff]
    %v146 = vld [vmem:[%s2 + $0x2e0] sm:$0xff]
    %v147 = vld [vmem:[%s2 + $0x2e8] sm:$0xff]
    %v148 = vld [vmem:[%s2 + $0x2f0] sm:$0xff]
    %v149 = vld [vmem:[%s2 + $0x2f8] sm:$0xff]
    %v150 = vld [vmem:[%s2 + $0x300] sm:$0xff]
    %v151 = vld [vmem:[%s2 + $0x308] sm:$0xff]
    %v152 = vld [vmem:[%s2 + $0x310] sm:$0xff]
    %v153 = vld [vmem:[%s2 + $0x318] sm:$0xff]
    %v154 = vld [vmem:[%s3] sm:$0x1]
    %v156 = vperm.slane %v154, 0
    %vm158 = vcmask 261120
    %v160 = vsel %vm158, %v39, 0
    %v163 = vsel %vm158, %v46, 0
    %v166 = vsel %vm158, %v53, 0
    %168 = vmatpush.msra.mxu0 %v69
    %169 = vmatpush.msra.mxu0 %v68
    %170 = vmatpush.msra.mxu0 %v67
    %171 = vmatpush.msra.mxu0 %v66
    %172 = vmatpush.msra.mxu0 %v65
    %173 = vmatpush.msra.mxu0 %v64
    %174 = vmatpush.msra.mxu0 %v63
    %175 = vmatpush.msra.mxu0 %v62
    %176 = vmatpush.msra.mxu0 %v61
    %177 = vmatpush.msra.mxu0 %v60
    %178 = vmatpush.msra.mxu0 %v59
    %179 = vmatpush.msra.mxu0 %v58
    %180 = vmatpush.msra.mxu0 %v57
    %181 = vmatpush.msra.mxu0 %v56
    %182 = vmatpush.msra.mxu0 %v55
    %183 = vmatpush.msra.mxu0 %v54
    %184 = vmatmul.f32.gmra.mxu0 %v33
    %v185 = vpop.f32.mrf.mxu0
    %v186 = vadd.f32 %v156, %v185
    %187 = vmatmul.f32.gmra.mxu0 %v40
    %v188 = vpop.f32.mrf.mxu0
    %v189 = vadd.f32 %v156, %v188
    %190 = vmatmul.f32.gmra.mxu0 %v47
    %v191 = vpop.f32.mrf.mxu0
    %v192 = vadd.f32 %v156, %v191
    %193 = vdwg.mxu0
    %194 = vmatpush.msra.mxu0 %v85
    %195 = vmatpush.msra.mxu0 %v84
    %196 = vmatpush.msra.mxu0 %v83
    %197 = vmatpush.msra.mxu0 %v82
    %198 = vmatpush.msra.mxu0 %v81
    %199 = vmatpush.msra.mxu0 %v80
    %200 = vmatpush.msra.mxu0 %v79
    %201 = vmatpush.msra.mxu0 %v78
    %202 = vmatpush.msra.mxu0 %v77
    %203 = vmatpush.msra.mxu0 %v76
    %204 = vmatpush.msra.mxu0 %v75
    %205 = vmatpush.msra.mxu0 %v74
    %206 = vmatpush.msra.mxu0 %v73
    %207 = vmatpush.msra.mxu0 %v72
    %208 = vmatpush.msra.mxu0 %v71
    %209 = vmatpush.msra.mxu0 %v70
    %210 = vmatmul.f32.gmra.mxu0 %v34
    %v211 = vpop.f32.mrf.mxu0
    %v212 = vadd.f32 %v186, %v211
    %213 = vmatmul.f32.gmra.mxu0 %v41
    %v214 = vpop.f32.mrf.mxu0
    %v215 = vadd.f32 %v189, %v214
    %216 = vmatmul.f32.gmra.mxu0 %v48
    %v217 = vpop.f32.mrf.mxu0
    %v218 = vadd.f32 %v192, %v217
    %219 = vdwg.mxu0
    %220 = vmatpush.msra.mxu0 %v101
    %221 = vmatpush.msra.mxu0 %v100
    %222 = vmatpush.msra.mxu0 %v99
    %223 = vmatpush.msra.mxu0 %v98
    %224 = vmatpush.msra.mxu0 %v97
    %225 = vmatpush.msra.mxu0 %v96
    %226 = vmatpush.msra.mxu0 %v95
    %227 = vmatpush.msra.mxu0 %v94
    %228 = vmatpush.msra.mxu0 %v93
    %229 = vmatpush.msra.mxu0 %v92
    %230 = vmatpush.msra.mxu0 %v91
    %231 = vmatpush.msra.mxu0 %v90
    %232 = vmatpush.msra.mxu0 %v89
    %233 = vmatpush.msra.mxu0 %v88
    %234 = vmatpush.msra.mxu0 %v87
    %235 = vmatpush.msra.mxu0 %v86
    %236 = vmatmul.f32.gmra.mxu0 %v35
    %v237 = vpop.f32.mrf.mxu0
    %v238 = vadd.f32 %v212, %v237
    %239 = vmatmul.f32.gmra.mxu0 %v42
    %v240 = vpop.f32.mrf.mxu0
    %v241 = vadd.f32 %v215, %v240
    %242 = vmatmul.f32.gmra.mxu0 %v49
    %v243 = vpop.f32.mrf.mxu0
    %v244 = vadd.f32 %v218, %v243
    %245 = vdwg.mxu0
    %246 = vmatpush.msra.mxu0 %v117
    %247 = vmatpush.msra.mxu0 %v116
    %248 = vmatpush.msra.mxu0 %v115
    %249 = vmatpush.msra.mxu0 %v114
    %250 = vmatpush.msra.mxu0 %v113
    %251 = vmatpush.msra.mxu0 %v112
    %252 = vmatpush.msra.mxu0 %v111
    %253 = vmatpush.msra.mxu0 %v110
    %254 = vmatpush.msra.mxu0 %v109
    %255 = vmatpush.msra.mxu0 %v108
    %256 = vmatpush.msra.mxu0 %v107
    %257 = vmatpush.msra.mxu0 %v106
    %258 = vmatpush.msra.mxu0 %v105
    %259 = vmatpush.msra.mxu0 %v104
    %260 = vmatpush.msra.mxu0 %v103
    %261 = vmatpush.msra.mxu0 %v102
    %262 = vmatmul.f32.gmra.mxu0 %v36
    %v263 = vpop.f32.mrf.mxu0
    %v264 = vadd.f32 %v238, %v263
    %265 = vmatmul.f32.gmra.mxu0 %v43
    %v266 = vpop.f32.mrf.mxu0
    %v267 = vadd.f32 %v241, %v266
    %268 = vmatmul.f32.gmra.mxu0 %v50
    %v269 = vpop.f32.mrf.mxu0
    %v270 = vadd.f32 %v244, %v269
    %271 = vdwg.mxu0
    %272 = vmatpush.msra.mxu0 %v133
    %273 = vmatpush.msra.mxu0 %v132
    %274 = vmatpush.msra.mxu0 %v131
    %275 = vmatpush.msra.mxu0 %v130
    %276 = vmatpush.msra.mxu0 %v129
    %277 = vmatpush.msra.mxu0 %v128
    %278 = vmatpush.msra.mxu0 %v127
    %279 = vmatpush.msra.mxu0 %v126
    %280 = vmatpush.msra.mxu0 %v125
    %281 = vmatpush.msra.mxu0 %v124
    %282 = vmatpush.msra.mxu0 %v123
    %283 = vmatpush.msra.mxu0 %v122
    %284 = vmatpush.msra.mxu0 %v121
    %285 = vmatpush.msra.mxu0 %v120
    %286 = vmatpush.msra.mxu0 %v119
    %287 = vmatpush.msra.mxu0 %v118
    %288 = vmatmul.f32.gmra.mxu0 %v37
    %v289 = vpop.f32.mrf.mxu0
    %v290 = vadd.f32 %v264, %v289
    %291 = vmatmul.f32.gmra.mxu0 %v44
    %v292 = vpop.f32.mrf.mxu0
    %v293 = vadd.f32 %v267, %v292
    %294 = vmatmul.f32.gmra.mxu0 %v51
    %v295 = vpop.f32.mrf.mxu0
    %v296 = vadd.f32 %v270, %v295
    %297 = vdwg.mxu0
    %298 = vmatpush.msra.mxu0 %v149
    %299 = vmatpush.msra.mxu0 %v148
    %300 = vmatpush.msra.mxu0 %v147
    %301 = vmatpush.msra.mxu0 %v146
    %302 = vmatpush.msra.mxu0 %v145
    %303 = vmatpush.msra.mxu0 %v144
    %304 = vmatpush.msra.mxu0 %v143
    %305 = vmatpush.msra.mxu0 %v142
    %306 = vmatpush.msra.mxu0 %v141
    %307 = vmatpush.msra.mxu0 %v140
    %308 = vmatpush.msra.mxu0 %v139
    %309 = vmatpush.msra.mxu0 %v138
    %310 = vmatpush.msra.mxu0 %v137
    %311 = vmatpush.msra.mxu0 %v136
    %312 = vmatpush.msra.mxu0 %v135
    %313 = vmatpush.msra.mxu0 %v134
    %314 = vmatmul.f32.gmra.mxu0 %v38
    %v315 = vpop.f32.mrf.mxu0
    %v316 = vadd.f32 %v290, %v315
    %317 = vmatmul.f32.gmra.mxu0 %v45
    %v318 = vpop.f32.mrf.mxu0
    %v319 = vadd.f32 %v293, %v318
    %320 = vmatmul.f32.gmra.mxu0 %v52
    %v321 = vpop.f32.mrf.mxu0
    %v322 = vadd.f32 %v296, %v321
    %323 = vdwg.mxu0
    %324 = vmatpush.msra.mxu0 0.0
    %325 = vmatpush.msra.mxu0 0.0
    %326 = vmatpush.msra.mxu0 0.0
    %327 = vmatpush.msra.mxu0 0.0
    %328 = vmatpush.msra.mxu0 0.0
    %329 = vmatpush.msra.mxu0 0.0
    %330 = vmatpush.msra.mxu0 0.0
    %331 = vmatpush.msra.mxu0 0.0
    %332 = vmatpush.msra.mxu0 0.0
    %333 = vmatpush.msra.mxu0 0.0
    %334 = vmatpush.msra.mxu0 0.0
    %335 = vmatpush.msra.mxu0 0.0
    %336 = vmatpush.msra.mxu0 %v153
    %337 = vmatpush.msra.mxu0 %v152
    %338 = vmatpush.msra.mxu0 %v151
    %339 = vmatpush.msra.mxu0 %v150
    %340 = vmatmul.f32.gmra.mxu0 %v160
    %v341 = vpop.f32.mrf.mxu0
    %v342 = vadd.f32 %v316, %v341
    %343 = vmatmul.f32.gmra.mxu0 %v163
    %v344 = vpop.f32.mrf.mxu0
    %v345 = vadd.f32 %v319, %v344
    %346 = vmatmul.f32.gmra.mxu0 %v166
    %v347 = vpop.f32.mrf.mxu0
    %v348 = vadd.f32 %v322, %v347
    %349 = vdwg.mxu0
    %v350 = vmax.f32 %v342, 0.0
    %v351 = vmax.f32 %v345, 0.0
    %v352 = vmax.f32 %v348, 0.0
    %v353 = vld [vmem:[%s1] sm:$0x3]
    %v354 = vld [vmem:[%s5] sm:$0xff]
    %v355 = vld [vmem:[%s5 + $0x8] sm:$0xff]
    %v356 = vld [vmem:[%s5 + $0x10] sm:$0xff]
    %v357 = vld [vmem:[%s5 + $0x18] sm:$0xff]
    %v358 = vld [vmem:[%s5 + $0x20] sm:$0xff]
    %v359 = vld [vmem:[%s5 + $0x28] sm:$0xff]
    %v360 = vld [vmem:[%s4] sm:$0xff]
    %v361 = vld [vmem:[%s4 + $0x8] sm:$0xff]
    %v362 = vld [vmem:[%s4 + $0x10] sm:$0xff]
    %v363 = vld [vmem:[%s4 + $0x18] sm:$0xff]
    %v365 = vsel %vm158, %v350, 0
    %367 = vmatpush.msra.mxu0 0.0
    %368 = vmatpush.msra.mxu0 0.0
    %369 = vmatpush.msra.mxu0 0.0
    %370 = vmatpush.msra.mxu0 0.0
    %371 = vmatpush.msra.mxu0 0.0
    %372 = vmatpush.msra.mxu0 0.0
    %373 = vmatpush.msra.mxu0 0.0
    %374 = vmatpush.msra.mxu0 0.0
    %375 = vmatpush.msra.mxu0 0.0
    %376 = vmatpush.msra.mxu0 0.0
    %377 = vmatpush.msra.mxu0 0.0
    %378 = vmatpush.msra.mxu0 0.0
    %379 = vmatpush.msra.mxu0 %v363
    %380 = vmatpush.msra.mxu0 %v362
    %381 = vmatpush.msra.mxu0 %v361
    %382 = vmatpush.msra.mxu0 %v360
    %383 = vmatmul.f32.gmra.mxu0 %v365
    %v384 = vpop.f32.mrf.mxu0
    %v385 = vadd.f32 0.0, %v384
    %386 = vdwg.mxu0
    %vm387 = vcmask 392192
    %v389 = vsel %vm387, %v353, 0
    %391 = vmatpush.msra.mxu0 0.0
    %392 = vmatpush.msra.mxu0 0.0
    %393 = vmatpush.msra.mxu0 0.0
    %394 = vmatpush.msra.mxu0 0.0
    %395 = vmatpush.msra.mxu0 0.0
    %396 = vmatpush.msra.mxu0 0.0
    %397 = vmatpush.msra.mxu0 0.0
    %398 = vmatpush.msra.mxu0 0.0
    %399 = vmatpush.msra.mxu0 0.0
    %400 = vmatpush.msra.mxu0 0.0
    %401 = vmatpush.msra.mxu0 %v359
    %402 = vmatpush.msra.mxu0 %v358
    %403 = vmatpush.msra.mxu0 %v357
    %404 = vmatpush.msra.mxu0 %v356
    %405 = vmatpush.msra.mxu0 %v355
    %406 = vmatpush.msra.mxu0 %v354
    %407 = vmatmul.f32.gmra.mxu0 %v389
    %v408 = vpop.f32.mrf.mxu0
    %v409 = vadd.f32 %v385, %v408
    %410 = vdwg.mxu0
    %s411 = scalar_lea.vmem %s4, 32
    %v412 = vld [vmem:[%s411] sm:$0xff]
    %v413 = vld [vmem:[%s411 + $0x8] sm:$0xff]
    %v414 = vld [vmem:[%s411 + $0x10] sm:$0xff]
    %v415 = vld [vmem:[%s411 + $0x18] sm:$0xff]
    %v416 = vrot.slane %v350, 2
    %v417 = vsel %vm158, %v416, 0
    %419 = vmatpush.msra.mxu0 0.0
    %420 = vmatpush.msra.mxu0 0.0
    %421 = vmatpush.msra.mxu0 0.0
    %422 = vmatpush.msra.mxu0 0.0
    %423 = vmatpush.msra.mxu0 0.0
    %424 = vmatpush.msra.mxu0 0.0
    %425 = vmatpush.msra.mxu0 0.0
    %426 = vmatpush.msra.mxu0 0.0
    %427 = vmatpush.msra.mxu0 0.0
    %428 = vmatpush.msra.mxu0 0.0
    %429 = vmatpush.msra.mxu0 0.0
    %430 = vmatpush.msra.mxu0 0.0
    %431 = vmatpush.msra.mxu0 %v415
    %432 = vmatpush.msra.mxu0 %v414
    %433 = vmatpush.msra.mxu0 %v413
    %434 = vmatpush.msra.mxu0 %v412
    %435 = vmatmul.f32.gmra.mxu0 %v417
    %v436 = vpop.f32.mrf.mxu0
    %v437 = vadd.f32 0.0, %v436
    %438 = vdwg.mxu0
    %v439 = vadd.f32 %v409, %v437
    %s440 = scalar_lea.vmem %s4, 64
    %v441 = vld [vmem:[%s440] sm:$0xff]
    %v442 = vld [vmem:[%s440 + $0x8] sm:$0xff]
    %v443 = vld [vmem:[%s440 + $0x10] sm:$0xff]
    %v444 = vld [vmem:[%s440 + $0x18] sm:$0xff]
    %v445 = vrot.slane %v350, 4
    %v446 = vsel %vm158, %v445, 0
    %448 = vmatpush.msra.mxu0 0.0
    %449 = vmatpush.msra.mxu0 0.0
    %450 = vmatpush.msra.mxu0 0.0
    %451 = vmatpush.msra.mxu0 0.0
    %452 = vmatpush.msra.mxu0 0.0
    %453 = vmatpush.msra.mxu0 0.0
    %454 = vmatpush.msra.mxu0 0.0
    %455 = vmatpush.msra.mxu0 0.0
    %456 = vmatpush.msra.mxu0 0.0
    %457 = vmatpush.msra.mxu0 0.0
    %458 = vmatpush.msra.mxu0 0.0
    %459 = vmatpush.msra.mxu0 0.0
    %460 = vmatpush.msra.mxu0 %v444
    %461 = vmatpush.msra.mxu0 %v443
    %462 = vmatpush.msra.mxu0 %v442
    %463 = vmatpush.msra.mxu0 %v441
    %464 = vmatmul.f32.gmra.mxu0 %v446
    %v465 = vpop.f32.mrf.mxu0
    %v466 = vadd.f32 0.0, %v465
    %467 = vdwg.mxu0
    %v468 = vadd.f32 %v439, %v466
    %s469 = scalar_lea.vmem %s4, 96
    %v470 = vld [vmem:[%s469] sm:$0xff]
    %v471 = vld [vmem:[%s469 + $0x8] sm:$0xff]
    %v472 = vld [vmem:[%s469 + $0x10] sm:$0xff]
    %v473 = vld [vmem:[%s469 + $0x18] sm:$0xff]
    %v474 = vrot.slane %v350, 6
    %v475 = vsel %vm158, %v474, 0
    %477 = vmatpush.msra.mxu0 0.0
    %478 = vmatpush.msra.mxu0 0.0
    %479 = vmatpush.msra.mxu0 0.0
    %480 = vmatpush.msra.mxu0 0.0
    %481 = vmatpush.msra.mxu0 0.0
    %482 = vmatpush.msra.mxu0 0.0
    %483 = vmatpush.msra.mxu0 0.0
    %484 = vmatpush.msra.mxu0 0.0
    %485 = vmatpush.msra.mxu0 0.0
    %486 = vmatpush.msra.mxu0 0.0
    %487 = vmatpush.msra.mxu0 0.0
    %488 = vmatpush.msra.mxu0 0.0
    %489 = vmatpush.msra.mxu0 %v473
    %490 = vmatpush.msra.mxu0 %v472
    %491 = vmatpush.msra.mxu0 %v471
    %492 = vmatpush.msra.mxu0 %v470
    %493 = vmatmul.f32.gmra.mxu0 %v475
    %v494 = vpop.f32.mrf.mxu0
    %v495 = vadd.f32 0.0, %v494
    %496 = vdwg.mxu0
    %v497 = vadd.f32 %v468, %v495
    %s498 = scalar_lea.vmem %s4, 128
    %v499 = vld [vmem:[%s498] sm:$0xff]
    %v500 = vld [vmem:[%s498 + $0x8] sm:$0xff]
    %v501 = vld [vmem:[%s498 + $0x10] sm:$0xff]
    %v502 = vld [vmem:[%s498 + $0x18] sm:$0xff]
    %v504 = vsel %vm158, %v351, 0
    %506 = vmatpush.msra.mxu0 0.0
    %507 = vmatpush.msra.mxu0 0.0
    %508 = vmatpush.msra.mxu0 0.0
    %509 = vmatpush.msra.mxu0 0.0
    %510 = vmatpush.msra.mxu0 0.0
    %511 = vmatpush.msra.mxu0 0.0
    %512 = vmatpush.msra.mxu0 0.0
    %513 = vmatpush.msra.mxu0 0.0
    %514 = vmatpush.msra.mxu0 0.0
    %515 = vmatpush.msra.mxu0 0.0
    %516 = vmatpush.msra.mxu0 0.0
    %517 = vmatpush.msra.mxu0 0.0
    %518 = vmatpush.msra.mxu0 %v502
    %519 = vmatpush.msra.mxu0 %v501
    %520 = vmatpush.msra.mxu0 %v500
    %521 = vmatpush.msra.mxu0 %v499
    %522 = vmatmul.f32.gmra.mxu0 %v504
    %v523 = vpop.f32.mrf.mxu0
    %v524 = vadd.f32 0.0, %v523
    %525 = vdwg.mxu0
    %v526 = vadd.f32 %v497, %v524
    %s527 = scalar_lea.vmem %s4, 160
    %v528 = vld [vmem:[%s527] sm:$0xff]
    %v529 = vld [vmem:[%s527 + $0x8] sm:$0xff]
    %v530 = vld [vmem:[%s527 + $0x10] sm:$0xff]
    %v531 = vld [vmem:[%s527 + $0x18] sm:$0xff]
    %v532 = vrot.slane %v351, 2
    %v533 = vsel %vm158, %v532, 0
    %535 = vmatpush.msra.mxu0 0.0
    %536 = vmatpush.msra.mxu0 0.0
    %537 = vmatpush.msra.mxu0 0.0
    %538 = vmatpush.msra.mxu0 0.0
    %539 = vmatpush.msra.mxu0 0.0
    %540 = vmatpush.msra.mxu0 0.0
    %541 = vmatpush.msra.mxu0 0.0
    %542 = vmatpush.msra.mxu0 0.0
    %543 = vmatpush.msra.mxu0 0.0
    %544 = vmatpush.msra.mxu0 0.0
    %545 = vmatpush.msra.mxu0 0.0
    %546 = vmatpush.msra.mxu0 0.0
    %547 = vmatpush.msra.mxu0 %v531
    %548 = vmatpush.msra.mxu0 %v530
    %549 = vmatpush.msra.mxu0 %v529
    %550 = vmatpush.msra.mxu0 %v528
    %551 = vmatmul.f32.gmra.mxu0 %v533
    %v552 = vpop.f32.mrf.mxu0
    %v553 = vadd.f32 0.0, %v552
    %554 = vdwg.mxu0
    %v555 = vadd.f32 %v526, %v553
    %s556 = scalar_lea.vmem %s4, 192
    %v557 = vld [vmem:[%s556] sm:$0xff]
    %v558 = vld [vmem:[%s556 + $0x8] sm:$0xff]
    %v559 = vld [vmem:[%s556 + $0x10] sm:$0xff]
    %v560 = vld [vmem:[%s556 + $0x18] sm:$0xff]
    %v561 = vrot.slane %v351, 4
    %v562 = vsel %vm158, %v561, 0
    %564 = vmatpush.msra.mxu0 0.0
    %565 = vmatpush.msra.mxu0 0.0
    %566 = vmatpush.msra.mxu0 0.0
    %567 = vmatpush.msra.mxu0 0.0
    %568 = vmatpush.msra.mxu0 0.0
    %569 = vmatpush.msra.mxu0 0.0
    %570 = vmatpush.msra.mxu0 0.0
    %571 = vmatpush.msra.mxu0 0.0
    %572 = vmatpush.msra.mxu0 0.0
    %573 = vmatpush.msra.mxu0 0.0
    %574 = vmatpush.msra.mxu0 0.0
    %575 = vmatpush.msra.mxu0 0.0
    %576 = vmatpush.msra.mxu0 %v560
    %577 = vmatpush.msra.mxu0 %v559
    %578 = vmatpush.msra.mxu0 %v558
    %579 = vmatpush.msra.mxu0 %v557
    %580 = vmatmul.f32.gmra.mxu0 %v562
    %v581 = vpop.f32.mrf.mxu0
    %v582 = vadd.f32 0.0, %v581
    %583 = vdwg.mxu0
    %v584 = vadd.f32 %v555, %v582
    %s585 = scalar_lea.vmem %s4, 224
    %v586 = vld [vmem:[%s585] sm:$0xff]
    %v587 = vld [vmem:[%s585 + $0x8] sm:$0xff]
    %v588 = vld [vmem:[%s585 + $0x10] sm:$0xff]
    %v589 = vld [vmem:[%s585 + $0x18] sm:$0xff]
    %v590 = vrot.slane %v351, 6
    %v591 = vsel %vm158, %v590, 0
    %593 = vmatpush.msra.mxu0 0.0
    %594 = vmatpush.msra.mxu0 0.0
    %595 = vmatpush.msra.mxu0 0.0
    %596 = vmatpush.msra.mxu0 0.0
    %597 = vmatpush.msra.mxu0 0.0
    %598 = vmatpush.msra.mxu0 0.0
    %599 = vmatpush.msra.mxu0 0.0
    %600 = vmatpush.msra.mxu0 0.0
    %601 = vmatpush.msra.mxu0 0.0
    %602 = vmatpush.msra.mxu0 0.0
    %603 = vmatpush.msra.mxu0 0.0
    %604 = vmatpush.msra.mxu0 0.0
    %605 = vmatpush.msra.mxu0 %v589
    %606 = vmatpush.msra.mxu0 %v588
    %607 = vmatpush.msra.mxu0 %v587
    %608 = vmatpush.msra.mxu0 %v586
    %609 = vmatmul.f32.gmra.mxu0 %v591
    %v610 = vpop.f32.mrf.mxu0
    %v611 = vadd.f32 0.0, %v610
    %612 = vdwg.mxu0
    %v613 = vadd.f32 %v584, %v611
    %s614 = scalar_lea.vmem %s4, 256
    %v615 = vld [vmem:[%s614] sm:$0xff]
    %v616 = vld [vmem:[%s614 + $0x8] sm:$0xff]
    %v617 = vld [vmem:[%s614 + $0x10] sm:$0xff]
    %v618 = vld [vmem:[%s614 + $0x18] sm:$0xff]
    %v620 = vsel %vm158, %v352, 0
    %622 = vmatpush.msra.mxu0 0.0
    %623 = vmatpush.msra.mxu0 0.0
    %624 = vmatpush.msra.mxu0 0.0
    %625 = vmatpush.msra.mxu0 0.0
    %626 = vmatpush.msra.mxu0 0.0
    %627 = vmatpush.msra.mxu0 0.0
    %628 = vmatpush.msra.mxu0 0.0
    %629 = vmatpush.msra.mxu0 0.0
    %630 = vmatpush.msra.mxu0 0.0
    %631 = vmatpush.msra.mxu0 0.0
    %632 = vmatpush.msra.mxu0 0.0
    %633 = vmatpush.msra.mxu0 0.0
    %634 = vmatpush.msra.mxu0 %v618
    %635 = vmatpush.msra.mxu0 %v617
    %636 = vmatpush.msra.mxu0 %v616
    %637 = vmatpush.msra.mxu0 %v615
    %638 = vmatmul.f32.gmra.mxu0 %v620
    %v639 = vpop.f32.mrf.mxu0
    %v640 = vadd.f32 0.0, %v639
    %641 = vdwg.mxu0
    %v642 = vadd.f32 %v613, %v640
    %v643 = vld [vmem:[%s6] sm:$0x1]
    %v645 = vperm.slane %v643, 0
    %v647 = vadd.f32 %v642, %v645
    %v648 = vmax.f32 %v647, 0.0
    %v649 = vld [vmem:[%s7] sm:$0xff]
    %v650 = vld [vmem:[%s7 + $0x8] sm:$0xff]
    %v651 = vld [vmem:[%s7 + $0x10] sm:$0xff]
    %v652 = vld [vmem:[%s7 + $0x18] sm:$0xff]
    %v653 = vld [vmem:[%s7 + $0x20] sm:$0xff]
    %v654 = vld [vmem:[%s7 + $0x28] sm:$0xff]
    %v655 = vld [vmem:[%s7 + $0x30] sm:$0xff]
    %v656 = vld [vmem:[%s7 + $0x38] sm:$0xff]
    %v657 = vld [vmem:[%s8] sm:$0x1]
    %v659 = vperm.slane %v657, 0
    %vm661 = vcmask 523264
    %v663 = vsel %vm661, %v648, 0
    %665 = vmatpush.msra.mxu0 0.0
    %666 = vmatpush.msra.mxu0 0.0
    %667 = vmatpush.msra.mxu0 0.0
    %668 = vmatpush.msra.mxu0 0.0
    %669 = vmatpush.msra.mxu0 0.0
    %670 = vmatpush.msra.mxu0 0.0
    %671 = vmatpush.msra.mxu0 0.0
    %672 = vmatpush.msra.mxu0 0.0
    %673 = vmatpush.msra.mxu0 %v656
    %674 = vmatpush.msra.mxu0 %v655
    %675 = vmatpush.msra.mxu0 %v654
    %676 = vmatpush.msra.mxu0 %v653
    %677 = vmatpush.msra.mxu0 %v652
    %678 = vmatpush.msra.mxu0 %v651
    %679 = vmatpush.msra.mxu0 %v650
    %680 = vmatpush.msra.mxu0 %v649
    %681 = vmatmul.f32.gmra.mxu0 %v663
    %v682 = vpop.f32.mrf.mxu0
    %v683 = vadd.f32 %v659, %v682
    %684 = vdwg.mxu0
    %vm685 = vcmask 25600
    %686 = vst.msk [vmem:[#allocation2] sm:$0x3] %vm685, %v683
    // Predicated region
    $region38: #{dqn_big2_forward.5} parent=1 // pred_check
      _
    $region39: #{dqn_big2_forward.5} parent=1 // pred_check_branch
      %688 = sbr.rel (0) target = $region41
    $region40: #{dqn_big2_forward.5} parent=1 // pred_region
      %690 = vsyncadd [#allocation3], 0
      %s692 = sshll.u32 [#allocation2], 4
      %s693 = int_to_ptr.vmem [resolvable:$true] %s692
      %s694 = sshll.u32 %s9, 4
      %s695 = int_to_ptr.hbm [resolvable:$true] %s694
      %697 = dma.vmem_to_hbm [thread:$0]  %s693, 32, %s695, [#allocation3]
    $region41: #{dqn_big2_forward.5} parent=1 // pred_fallthru
      _
    // Predicated region
    $region42: #{dqn_big2_forward.5} parent=1 // pred_check
      _
    $region43: #{dqn_big2_forward.5} parent=1 // pred_check_branch
      %699 = sbr.rel (0) target = $region45
    $region44: #{dqn_big2_forward.5} parent=1 // pred_region
      %701 = dma.done [#allocation3], 32
    $region45: #{dqn_big2_forward.5} parent=1 // pred_fallthru
      _
    %702 = vsyncpa [#allocation3], 1

</llo_original>
